<compile_context>
chip_gen: v7x
topology: tpu7x:2x2x1
jax: 0.10.0
libtpu: 0.0.40
codegen_flags: <defaults>
</compile_context>

<pallas_src>
import functools
from math import sqrt

import jax
import jax.numpy as jnp
from jax.experimental import pallas as pl
from jax.experimental.pallas import tpu as pltpu

# dot_general dimension numbers for A @ B^T (contract last dims, no batch dims).
_NT_DIMS = (((1,), (1,)), ((), ()))


def _layer_norm(z, gamma, beta, eps):
    # Two-pass LayerNorm (matches torch.nn.LayerNorm numerics better than the
    # one-pass E[x^2]-E[x]^2 form flagged in the review).
    mu = jnp.mean(z, axis=-1, keepdims=True)
    d = z - mu
    var = jnp.mean(d * d, axis=-1, keepdims=True)
    return d * jax.lax.rsqrt(var + eps) * gamma + beta


def fused_encoder_kernel(x_ref, w_in_ref, w_out_ref, small_ref, o_ref, *,
                         batch, seq, dim, heads, head_pad, dim_ff, num_layers,
                         eps=1e-5):
    """All encoder layers, all batch elements, in one invocation (activation stays in VMEM).

    Packed-parameter layout (per layer l):
      w_in_ref[l]  : (dim, 3*heads*head_pad + dim_ff)  bf16  = [Wq|Wk|Wv (head-padded) | W_ff1]
      w_out_ref[l] : (heads*head_pad + dim_ff, dim)    bf16  = [W_o (head-padded rows) ; W_ff2]
      small_ref[l] : (8, P) f32 rows = ln1_g, ln1_b, b_o, ln2_g, ln2_b, b_ff1, b_ff2, b_qkv
    """
    B, S, D, H, HP, F = batch, seq, dim, heads, head_pad, dim_ff
    QKVW = 3 * H * HP          # fused (padded) q|k|v projection width
    OW = H * HP                # padded W_o row count

    x = x_ref[...].astype(jnp.float32)                       # (B*S, D)

    for l in range(num_layers):                               # static unroll (depth == 2)
        # ---- unpack layer params: static, lane-aligned ref slices (loaded once) ----
        ln1_g = small_ref[l, 0:1, 0:D]
        ln1_b = small_ref[l, 1:2, 0:D]
        b_o   = small_ref[l, 2:3, 0:D]
        ln2_g = small_ref[l, 3:4, 0:D]
        ln2_b = small_ref[l, 4:5, 0:D]
        b_ff1 = small_ref[l, 5:6, 0:F]
        b_ff2 = small_ref[l, 6:7, 0:D]
        b_qkv = small_ref[l, 7:8, 0:QKVW]

        w_qkv = w_in_ref[l, :, 0:QKVW]                        # (D, QKVW)  bf16
        w_ff1 = w_in_ref[l, :, QKVW:QKVW + F]                 # (D, F)     bf16
        w_o   = w_out_ref[l, 0:OW, :]                         # (OW, D)    bf16
        w_ff2 = w_out_ref[l, OW:OW + F, :]                    # (F, D)     bf16

        # ---- self-attention branch (pre-LN); QKV projection over ALL B*S tokens ----
        xn = _layer_norm(x, ln1_g, ln1_b, eps)
        qkv = jnp.dot(xn.astype(jnp.bfloat16), w_qkv,
                      preferred_element_type=jnp.float32) + b_qkv      # (B*S, QKVW)

        rows = []
        for b in range(B):                                    # per-batch attention (S x S)
            r0 = b * S
            head_outs = []
            for h in range(H):                                # static unroll, 128-aligned slices
                qh = qkv[r0:r0 + S, h * HP:(h + 1) * HP].astype(jnp.bfloat16)
                kh = qkv[r0:r0 + S, OW + h * HP:OW + (h + 1) * HP].astype(jnp.bfloat16)
                vh = qkv[r0:r0 + S, 2 * OW + h * HP:2 * OW + (h + 1) * HP].astype(jnp.bfloat16)

                # q @ k^T on the MXU (NT, no explicit transpose); 1/sqrt(dk) is already
                # folded into the Q weights/bias at init time.
                s = jax.lax.dot_general(qh, kh, _NT_DIMS,
                                        preferred_element_type=jnp.float32)
                # TODO(synk): mask=None path only; masked_fill branch not implemented.
                s = s - jnp.max(s, axis=-1, keepdims=True)
                p = jnp.exp(s)
                p = p * pl.reciprocal(jnp.sum(p, axis=-1, keepdims=True), approx=True)
                head_outs.append(jnp.dot(p.astype(jnp.bfloat16), vh,
                                         preferred_element_type=jnp.float32))   # (S, HP)
            # concat_h(head_h) @ W_o  (padded cols/rows are zero -> math unchanged)
            ho = jnp.concatenate(head_outs, axis=-1).astype(jnp.bfloat16)        # (S, OW)
            attn_b = jnp.dot(ho, w_o, preferred_element_type=jnp.float32)        # (S, D)
            rows.append(x[r0:r0 + S, :] + attn_b + b_o)      # residual + output bias fused
        x = jnp.concatenate(rows, axis=0)                     # (B*S, D); dropout == identity

        # ---- feed-forward branch (pre-LN), all tokens at once ----
        xn2 = _layer_norm(x, ln2_g, ln2_b, eps)
        h1 = jnp.dot(xn2.astype(jnp.bfloat16), w_ff1,
                     preferred_element_type=jnp.float32) + b_ff1
        # exact GELU (erf form), matches torch.nn.GELU default
        h1 = 0.5 * h1 * (1.0 + jax.lax.erf(h1 * jnp.float32(0.7071067811865476)))
        ff = jnp.dot(h1.astype(jnp.bfloat16), w_ff2,
                     preferred_element_type=jnp.float32) + b_ff2
        x = x + ff                                            # residual; dropout == identity

    # TODO(synk): output last dim is D=32 (<128 lanes) -> masked store; a wrapper-side
    # lane-dense (B, S*D) repack would need an in-kernel relayout that outweighs the
    # ~2 KB saving at these shapes, so it is intentionally skipped here.
    o_ref[...] = x.astype(o_ref.dtype)
    # TODO(synk): at realistic S/D this single-block layer needs flash-style KV tiling,
    # lax.fori_loop head loops and explicit vmem budgeting (v7x: 64 MiB physical); and on
    # v7x a 2-wide parallel batch grid would re-enable the second TensorCore.


def transformer_encoder(x, w_in, w_out, small, *, num_heads, head_pad, dim_ff):
    """x: (B, S, D) f32.  Packed params as produced by init_params()."""
    B, S, D = x.shape
    N = B * S
    num_layers = w_in.shape[0]

    kernel = functools.partial(
        fused_encoder_kernel, batch=B, seq=S, dim=D, heads=num_heads,
        head_pad=head_pad, dim_ff=dim_ff, num_layers=num_layers)

    # No grid: a single invocation; every operand lives whole in VMEM (no double
    # buffering of grid-invariant weights, no per-step pipeline overhead).
    out = pl.pallas_call(
        kernel,
        out_shape=jax.ShapeDtypeStruct((N, D), x.dtype),
        in_specs=[pl.BlockSpec(memory_space=pltpu.MemorySpace.VMEM)] * 4,
        out_specs=pl.BlockSpec(memory_space=pltpu.MemorySpace.VMEM),
        compiler_params=pltpu.CompilerParams(vmem_limit_bytes=32 * 1024 * 1024),
    )(x.reshape(N, D), w_in, w_out, small)
    return out.reshape(B, S, D)


def init_params(key, *, dim, depth, heads, dim_head, dim_linear_block):
    """Deterministic synthetic parameters, PyTorch-Linear-style uniform init, packed.

    Weights are stored as (in, out) so the kernel does x @ W + b.  Per-head Q/K/V
    column groups (and W_o row blocks) are zero-padded to a 128-lane multiple, the
    softmax 1/sqrt(dk) scale is folded into the Q projection, matmul weights are
    pre-cast to bf16, and all small f32 params are packed into one (8, P) slab/layer.
    """
    dk = dv = dim_head
    dim_k = dk * heads
    dim_v = dv * heads
    F = dim_linear_block
    HP = -(-dim_head // 128) * 128                 # per-head width padded to 128 lanes
    P_W = max(3 * heads * HP, F, dim)              # lane width of the small-param pack
    norm_fact = 1.0 / sqrt(dim_k // heads)

    def lin(k, din, dout):
        bound = 1.0 / sqrt(din)
        w = jax.random.uniform(k, (din, dout), jnp.float32, -bound, bound)
        b = jax.random.uniform(jax.random.fold_in(k, 1), (dout,), jnp.float32, -bound, bound)
        return w, b

    def pad_head_cols(w, b, per_head):
        w = w.reshape(w.shape[0], heads, per_head)
        w = jnp.pad(w, ((0, 0), (0, 0), (0, HP - per_head))).reshape(w.shape[0], heads * HP)
        b = jnp.pad(b.reshape(heads, per_head), ((0, 0), (0, HP - per_head))).reshape(heads * HP)
        return w, b

    def pad_vec(v):
        return jnp.pad(v, (0, P_W - v.shape[0]))

    w_in_layers, w_out_layers, small_layers = [], [], []
    for lk in jax.random.split(key, depth):
        ks = jax.random.split(lk, 6)
        wq, bq = lin(ks[0], dim, dim_k)
        wk, bk = lin(ks[1], dim, dim_k)
        wv, bv = lin(ks[2], dim, dim_v)
        wo, bo = lin(ks[3], dim_v, dim)
        w1, b1 = lin(ks[4], dim, F)
        w2, b2 = lin(ks[5], F, dim)

        # Fold the softmax scale 1/sqrt(dk) into Q weights and bias.
        wq = wq * norm_fact
        bq = bq * norm_fact

        wq_p, bq_p = pad_head_cols(wq, bq, dk)
        wk_p, bk_p = pad_head_cols(wk, bk, dk)
        wv_p, bv_p = pad_head_cols(wv, bv, dv)
        wo_p = jnp.pad(wo.reshape(heads, dv, dim),
                       ((0, 0), (0, HP - dv), (0, 0))).reshape(heads * HP, dim)

        w_in = jnp.concatenate([wq_p, wk_p, wv_p, w1], axis=1)   # (dim, 3*heads*HP + F)
        w_out = jnp.concatenate([wo_p, w2], axis=0)              # (heads*HP + F, dim)
        b_qkv = jnp.concatenate([bq_p, bk_p, bv_p], axis=0)      # (3*heads*HP,)

        small = jnp.stack([
            pad_vec(jnp.ones((dim,), jnp.float32)),    # ln1 gamma
            pad_vec(jnp.zeros((dim,), jnp.float32)),   # ln1 beta
            pad_vec(bo),                               # attention output bias
            pad_vec(jnp.ones((dim,), jnp.float32)),    # ln2 gamma
            pad_vec(jnp.zeros((dim,), jnp.float32)),   # ln2 beta
            pad_vec(b1),                               # ff1 bias
            pad_vec(b2),                               # ff2 bias
            pad_vec(b_qkv),                            # fused (padded) qkv bias
        ], axis=0)                                     # (8, P_W) f32

        w_in_layers.append(w_in.astype(jnp.bfloat16))
        w_out_layers.append(w_out.astype(jnp.bfloat16))
        small_layers.append(small)

    return (jnp.stack(w_in_layers),      # (L, dim, 3*heads*HP + F)   bf16
            jnp.stack(w_out_layers),     # (L, heads*HP + F, dim)     bf16
            jnp.stack(small_layers))     # (L, 8, P_W)                f32


if __name__ == "__main__":
    # small shapes consistent with the module defaults
    B, S = 2, 8
    dim = 32
    depth = 2
    heads = 4
    dim_head = 64            # dim_k = dim_v = 256 (module default)
    dim_linear_block = 256   # module default
    HP = -(-dim_head // 128) * 128

    key = jax.random.PRNGKey(0)
    kx, kp = jax.random.split(key)
    x = jax.random.normal(kx, (B, S, dim), jnp.float32)

    w_in, w_out, small = init_params(kp, dim=dim, depth=depth, heads=heads,
                                     dim_head=dim_head,
                                     dim_linear_block=dim_linear_block)

    out = transformer_encoder(x, w_in, w_out, small,
                              num_heads=heads, head_pad=HP, dim_ff=dim_linear_block)
    out = jax.block_until_ready(out)
    assert out.shape == (B, S, dim) and out.dtype == jnp.float32
    assert bool(jnp.all(jnp.isfinite(out)))
    print("KERNEL_OK")
</pallas_src>

<mosaic_0001>
module attributes {stable_mosaic.version = 11 : i64} {
  func.func @fused_encoder_kernel(%arg0: memref<16x32xf32, #tpu.memory_space<vmem>>, %arg1: memref<2x32x1792xbf16, #tpu.memory_space<vmem>>, %arg2: memref<2x768x32xbf16, #tpu.memory_space<vmem>>, %arg3: memref<2x8x1536xf32, #tpu.memory_space<vmem>>, %arg4: memref<16x32xf32, #tpu.memory_space<vmem>>) attributes {dimension_semantics = [], scalar_prefetch = 0 : i64, scratch_operands = 0 : i64, tpu.core_type = #tpu.core_type<tc>} {
    %c0 = arith.constant 0 : index
    %c0_0 = arith.constant 0 : index
    %0 = vector.load %arg0[%c0, %c0_0] : memref<16x32xf32, #tpu.memory_space<vmem>>, vector<16x32xf32>
    %c0_1 = arith.constant 0 : index
    %c0_2 = arith.constant 0 : index
    %c0_3 = arith.constant 0 : index
    %1 = vector.load %arg3[%c0_1, %c0_2, %c0_3] : memref<2x8x1536xf32, #tpu.memory_space<vmem>>, vector<1x1x32xf32>
    %2 = vector.shape_cast %1 : vector<1x1x32xf32> to vector<1x32xf32>
    %c0_4 = arith.constant 0 : index
    %c1 = arith.constant 1 : index
    %c0_5 = arith.constant 0 : index
    %3 = vector.load %arg3[%c0_4, %c1, %c0_5] : memref<2x8x1536xf32, #tpu.memory_space<vmem>>, vector<1x1x32xf32>
    %4 = vector.shape_cast %3 : vector<1x1x32xf32> to vector<1x32xf32>
    %c0_6 = arith.constant 0 : index
    %c2 = arith.constant 2 : index
    %c0_7 = arith.constant 0 : index
    %5 = vector.load %arg3[%c0_6, %c2, %c0_7] : memref<2x8x1536xf32, #tpu.memory_space<vmem>>, vector<1x1x32xf32>
    %6 = vector.shape_cast %5 : vector<1x1x32xf32> to vector<1x32xf32>
    %c0_8 = arith.constant 0 : index
    %c3 = arith.constant 3 : index
    %c0_9 = arith.constant 0 : index
    %7 = vector.load %arg3[%c0_8, %c3, %c0_9] : memref<2x8x1536xf32, #tpu.memory_space<vmem>>, vector<1x1x32xf32>
    %8 = vector.shape_cast %7 : vector<1x1x32xf32> to vector<1x32xf32>
    %c0_10 = arith.constant 0 : index
    %c4 = arith.constant 4 : index
    %c0_11 = arith.constant 0 : index
    %9 = vector.load %arg3[%c0_10, %c4, %c0_11] : memref<2x8x1536xf32, #tpu.memory_space<vmem>>, vector<1x1x32xf32>
    %10 = vector.shape_cast %9 : vector<1x1x32xf32> to vector<1x32xf32>
    %c0_12 = arith.constant 0 : index
    %c5 = arith.constant 5 : index
    %c0_13 = arith.constant 0 : index
    %11 = vector.load %arg3[%c0_12, %c5, %c0_13] : memref<2x8x1536xf32, #tpu.memory_space<vmem>>, vector<1x1x256xf32>
    %12 = vector.shape_cast %11 : vector<1x1x256xf32> to vector<1x256xf32>
    %c0_14 = arith.constant 0 : index
    %c6 = arith.constant 6 : index
    %c0_15 = arith.constant 0 : index
    %13 = vector.load %arg3[%c0_14, %c6, %c0_15] : memref<2x8x1536xf32, #tpu.memory_space<vmem>>, vector<1x1x32xf32>
    %14 = vector.shape_cast %13 : vector<1x1x32xf32> to vector<1x32xf32>
    %c0_16 = arith.constant 0 : index
    %c7 = arith.constant 7 : index
    %c0_17 = arith.constant 0 : index
    %15 = vector.load %arg3[%c0_16, %c7, %c0_17] : memref<2x8x1536xf32, #tpu.memory_space<vmem>>, vector<1x1x1536xf32>
    %16 = vector.shape_cast %15 : vector<1x1x1536xf32> to vector<1x1536xf32>
    %c0_18 = arith.constant 0 : index
    %c0_19 = arith.constant 0 : index
    %c0_20 = arith.constant 0 : index
    %17 = vector.load %arg1[%c0_18, %c0_19, %c0_20] : memref<2x32x1792xbf16, #tpu.memory_space<vmem>>, vector<1x32x1536xbf16>
    %18 = vector.shape_cast %17 : vector<1x32x1536xbf16> to vector<32x1536xbf16>
    %c0_21 = arith.constant 0 : index
    %c0_22 = arith.constant 0 : index
    %c1536 = arith.constant 1536 : index
    %19 = vector.load %arg1[%c0_21, %c0_22, %c1536] : memref<2x32x1792xbf16, #tpu.memory_space<vmem>>, vector<1x32x256xbf16>
    %20 = vector.shape_cast %19 : vector<1x32x256xbf16> to vector<32x256xbf16>
    %c0_23 = arith.constant 0 : index
    %c0_24 = arith.constant 0 : index
    %c0_25 = arith.constant 0 : index
    %21 = vector.load %arg2[%c0_23, %c0_24, %c0_25] : memref<2x768x32xbf16, #tpu.memory_space<vmem>>, vector<1x512x32xbf16>
    %22 = vector.shape_cast %21 : vector<1x512x32xbf16> to vector<512x32xbf16>
    %c0_26 = arith.constant 0 : index
    %c512 = arith.constant 512 : index
    %c0_27 = arith.constant 0 : index
    %23 = vector.load %arg2[%c0_26, %c512, %c0_27] : memref<2x768x32xbf16, #tpu.memory_space<vmem>>, vector<1x256x32xbf16>
    %24 = vector.shape_cast %23 : vector<1x256x32xbf16> to vector<256x32xbf16>
    %cst = arith.constant dense<0.000000e+00> : vector<16xf32>
    %25 = vector.multi_reduction <add>, %0, %cst [1] : vector<16x32xf32> to vector<16xf32>
    %26 = vector.shape_cast %25 : vector<16xf32> to vector<16x1xf32>
    %cst_28 = arith.constant 3.200000e+01 : f32
    %27 = vector.broadcast %cst_28 : f32 to vector<16x1xf32>
    %28 = arith.divf %26, %27 : vector<16x1xf32>
    %29 = vector.broadcast %28 : vector<16x1xf32> to vector<16x32xf32>
    %30 = arith.subf %0, %29 : vector<16x32xf32>
    %31 = arith.mulf %30, %30 : vector<16x32xf32>
    %cst_29 = arith.constant dense<0.000000e+00> : vector<16xf32>
    %32 = vector.multi_reduction <add>, %31, %cst_29 [1] : vector<16x32xf32> to vector<16xf32>
    %33 = vector.shape_cast %32 : vector<16xf32> to vector<16x1xf32>
    %cst_30 = arith.constant 3.200000e+01 : f32
    %34 = vector.broadcast %cst_30 : f32 to vector<16x1xf32>
    %35 = arith.divf %33, %34 : vector<16x1xf32>
    %cst_31 = arith.constant 9.99999974E-6 : f32
    %36 = vector.broadcast %cst_31 : f32 to vector<16x1xf32>
    %37 = arith.addf %35, %36 : vector<16x1xf32>
    %38 = math.rsqrt %37 : vector<16x1xf32>
    %39 = vector.broadcast %38 : vector<16x1xf32> to vector<16x32xf32>
    %40 = arith.mulf %30, %39 : vector<16x32xf32>
    %41 = vector.broadcast %2 : vector<1x32xf32> to vector<16x32xf32>
    %42 = arith.mulf %40, %41 : vector<16x32xf32>
    %43 = vector.broadcast %4 : vector<1x32xf32> to vector<16x32xf32>
    %44 = arith.addf %42, %43 : vector<16x32xf32>
    %45 = arith.truncf %44 : vector<16x32xf32> to vector<16x32xbf16>
    %cst_32 = arith.constant dense<0.000000e+00> : vector<16x1536xf32>
    %46 = tpu.matmul %45, %18, %cst_32 {dimension_numbers = #tpu.dot_dimension_numbers<[1], [0], [0], [1], [0, 0, 1, 1], [], []>} : vector<16x32xbf16>, vector<32x1536xbf16>, vector<16x1536xf32> -> vector<16x1536xf32>
    %47 = vector.broadcast %16 : vector<1x1536xf32> to vector<16x1536xf32>
    %48 = arith.addf %46, %47 : vector<16x1536xf32>
    %49 = vector.extract_strided_slice %48 {offsets = [0, 0], sizes = [8, 128], strides = [1, 1]} : vector<16x1536xf32> to vector<8x128xf32>
    %50 = arith.truncf %49 : vector<8x128xf32> to vector<8x128xbf16>
    %51 = vector.extract_strided_slice %48 {offsets = [0, 512], sizes = [8, 128], strides = [1, 1]} : vector<16x1536xf32> to vector<8x128xf32>
    %52 = arith.truncf %51 : vector<8x128xf32> to vector<8x128xbf16>
    %53 = vector.extract_strided_slice %48 {offsets = [0, 1024], sizes = [8, 128], strides = [1, 1]} : vector<16x1536xf32> to vector<8x128xf32>
    %54 = arith.truncf %53 : vector<8x128xf32> to vector<8x128xbf16>
    %cst_33 = arith.constant dense<0.000000e+00> : vector<8x8xf32>
    %55 = tpu.matmul %50, %52, %cst_33 {dimension_numbers = #tpu.dot_dimension_numbers<[1], [1], [0], [0], [0, 0, 1, 0], [], []>} : vector<8x128xbf16>, vector<8x128xbf16>, vector<8x8xf32> -> vector<8x8xf32>
    %cst_34 = arith.constant dense<0xFF800000> : vector<8xf32>
    %56 = vector.multi_reduction <maximumf>, %55, %cst_34 [1] : vector<8x8xf32> to vector<8xf32>
    %57 = vector.shape_cast %56 : vector<8xf32> to vector<8x1xf32>
    %58 = vector.broadcast %57 : vector<8x1xf32> to vector<8x8xf32>
    %59 = arith.subf %55, %58 : vector<8x8xf32>
    %60 = math.exp %59 : vector<8x8xf32>
    %cst_35 = arith.constant dense<0.000000e+00> : vector<8xf32>
    %61 = vector.multi_reduction <add>, %60, %cst_35 [1] : vector<8x8xf32> to vector<8xf32>
    %62 = vector.shape_cast %61 : vector<8xf32> to vector<8x1xf32>
    %63 = tpu.reciprocal %62 {approx = true} : vector<8x1xf32> -> vector<8x1xf32>
    %64 = vector.broadcast %63 : vector<8x1xf32> to vector<8x8xf32>
    %65 = arith.mulf %60, %64 : vector<8x8xf32>
    %66 = arith.truncf %65 : vector<8x8xf32> to vector<8x8xbf16>
    %cst_36 = arith.constant dense<0.000000e+00> : vector<8x128xf32>
    %67 = tpu.matmul %66, %54, %cst_36 {dimension_numbers = #tpu.dot_dimension_numbers<[1], [0], [0], [1], [0, 0, 1, 1], [], []>} : vector<8x8xbf16>, vector<8x128xbf16>, vector<8x128xf32> -> vector<8x128xf32>
    %68 = vector.extract_strided_slice %48 {offsets = [0, 128], sizes = [8, 128], strides = [1, 1]} : vector<16x1536xf32> to vector<8x128xf32>
    %69 = arith.truncf %68 : vector<8x128xf32> to vector<8x128xbf16>
    %70 = vector.extract_strided_slice %48 {offsets = [0, 640], sizes = [8, 128], strides = [1, 1]} : vector<16x1536xf32> to vector<8x128xf32>
    %71 = arith.truncf %70 : vector<8x128xf32> to vector<8x128xbf16>
    %72 = vector.extract_strided_slice %48 {offsets = [0, 1152], sizes = [8, 128], strides = [1, 1]} : vector<16x1536xf32> to vector<8x128xf32>
    %73 = arith.truncf %72 : vector<8x128xf32> to vector<8x128xbf16>
    %cst_37 = arith.constant dense<0.000000e+00> : vector<8x8xf32>
    %74 = tpu.matmul %69, %71, %cst_37 {dimension_numbers = #tpu.dot_dimension_numbers<[1], [1], [0], [0], [0, 0, 1, 0], [], []>} : vector<8x128xbf16>, vector<8x128xbf16>, vector<8x8xf32> -> vector<8x8xf32>
    %cst_38 = arith.constant dense<0xFF800000> : vector<8xf32>
    %75 = vector.multi_reduction <maximumf>, %74, %cst_38 [1] : vector<8x8xf32> to vector<8xf32>
    %76 = vector.shape_cast %75 : vector<8xf32> to vector<8x1xf32>
    %77 = vector.broadcast %76 : vector<8x1xf32> to vector<8x8xf32>
    %78 = arith.subf %74, %77 : vector<8x8xf32>
    %79 = math.exp %78 : vector<8x8xf32>
    %cst_39 = arith.constant dense<0.000000e+00> : vector<8xf32>
    %80 = vector.multi_reduction <add>, %79, %cst_39 [1] : vector<8x8xf32> to vector<8xf32>
    %81 = vector.shape_cast %80 : vector<8xf32> to vector<8x1xf32>
    %82 = tpu.reciprocal %81 {approx = true} : vector<8x1xf32> -> vector<8x1xf32>
    %83 = vector.broadcast %82 : vector<8x1xf32> to vector<8x8xf32>
    %84 = arith.mulf %79, %83 : vector<8x8xf32>
    %85 = arith.truncf %84 : vector<8x8xf32> to vector<8x8xbf16>
    %cst_40 = arith.constant dense<0.000000e+00> : vector<8x128xf32>
    %86 = tpu.matmul %85, %73, %cst_40 {dimension_numbers = #tpu.dot_dimension_numbers<[1], [0], [0], [1], [0, 0, 1, 1], [], []>} : vector<8x8xbf16>, vector<8x128xbf16>, vector<8x128xf32> -> vector<8x128xf32>
    %87 = vector.extract_strided_slice %48 {offsets = [0, 256], sizes = [8, 128], strides = [1, 1]} : vector<16x1536xf32> to vector<8x128xf32>
    %88 = arith.truncf %87 : vector<8x128xf32> to vector<8x128xbf16>
    %89 = vector.extract_strided_slice %48 {offsets = [0, 768], sizes = [8, 128], strides = [1, 1]} : vector<16x1536xf32> to vector<8x128xf32>
    %90 = arith.truncf %89 : vector<8x128xf32> to vector<8x128xbf16>
    %91 = vector.extract_strided_slice %48 {offsets = [0, 1280], sizes = [8, 128], strides = [1, 1]} : vector<16x1536xf32> to vector<8x128xf32>
    %92 = arith.truncf %91 : vector<8x128xf32> to vector<8x128xbf16>
    %cst_41 = arith.constant dense<0.000000e+00> : vector<8x8xf32>
    %93 = tpu.matmul %88, %90, %cst_41 {dimension_numbers = #tpu.dot_dimension_numbers<[1], [1], [0], [0], [0, 0, 1, 0], [], []>} : vector<8x128xbf16>, vector<8x128xbf16>, vector<8x8xf32> -> vector<8x8xf32>
    %cst_42 = arith.constant dense<0xFF800000> : vector<8xf32>
    %94 = vector.multi_reduction <maximumf>, %93, %cst_42 [1] : vector<8x8xf32> to vector<8xf32>
    %95 = vector.shape_cast %94 : vector<8xf32> to vector<8x1xf32>
    %96 = vector.broadcast %95 : vector<8x1xf32> to vector<8x8xf32>
    %97 = arith.subf %93, %96 : vector<8x8xf32>
    %98 = math.exp %97 : vector<8x8xf32>
    %cst_43 = arith.constant dense<0.000000e+00> : vector<8xf32>
    %99 = vector.multi_reduction <add>, %98, %cst_43 [1] : vector<8x8xf32> to vector<8xf32>
    %100 = vector.shape_cast %99 : vector<8xf32> to vector<8x1xf32>
    %101 = tpu.reciprocal %100 {approx = true} : vector<8x1xf32> -> vector<8x1xf32>
    %102 = vector.broadcast %101 : vector<8x1xf32> to vector<8x8xf32>
    %103 = arith.mulf %98, %102 : vector<8x8xf32>
    %104 = arith.truncf %103 : vector<8x8xf32> to vector<8x8xbf16>
    %cst_44 = arith.constant dense<0.000000e+00> : vector<8x128xf32>
    %105 = tpu.matmul %104, %92, %cst_44 {dimension_numbers = #tpu.dot_dimension_numbers<[1], [0], [0], [1], [0, 0, 1, 1], [], []>} : vector<8x8xbf16>, vector<8x128xbf16>, vector<8x128xf32> -> vector<8x128xf32>
    %106 = vector.extract_strided_slice %48 {offsets = [0, 384], sizes = [8, 128], strides = [1, 1]} : vector<16x1536xf32> to vector<8x128xf32>
    %107 = arith.truncf %106 : vector<8x128xf32> to vector<8x128xbf16>
    %108 = vector.extract_strided_slice %48 {offsets = [0, 896], sizes = [8, 128], strides = [1, 1]} : vector<16x1536xf32> to vector<8x128xf32>
    %109 = arith.truncf %108 : vector<8x128xf32> to vector<8x128xbf16>
    %110 = vector.extract_strided_slice %48 {offsets = [0, 1408], sizes = [8, 128], strides = [1, 1]} : vector<16x1536xf32> to vector<8x128xf32>
    %111 = arith.truncf %110 : vector<8x128xf32> to vector<8x128xbf16>
    %cst_45 = arith.constant dense<0.000000e+00> : vector<8x8xf32>
    %112 = tpu.matmul %107, %109, %cst_45 {dimension_numbers = #tpu.dot_dimension_numbers<[1], [1], [0], [0], [0, 0, 1, 0], [], []>} : vector<8x128xbf16>, vector<8x128xbf16>, vector<8x8xf32> -> vector<8x8xf32>
    %cst_46 = arith.constant dense<0xFF800000> : vector<8xf32>
    %113 = vector.multi_reduction <maximumf>, %112, %cst_46 [1] : vector<8x8xf32> to vector<8xf32>
    %114 = vector.shape_cast %113 : vector<8xf32> to vector<8x1xf32>
    %115 = vector.broadcast %114 : vector<8x1xf32> to vector<8x8xf32>
    %116 = arith.subf %112, %115 : vector<8x8xf32>
    %117 = math.exp %116 : vector<8x8xf32>
    %cst_47 = arith.constant dense<0.000000e+00> : vector<8xf32>
    %118 = vector.multi_reduction <add>, %117, %cst_47 [1] : vector<8x8xf32> to vector<8xf32>
    %119 = vector.shape_cast %118 : vector<8xf32> to vector<8x1xf32>
    %120 = tpu.reciprocal %119 {approx = true} : vector<8x1xf32> -> vector<8x1xf32>
    %121 = vector.broadcast %120 : vector<8x1xf32> to vector<8x8xf32>
    %122 = arith.mulf %117, %121 : vector<8x8xf32>
    %123 = arith.truncf %122 : vector<8x8xf32> to vector<8x8xbf16>
    %cst_48 = arith.constant dense<0.000000e+00> : vector<8x128xf32>
    %124 = tpu.matmul %123, %111, %cst_48 {dimension_numbers = #tpu.dot_dimension_numbers<[1], [0], [0], [1], [0, 0, 1, 1], [], []>} : vector<8x8xbf16>, vector<8x128xbf16>, vector<8x128xf32> -> vector<8x128xf32>
    %125 = tpu.concatenate %67, %86, %105, %124 in 1 : vector<8x128xf32>, vector<8x128xf32>, vector<8x128xf32>, vector<8x128xf32> -> vector<8x512xf32>
    %126 = arith.truncf %125 : vector<8x512xf32> to vector<8x512xbf16>
    %cst_49 = arith.constant dense<0.000000e+00> : vector<8x32xf32>
    %127 = tpu.matmul %126, %22, %cst_49 {dimension_numbers = #tpu.dot_dimension_numbers<[1], [0], [0], [1], [0, 0, 1, 1], [], []>} : vector<8x512xbf16>, vector<512x32xbf16>, vector<8x32xf32> -> vector<8x32xf32>
    %128 = vector.extract_strided_slice %0 {offsets = [0, 0], sizes = [8, 32], strides = [1, 1]} : vector<16x32xf32> to vector<8x32xf32>
    %129 = arith.addf %128, %127 : vector<8x32xf32>
    %130 = vector.broadcast %6 : vector<1x32xf32> to vector<8x32xf32>
    %131 = arith.addf %129, %130 : vector<8x32xf32>
    %132 = vector.extract_strided_slice %48 {offsets = [8, 0], sizes = [8, 128], strides = [1, 1]} : vector<16x1536xf32> to vector<8x128xf32>
    %133 = arith.truncf %132 : vector<8x128xf32> to vector<8x128xbf16>
    %134 = vector.extract_strided_slice %48 {offsets = [8, 512], sizes = [8, 128], strides = [1, 1]} : vector<16x1536xf32> to vector<8x128xf32>
    %135 = arith.truncf %134 : vector<8x128xf32> to vector<8x128xbf16>
    %136 = vector.extract_strided_slice %48 {offsets = [8, 1024], sizes = [8, 128], strides = [1, 1]} : vector<16x1536xf32> to vector<8x128xf32>
    %137 = arith.truncf %136 : vector<8x128xf32> to vector<8x128xbf16>
    %cst_50 = arith.constant dense<0.000000e+00> : vector<8x8xf32>
    %138 = tpu.matmul %133, %135, %cst_50 {dimension_numbers = #tpu.dot_dimension_numbers<[1], [1], [0], [0], [0, 0, 1, 0], [], []>} : vector<8x128xbf16>, vector<8x128xbf16>, vector<8x8xf32> -> vector<8x8xf32>
    %cst_51 = arith.constant dense<0xFF800000> : vector<8xf32>
    %139 = vector.multi_reduction <maximumf>, %138, %cst_51 [1] : vector<8x8xf32> to vector<8xf32>
    %140 = vector.shape_cast %139 : vector<8xf32> to vector<8x1xf32>
    %141 = vector.broadcast %140 : vector<8x1xf32> to vector<8x8xf32>
    %142 = arith.subf %138, %141 : vector<8x8xf32>
    %143 = math.exp %142 : vector<8x8xf32>
    %cst_52 = arith.constant dense<0.000000e+00> : vector<8xf32>
    %144 = vector.multi_reduction <add>, %143, %cst_52 [1] : vector<8x8xf32> to vector<8xf32>
    %145 = vector.shape_cast %144 : vector<8xf32> to vector<8x1xf32>
    %146 = tpu.reciprocal %145 {approx = true} : vector<8x1xf32> -> vector<8x1xf32>
    %147 = vector.broadcast %146 : vector<8x1xf32> to vector<8x8xf32>
    %148 = arith.mulf %143, %147 : vector<8x8xf32>
    %149 = arith.truncf %148 : vector<8x8xf32> to vector<8x8xbf16>
    %cst_53 = arith.constant dense<0.000000e+00> : vector<8x128xf32>
    %150 = tpu.matmul %149, %137, %cst_53 {dimension_numbers = #tpu.dot_dimension_numbers<[1], [0], [0], [1], [0, 0, 1, 1], [], []>} : vector<8x8xbf16>, vector<8x128xbf16>, vector<8x128xf32> -> vector<8x128xf32>
    %151 = vector.extract_strided_slice %48 {offsets = [8, 128], sizes = [8, 128], strides = [1, 1]} : vector<16x1536xf32> to vector<8x128xf32>
    %152 = arith.truncf %151 : vector<8x128xf32> to vector<8x128xbf16>
    %153 = vector.extract_strided_slice %48 {offsets = [8, 640], sizes = [8, 128], strides = [1, 1]} : vector<16x1536xf32> to vector<8x128xf32>
    %154 = arith.truncf %153 : vector<8x128xf32> to vector<8x128xbf16>
    %155 = vector.extract_strided_slice %48 {offsets = [8, 1152], sizes = [8, 128], strides = [1, 1]} : vector<16x1536xf32> to vector<8x128xf32>
    %156 = arith.truncf %155 : vector<8x128xf32> to vector<8x128xbf16>
    %cst_54 = arith.constant dense<0.000000e+00> : vector<8x8xf32>
    %157 = tpu.matmul %152, %154, %cst_54 {dimension_numbers = #tpu.dot_dimension_numbers<[1], [1], [0], [0], [0, 0, 1, 0], [], []>} : vector<8x128xbf16>, vector<8x128xbf16>, vector<8x8xf32> -> vector<8x8xf32>
    %cst_55 = arith.constant dense<0xFF800000> : vector<8xf32>
    %158 = vector.multi_reduction <maximumf>, %157, %cst_55 [1] : vector<8x8xf32> to vector<8xf32>
    %159 = vector.shape_cast %158 : vector<8xf32> to vector<8x1xf32>
    %160 = vector.broadcast %159 : vector<8x1xf32> to vector<8x8xf32>
    %161 = arith.subf %157, %160 : vector<8x8xf32>
    %162 = math.exp %161 : vector<8x8xf32>
    %cst_56 = arith.constant dense<0.000000e+00> : vector<8xf32>
    %163 = vector.multi_reduction <add>, %162, %cst_56 [1] : vector<8x8xf32> to vector<8xf32>
    %164 = vector.shape_cast %163 : vector<8xf32> to vector<8x1xf32>
    %165 = tpu.reciprocal %164 {approx = true} : vector<8x1xf32> -> vector<8x1xf32>
    %166 = vector.broadcast %165 : vector<8x1xf32> to vector<8x8xf32>
    %167 = arith.mulf %162, %166 : vector<8x8xf32>
    %168 = arith.truncf %167 : vector<8x8xf32> to vector<8x8xbf16>
    %cst_57 = arith.constant dense<0.000000e+00> : vector<8x128xf32>
    %169 = tpu.matmul %168, %156, %cst_57 {dimension_numbers = #tpu.dot_dimension_numbers<[1], [0], [0], [1], [0, 0, 1, 1], [], []>} : vector<8x8xbf16>, vector<8x128xbf16>, vector<8x128xf32> -> vector<8x128xf32>
    %170 = vector.extract_strided_slice %48 {offsets = [8, 256], sizes = [8, 128], strides = [1, 1]} : vector<16x1536xf32> to vector<8x128xf32>
    %171 = arith.truncf %170 : vector<8x128xf32> to vector<8x128xbf16>
    %172 = vector.extract_strided_slice %48 {offsets = [8, 768], sizes = [8, 128], strides = [1, 1]} : vector<16x1536xf32> to vector<8x128xf32>
    %173 = arith.truncf %172 : vector<8x128xf32> to vector<8x128xbf16>
    %174 = vector.extract_strided_slice %48 {offsets = [8, 1280], sizes = [8, 128], strides = [1, 1]} : vector<16x1536xf32> to vector<8x128xf32>
    %175 = arith.truncf %174 : vector<8x128xf32> to vector<8x128xbf16>
    %cst_58 = arith.constant dense<0.000000e+00> : vector<8x8xf32>
    %176 = tpu.matmul %171, %173, %cst_58 {dimension_numbers = #tpu.dot_dimension_numbers<[1], [1], [0], [0], [0, 0, 1, 0], [], []>} : vector<8x128xbf16>, vector<8x128xbf16>, vector<8x8xf32> -> vector<8x8xf32>
    %cst_59 = arith.constant dense<0xFF800000> : vector<8xf32>
    %177 = vector.multi_reduction <maximumf>, %176, %cst_59 [1] : vector<8x8xf32> to vector<8xf32>
    %178 = vector.shape_cast %177 : vector<8xf32> to vector<8x1xf32>
    %179 = vector.broadcast %178 : vector<8x1xf32> to vector<8x8xf32>
    %180 = arith.subf %176, %179 : vector<8x8xf32>
    %181 = math.exp %180 : vector<8x8xf32>
    %cst_60 = arith.constant dense<0.000000e+00> : vector<8xf32>
    %182 = vector.multi_reduction <add>, %181, %cst_60 [1] : vector<8x8xf32> to vector<8xf32>
    %183 = vector.shape_cast %182 : vector<8xf32> to vector<8x1xf32>
    %184 = tpu.reciprocal %183 {approx = true} : vector<8x1xf32> -> vector<8x1xf32>
    %185 = vector.broadcast %184 : vector<8x1xf32> to vector<8x8xf32>
    %186 = arith.mulf %181, %185 : vector<8x8xf32>
    %187 = arith.truncf %186 : vector<8x8xf32> to vector<8x8xbf16>
    %cst_61 = arith.constant dense<0.000000e+00> : vector<8x128xf32>
    %188 = tpu.matmul %187, %175, %cst_61 {dimension_numbers = #tpu.dot_dimension_numbers<[1], [0], [0], [1], [0, 0, 1, 1], [], []>} : vector<8x8xbf16>, vector<8x128xbf16>, vector<8x128xf32> -> vector<8x128xf32>
    %189 = vector.extract_strided_slice %48 {offsets = [8, 384], sizes = [8, 128], strides = [1, 1]} : vector<16x1536xf32> to vector<8x128xf32>
    %190 = arith.truncf %189 : vector<8x128xf32> to vector<8x128xbf16>
    %191 = vector.extract_strided_slice %48 {offsets = [8, 896], sizes = [8, 128], strides = [1, 1]} : vector<16x1536xf32> to vector<8x128xf32>
    %192 = arith.truncf %191 : vector<8x128xf32> to vector<8x128xbf16>
    %193 = vector.extract_strided_slice %48 {offsets = [8, 1408], sizes = [8, 128], strides = [1, 1]} : vector<16x1536xf32> to vector<8x128xf32>
    %194 = arith.truncf %193 : vector<8x128xf32> to vector<8x128xbf16>
    %cst_62 = arith.constant dense<0.000000e+00> : vector<8x8xf32>
    %195 = tpu.matmul %190, %192, %cst_62 {dimension_numbers = #tpu.dot_dimension_numbers<[1], [1], [0], [0], [0, 0, 1, 0], [], []>} : vector<8x128xbf16>, vector<8x128xbf16>, vector<8x8xf32> -> vector<8x8xf32>
    %cst_63 = arith.constant dense<0xFF800000> : vector<8xf32>
    %196 = vector.multi_reduction <maximumf>, %195, %cst_63 [1] : vector<8x8xf32> to vector<8xf32>
    %197 = vector.shape_cast %196 : vector<8xf32> to vector<8x1xf32>
    %198 = vector.broadcast %197 : vector<8x1xf32> to vector<8x8xf32>
    %199 = arith.subf %195, %198 : vector<8x8xf32>
    %200 = math.exp %199 : vector<8x8xf32>
    %cst_64 = arith.constant dense<0.000000e+00> : vector<8xf32>
    %201 = vector.multi_reduction <add>, %200, %cst_64 [1] : vector<8x8xf32> to vector<8xf32>
    %202 = vector.shape_cast %201 : vector<8xf32> to vector<8x1xf32>
    %203 = tpu.reciprocal %202 {approx = true} : vector<8x1xf32> -> vector<8x1xf32>
    %204 = vector.broadcast %203 : vector<8x1xf32> to vector<8x8xf32>
    %205 = arith.mulf %200, %204 : vector<8x8xf32>
    %206 = arith.truncf %205 : vector<8x8xf32> to vector<8x8xbf16>
    %cst_65 = arith.constant dense<0.000000e+00> : vector<8x128xf32>
    %207 = tpu.matmul %206, %194, %cst_65 {dimension_numbers = #tpu.dot_dimension_numbers<[1], [0], [0], [1], [0, 0, 1, 1], [], []>} : vector<8x8xbf16>, vector<8x128xbf16>, vector<8x128xf32> -> vector<8x128xf32>
    %208 = tpu.concatenate %150, %169, %188, %207 in 1 : vector<8x128xf32>, vector<8x128xf32>, vector<8x128xf32>, vector<8x128xf32> -> vector<8x512xf32>
    %209 = arith.truncf %208 : vector<8x512xf32> to vector<8x512xbf16>
    %cst_66 = arith.constant dense<0.000000e+00> : vector<8x32xf32>
    %210 = tpu.matmul %209, %22, %cst_66 {dimension_numbers = #tpu.dot_dimension_numbers<[1], [0], [0], [1], [0, 0, 1, 1], [], []>} : vector<8x512xbf16>, vector<512x32xbf16>, vector<8x32xf32> -> vector<8x32xf32>
    %211 = vector.extract_strided_slice %0 {offsets = [8, 0], sizes = [8, 32], strides = [1, 1]} : vector<16x32xf32> to vector<8x32xf32>
    %212 = arith.addf %211, %210 : vector<8x32xf32>
    %213 = vector.broadcast %6 : vector<1x32xf32> to vector<8x32xf32>
    %214 = arith.addf %212, %213 : vector<8x32xf32>
    %215 = tpu.concatenate %131, %214 in 0 : vector<8x32xf32>, vector<8x32xf32> -> vector<16x32xf32>
    %cst_67 = arith.constant dense<0.000000e+00> : vector<16xf32>
    %216 = vector.multi_reduction <add>, %215, %cst_67 [1] : vector<16x32xf32> to vector<16xf32>
    %217 = vector.shape_cast %216 : vector<16xf32> to vector<16x1xf32>
    %cst_68 = arith.constant 3.200000e+01 : f32
    %218 = vector.broadcast %cst_68 : f32 to vector<16x1xf32>
    %219 = arith.divf %217, %218 : vector<16x1xf32>
    %220 = vector.broadcast %219 : vector<16x1xf32> to vector<16x32xf32>
    %221 = arith.subf %215, %220 : vector<16x32xf32>
    %222 = arith.mulf %221, %221 : vector<16x32xf32>
    %cst_69 = arith.constant dense<0.000000e+00> : vector<16xf32>
    %223 = vector.multi_reduction <add>, %222, %cst_69 [1] : vector<16x32xf32> to vector<16xf32>
    %224 = vector.shape_cast %223 : vector<16xf32> to vector<16x1xf32>
    %cst_70 = arith.constant 3.200000e+01 : f32
    %225 = vector.broadcast %cst_70 : f32 to vector<16x1xf32>
    %226 = arith.divf %224, %225 : vector<16x1xf32>
    %cst_71 = arith.constant 9.99999974E-6 : f32
    %227 = vector.broadcast %cst_71 : f32 to vector<16x1xf32>
    %228 = arith.addf %226, %227 : vector<16x1xf32>
    %229 = math.rsqrt %228 : vector<16x1xf32>
    %230 = vector.broadcast %229 : vector<16x1xf32> to vector<16x32xf32>
    %231 = arith.mulf %221, %230 : vector<16x32xf32>
    %232 = vector.broadcast %8 : vector<1x32xf32> to vector<16x32xf32>
    %233 = arith.mulf %231, %232 : vector<16x32xf32>
    %234 = vector.broadcast %10 : vector<1x32xf32> to vector<16x32xf32>
    %235 = arith.addf %233, %234 : vector<16x32xf32>
    %236 = arith.truncf %235 : vector<16x32xf32> to vector<16x32xbf16>
    %cst_72 = arith.constant dense<0.000000e+00> : vector<16x256xf32>
    %237 = tpu.matmul %236, %20, %cst_72 {dimension_numbers = #tpu.dot_dimension_numbers<[1], [0], [0], [1], [0, 0, 1, 1], [], []>} : vector<16x32xbf16>, vector<32x256xbf16>, vector<16x256xf32> -> vector<16x256xf32>
    %238 = vector.broadcast %12 : vector<1x256xf32> to vector<16x256xf32>
    %239 = arith.addf %237, %238 : vector<16x256xf32>
    %cst_73 = arith.constant 5.000000e-01 : f32
    %240 = vector.broadcast %cst_73 : f32 to vector<16x256xf32>
    %241 = arith.mulf %240, %239 : vector<16x256xf32>
    %cst_74 = arith.constant 0.707106769 : f32
    %242 = vector.broadcast %cst_74 : f32 to vector<16x256xf32>
    %243 = arith.mulf %239, %242 : vector<16x256xf32>
    %244 = math.erf %243 : vector<16x256xf32>
    %cst_75 = arith.constant 1.000000e+00 : f32
    %245 = vector.broadcast %cst_75 : f32 to vector<16x256xf32>
    %246 = arith.addf %245, %244 : vector<16x256xf32>
    %247 = arith.mulf %241, %246 : vector<16x256xf32>
    %248 = arith.truncf %247 : vector<16x256xf32> to vector<16x256xbf16>
    %cst_76 = arith.constant dense<0.000000e+00> : vector<16x32xf32>
    %249 = tpu.matmul %248, %24, %cst_76 {dimension_numbers = #tpu.dot_dimension_numbers<[1], [0], [0], [1], [0, 0, 1, 1], [], []>} : vector<16x256xbf16>, vector<256x32xbf16>, vector<16x32xf32> -> vector<16x32xf32>
    %250 = vector.broadcast %14 : vector<1x32xf32> to vector<16x32xf32>
    %251 = arith.addf %249, %250 : vector<16x32xf32>
    %252 = arith.addf %215, %251 : vector<16x32xf32>
    %c1_77 = arith.constant 1 : index
    %c0_78 = arith.constant 0 : index
    %c0_79 = arith.constant 0 : index
    %253 = vector.load %arg3[%c1_77, %c0_78, %c0_79] : memref<2x8x1536xf32, #tpu.memory_space<vmem>>, vector<1x1x32xf32>
    %254 = vector.shape_cast %253 : vector<1x1x32xf32> to vector<1x32xf32>
    %c1_80 = arith.constant 1 : index
    %c1_81 = arith.constant 1 : index
    %c0_82 = arith.constant 0 : index
    %255 = vector.load %arg3[%c1_80, %c1_81, %c0_82] : memref<2x8x1536xf32, #tpu.memory_space<vmem>>, vector<1x1x32xf32>
    %256 = vector.shape_cast %255 : vector<1x1x32xf32> to vector<1x32xf32>
    %c1_83 = arith.constant 1 : index
    %c2_84 = arith.constant 2 : index
    %c0_85 = arith.constant 0 : index
    %257 = vector.load %arg3[%c1_83, %c2_84, %c0_85] : memref<2x8x1536xf32, #tpu.memory_space<vmem>>, vector<1x1x32xf32>
    %258 = vector.shape_cast %257 : vector<1x1x32xf32> to vector<1x32xf32>
    %c1_86 = arith.constant 1 : index
    %c3_87 = arith.constant 3 : index
    %c0_88 = arith.constant 0 : index
    %259 = vector.load %arg3[%c1_86, %c3_87, %c0_88] : memref<2x8x1536xf32, #tpu.memory_space<vmem>>, vector<1x1x32xf32>
    %260 = vector.shape_cast %259 : vector<1x1x32xf32> to vector<1x32xf32>
    %c1_89 = arith.constant 1 : index
    %c4_90 = arith.constant 4 : index
    %c0_91 = arith.constant 0 : index
    %261 = vector.load %arg3[%c1_89, %c4_90, %c0_91] : memref<2x8x1536xf32, #tpu.memory_space<vmem>>, vector<1x1x32xf32>
    %262 = vector.shape_cast %261 : vector<1x1x32xf32> to vector<1x32xf32>
    %c1_92 = arith.constant 1 : index
    %c5_93 = arith.constant 5 : index
    %c0_94 = arith.constant 0 : index
    %263 = vector.load %arg3[%c1_92, %c5_93, %c0_94] : memref<2x8x1536xf32, #tpu.memory_space<vmem>>, vector<1x1x256xf32>
    %264 = vector.shape_cast %263 : vector<1x1x256xf32> to vector<1x256xf32>
    %c1_95 = arith.constant 1 : index
    %c6_96 = arith.constant 6 : index
    %c0_97 = arith.constant 0 : index
    %265 = vector.load %arg3[%c1_95, %c6_96, %c0_97] : memref<2x8x1536xf32, #tpu.memory_space<vmem>>, vector<1x1x32xf32>
    %266 = vector.shape_cast %265 : vector<1x1x32xf32> to vector<1x32xf32>
    %c1_98 = arith.constant 1 : index
    %c7_99 = arith.constant 7 : index
    %c0_100 = arith.constant 0 : index
    %267 = vector.load %arg3[%c1_98, %c7_99, %c0_100] : memref<2x8x1536xf32, #tpu.memory_space<vmem>>, vector<1x1x1536xf32>
    %268 = vector.shape_cast %267 : vector<1x1x1536xf32> to vector<1x1536xf32>
    %c1_101 = arith.constant 1 : index
    %c0_102 = arith.constant 0 : index
    %c0_103 = arith.constant 0 : index
    %269 = vector.load %arg1[%c1_101, %c0_102, %c0_103] : memref<2x32x1792xbf16, #tpu.memory_space<vmem>>, vector<1x32x1536xbf16>
    %270 = vector.shape_cast %269 : vector<1x32x1536xbf16> to vector<32x1536xbf16>
    %c1_104 = arith.constant 1 : index
    %c0_105 = arith.constant 0 : index
    %c1536_106 = arith.constant 1536 : index
    %271 = vector.load %arg1[%c1_104, %c0_105, %c1536_106] : memref<2x32x1792xbf16, #tpu.memory_space<vmem>>, vector<1x32x256xbf16>
    %272 = vector.shape_cast %271 : vector<1x32x256xbf16> to vector<32x256xbf16>
    %c1_107 = arith.constant 1 : index
    %c0_108 = arith.constant 0 : index
    %c0_109 = arith.constant 0 : index
    %273 = vector.load %arg2[%c1_107, %c0_108, %c0_109] : memref<2x768x32xbf16, #tpu.memory_space<vmem>>, vector<1x512x32xbf16>
    %274 = vector.shape_cast %273 : vector<1x512x32xbf16> to vector<512x32xbf16>
    %c1_110 = arith.constant 1 : index
    %c512_111 = arith.constant 512 : index
    %c0_112 = arith.constant 0 : index
    %275 = vector.load %arg2[%c1_110, %c512_111, %c0_112] : memref<2x768x32xbf16, #tpu.memory_space<vmem>>, vector<1x256x32xbf16>
    %276 = vector.shape_cast %275 : vector<1x256x32xbf16> to vector<256x32xbf16>
    %cst_113 = arith.constant dense<0.000000e+00> : vector<16xf32>
    %277 = vector.multi_reduction <add>, %252, %cst_113 [1] : vector<16x32xf32> to vector<16xf32>
    %278 = vector.shape_cast %277 : vector<16xf32> to vector<16x1xf32>
    %cst_114 = arith.constant 3.200000e+01 : f32
    %279 = vector.broadcast %cst_114 : f32 to vector<16x1xf32>
    %280 = arith.divf %278, %279 : vector<16x1xf32>
    %281 = vector.broadcast %280 : vector<16x1xf32> to vector<16x32xf32>
    %282 = arith.subf %252, %281 : vector<16x32xf32>
    %283 = arith.mulf %282, %282 : vector<16x32xf32>
    %cst_115 = arith.constant dense<0.000000e+00> : vector<16xf32>
    %284 = vector.multi_reduction <add>, %283, %cst_115 [1] : vector<16x32xf32> to vector<16xf32>
    %285 = vector.shape_cast %284 : vector<16xf32> to vector<16x1xf32>
    %cst_116 = arith.constant 3.200000e+01 : f32
    %286 = vector.broadcast %cst_116 : f32 to vector<16x1xf32>
    %287 = arith.divf %285, %286 : vector<16x1xf32>
    %cst_117 = arith.constant 9.99999974E-6 : f32
    %288 = vector.broadcast %cst_117 : f32 to vector<16x1xf32>
    %289 = arith.addf %287, %288 : vector<16x1xf32>
    %290 = math.rsqrt %289 : vector<16x1xf32>
    %291 = vector.broadcast %290 : vector<16x1xf32> to vector<16x32xf32>
    %292 = arith.mulf %282, %291 : vector<16x32xf32>
    %293 = vector.broadcast %254 : vector<1x32xf32> to vector<16x32xf32>
    %294 = arith.mulf %292, %293 : vector<16x32xf32>
    %295 = vector.broadcast %256 : vector<1x32xf32> to vector<16x32xf32>
    %296 = arith.addf %294, %295 : vector<16x32xf32>
    %297 = arith.truncf %296 : vector<16x32xf32> to vector<16x32xbf16>
    %cst_118 = arith.constant dense<0.000000e+00> : vector<16x1536xf32>
    %298 = tpu.matmul %297, %270, %cst_118 {dimension_numbers = #tpu.dot_dimension_numbers<[1], [0], [0], [1], [0, 0, 1, 1], [], []>} : vector<16x32xbf16>, vector<32x1536xbf16>, vector<16x1536xf32> -> vector<16x1536xf32>
    %299 = vector.broadcast %268 : vector<1x1536xf32> to vector<16x1536xf32>
    %300 = arith.addf %298, %299 : vector<16x1536xf32>
    %301 = vector.extract_strided_slice %300 {offsets = [0, 0], sizes = [8, 128], strides = [1, 1]} : vector<16x1536xf32> to vector<8x128xf32>
    %302 = arith.truncf %301 : vector<8x128xf32> to vector<8x128xbf16>
    %303 = vector.extract_strided_slice %300 {offsets = [0, 512], sizes = [8, 128], strides = [1, 1]} : vector<16x1536xf32> to vector<8x128xf32>
    %304 = arith.truncf %303 : vector<8x128xf32> to vector<8x128xbf16>
    %305 = vector.extract_strided_slice %300 {offsets = [0, 1024], sizes = [8, 128], strides = [1, 1]} : vector<16x1536xf32> to vector<8x128xf32>
    %306 = arith.truncf %305 : vector<8x128xf32> to vector<8x128xbf16>
    %cst_119 = arith.constant dense<0.000000e+00> : vector<8x8xf32>
    %307 = tpu.matmul %302, %304, %cst_119 {dimension_numbers = #tpu.dot_dimension_numbers<[1], [1], [0], [0], [0, 0, 1, 0], [], []>} : vector<8x128xbf16>, vector<8x128xbf16>, vector<8x8xf32> -> vector<8x8xf32>
    %cst_120 = arith.constant dense<0xFF800000> : vector<8xf32>
    %308 = vector.multi_reduction <maximumf>, %307, %cst_120 [1] : vector<8x8xf32> to vector<8xf32>
    %309 = vector.shape_cast %308 : vector<8xf32> to vector<8x1xf32>
    %310 = vector.broadcast %309 : vector<8x1xf32> to vector<8x8xf32>
    %311 = arith.subf %307, %310 : vector<8x8xf32>
    %312 = math.exp %311 : vector<8x8xf32>
    %cst_121 = arith.constant dense<0.000000e+00> : vector<8xf32>
    %313 = vector.multi_reduction <add>, %312, %cst_121 [1] : vector<8x8xf32> to vector<8xf32>
    %314 = vector.shape_cast %313 : vector<8xf32> to vector<8x1xf32>
    %315 = tpu.reciprocal %314 {approx = true} : vector<8x1xf32> -> vector<8x1xf32>
    %316 = vector.broadcast %315 : vector<8x1xf32> to vector<8x8xf32>
    %317 = arith.mulf %312, %316 : vector<8x8xf32>
    %318 = arith.truncf %317 : vector<8x8xf32> to vector<8x8xbf16>
    %cst_122 = arith.constant dense<0.000000e+00> : vector<8x128xf32>
    %319 = tpu.matmul %318, %306, %cst_122 {dimension_numbers = #tpu.dot_dimension_numbers<[1], [0], [0], [1], [0, 0, 1, 1], [], []>} : vector<8x8xbf16>, vector<8x128xbf16>, vector<8x128xf32> -> vector<8x128xf32>
    %320 = vector.extract_strided_slice %300 {offsets = [0, 128], sizes = [8, 128], strides = [1, 1]} : vector<16x1536xf32> to vector<8x128xf32>
    %321 = arith.truncf %320 : vector<8x128xf32> to vector<8x128xbf16>
    %322 = vector.extract_strided_slice %300 {offsets = [0, 640], sizes = [8, 128], strides = [1, 1]} : vector<16x1536xf32> to vector<8x128xf32>
    %323 = arith.truncf %322 : vector<8x128xf32> to vector<8x128xbf16>
    %324 = vector.extract_strided_slice %300 {offsets = [0, 1152], sizes = [8, 128], strides = [1, 1]} : vector<16x1536xf32> to vector<8x128xf32>
    %325 = arith.truncf %324 : vector<8x128xf32> to vector<8x128xbf16>
    %cst_123 = arith.constant dense<0.000000e+00> : vector<8x8xf32>
    %326 = tpu.matmul %321, %323, %cst_123 {dimension_numbers = #tpu.dot_dimension_numbers<[1], [1], [0], [0], [0, 0, 1, 0], [], []>} : vector<8x128xbf16>, vector<8x128xbf16>, vector<8x8xf32> -> vector<8x8xf32>
    %cst_124 = arith.constant dense<0xFF800000> : vector<8xf32>
    %327 = vector.multi_reduction <maximumf>, %326, %cst_124 [1] : vector<8x8xf32> to vector<8xf32>
    %328 = vector.shape_cast %327 : vector<8xf32> to vector<8x1xf32>
    %329 = vector.broadcast %328 : vector<8x1xf32> to vector<8x8xf32>
    %330 = arith.subf %326, %329 : vector<8x8xf32>
    %331 = math.exp %330 : vector<8x8xf32>
    %cst_125 = arith.constant dense<0.000000e+00> : vector<8xf32>
    %332 = vector.multi_reduction <add>, %331, %cst_125 [1] : vector<8x8xf32> to vector<8xf32>
    %333 = vector.shape_cast %332 : vector<8xf32> to vector<8x1xf32>
    %334 = tpu.reciprocal %333 {approx = true} : vector<8x1xf32> -> vector<8x1xf32>
    %335 = vector.broadcast %334 : vector<8x1xf32> to vector<8x8xf32>
    %336 = arith.mulf %331, %335 : vector<8x8xf32>
    %337 = arith.truncf %336 : vector<8x8xf32> to vector<8x8xbf16>
    %cst_126 = arith.constant dense<0.000000e+00> : vector<8x128xf32>
    %338 = tpu.matmul %337, %325, %cst_126 {dimension_numbers = #tpu.dot_dimension_numbers<[1], [0], [0], [1], [0, 0, 1, 1], [], []>} : vector<8x8xbf16>, vector<8x128xbf16>, vector<8x128xf32> -> vector<8x128xf32>
    %339 = vector.extract_strided_slice %300 {offsets = [0, 256], sizes = [8, 128], strides = [1, 1]} : vector<16x1536xf32> to vector<8x128xf32>
    %340 = arith.truncf %339 : vector<8x128xf32> to vector<8x128xbf16>
    %341 = vector.extract_strided_slice %300 {offsets = [0, 768], sizes = [8, 128], strides = [1, 1]} : vector<16x1536xf32> to vector<8x128xf32>
    %342 = arith.truncf %341 : vector<8x128xf32> to vector<8x128xbf16>
    %343 = vector.extract_strided_slice %300 {offsets = [0, 1280], sizes = [8, 128], strides = [1, 1]} : vector<16x1536xf32> to vector<8x128xf32>
    %344 = arith.truncf %343 : vector<8x128xf32> to vector<8x128xbf16>
    %cst_127 = arith.constant dense<0.000000e+00> : vector<8x8xf32>
    %345 = tpu.matmul %340, %342, %cst_127 {dimension_numbers = #tpu.dot_dimension_numbers<[1], [1], [0], [0], [0, 0, 1, 0], [], []>} : vector<8x128xbf16>, vector<8x128xbf16>, vector<8x8xf32> -> vector<8x8xf32>
    %cst_128 = arith.constant dense<0xFF800000> : vector<8xf32>
    %346 = vector.multi_reduction <maximumf>, %345, %cst_128 [1] : vector<8x8xf32> to vector<8xf32>
    %347 = vector.shape_cast %346 : vector<8xf32> to vector<8x1xf32>
    %348 = vector.broadcast %347 : vector<8x1xf32> to vector<8x8xf32>
    %349 = arith.subf %345, %348 : vector<8x8xf32>
    %350 = math.exp %349 : vector<8x8xf32>
    %cst_129 = arith.constant dense<0.000000e+00> : vector<8xf32>
    %351 = vector.multi_reduction <add>, %350, %cst_129 [1] : vector<8x8xf32> to vector<8xf32>
    %352 = vector.shape_cast %351 : vector<8xf32> to vector<8x1xf32>
    %353 = tpu.reciprocal %352 {approx = true} : vector<8x1xf32> -> vector<8x1xf32>
    %354 = vector.broadcast %353 : vector<8x1xf32> to vector<8x8xf32>
    %355 = arith.mulf %350, %354 : vector<8x8xf32>
    %356 = arith.truncf %355 : vector<8x8xf32> to vector<8x8xbf16>
    %cst_130 = arith.constant dense<0.000000e+00> : vector<8x128xf32>
    %357 = tpu.matmul %356, %344, %cst_130 {dimension_numbers = #tpu.dot_dimension_numbers<[1], [0], [0], [1], [0, 0, 1, 1], [], []>} : vector<8x8xbf16>, vector<8x128xbf16>, vector<8x128xf32> -> vector<8x128xf32>
    %358 = vector.extract_strided_slice %300 {offsets = [0, 384], sizes = [8, 128], strides = [1, 1]} : vector<16x1536xf32> to vector<8x128xf32>
    %359 = arith.truncf %358 : vector<8x128xf32> to vector<8x128xbf16>
    %360 = vector.extract_strided_slice %300 {offsets = [0, 896], sizes = [8, 128], strides = [1, 1]} : vector<16x1536xf32> to vector<8x128xf32>
    %361 = arith.truncf %360 : vector<8x128xf32> to vector<8x128xbf16>
    %362 = vector.extract_strided_slice %300 {offsets = [0, 1408], sizes = [8, 128], strides = [1, 1]} : vector<16x1536xf32> to vector<8x128xf32>
    %363 = arith.truncf %362 : vector<8x128xf32> to vector<8x128xbf16>
    %cst_131 = arith.constant dense<0.000000e+00> : vector<8x8xf32>
    %364 = tpu.matmul %359, %361, %cst_131 {dimension_numbers = #tpu.dot_dimension_numbers<[1], [1], [0], [0], [0, 0, 1, 0], [], []>} : vector<8x128xbf16>, vector<8x128xbf16>, vector<8x8xf32> -> vector<8x8xf32>
    %cst_132 = arith.constant dense<0xFF800000> : vector<8xf32>
    %365 = vector.multi_reduction <maximumf>, %364, %cst_132 [1] : vector<8x8xf32> to vector<8xf32>
    %366 = vector.shape_cast %365 : vector<8xf32> to vector<8x1xf32>
    %367 = vector.broadcast %366 : vector<8x1xf32> to vector<8x8xf32>
    %368 = arith.subf %364, %367 : vector<8x8xf32>
    %369 = math.exp %368 : vector<8x8xf32>
    %cst_133 = arith.constant dense<0.000000e+00> : vector<8xf32>
    %370 = vector.multi_reduction <add>, %369, %cst_133 [1] : vector<8x8xf32> to vector<8xf32>
    %371 = vector.shape_cast %370 : vector<8xf32> to vector<8x1xf32>
    %372 = tpu.reciprocal %371 {approx = true} : vector<8x1xf32> -> vector<8x1xf32>
    %373 = vector.broadcast %372 : vector<8x1xf32> to vector<8x8xf32>
    %374 = arith.mulf %369, %373 : vector<8x8xf32>
    %375 = arith.truncf %374 : vector<8x8xf32> to vector<8x8xbf16>
    %cst_134 = arith.constant dense<0.000000e+00> : vector<8x128xf32>
    %376 = tpu.matmul %375, %363, %cst_134 {dimension_numbers = #tpu.dot_dimension_numbers<[1], [0], [0], [1], [0, 0, 1, 1], [], []>} : vector<8x8xbf16>, vector<8x128xbf16>, vector<8x128xf32> -> vector<8x128xf32>
    %377 = tpu.concatenate %319, %338, %357, %376 in 1 : vector<8x128xf32>, vector<8x128xf32>, vector<8x128xf32>, vector<8x128xf32> -> vector<8x512xf32>
    %378 = arith.truncf %377 : vector<8x512xf32> to vector<8x512xbf16>
    %cst_135 = arith.constant dense<0.000000e+00> : vector<8x32xf32>
    %379 = tpu.matmul %378, %274, %cst_135 {dimension_numbers = #tpu.dot_dimension_numbers<[1], [0], [0], [1], [0, 0, 1, 1], [], []>} : vector<8x512xbf16>, vector<512x32xbf16>, vector<8x32xf32> -> vector<8x32xf32>
    %380 = vector.extract_strided_slice %252 {offsets = [0, 0], sizes = [8, 32], strides = [1, 1]} : vector<16x32xf32> to vector<8x32xf32>
    %381 = arith.addf %380, %379 : vector<8x32xf32>
    %382 = vector.broadcast %258 : vector<1x32xf32> to vector<8x32xf32>
    %383 = arith.addf %381, %382 : vector<8x32xf32>
    %384 = vector.extract_strided_slice %300 {offsets = [8, 0], sizes = [8, 128], strides = [1, 1]} : vector<16x1536xf32> to vector<8x128xf32>
    %385 = arith.truncf %384 : vector<8x128xf32> to vector<8x128xbf16>
    %386 = vector.extract_strided_slice %300 {offsets = [8, 512], sizes = [8, 128], strides = [1, 1]} : vector<16x1536xf32> to vector<8x128xf32>
    %387 = arith.truncf %386 : vector<8x128xf32> to vector<8x128xbf16>
    %388 = vector.extract_strided_slice %300 {offsets = [8, 1024], sizes = [8, 128], strides = [1, 1]} : vector<16x1536xf32> to vector<8x128xf32>
    %389 = arith.truncf %388 : vector<8x128xf32> to vector<8x128xbf16>
    %cst_136 = arith.constant dense<0.000000e+00> : vector<8x8xf32>
    %390 = tpu.matmul %385, %387, %cst_136 {dimension_numbers = #tpu.dot_dimension_numbers<[1], [1], [0], [0], [0, 0, 1, 0], [], []>} : vector<8x128xbf16>, vector<8x128xbf16>, vector<8x8xf32> -> vector<8x8xf32>
    %cst_137 = arith.constant dense<0xFF800000> : vector<8xf32>
    %391 = vector.multi_reduction <maximumf>, %390, %cst_137 [1] : vector<8x8xf32> to vector<8xf32>
    %392 = vector.shape_cast %391 : vector<8xf32> to vector<8x1xf32>
    %393 = vector.broadcast %392 : vector<8x1xf32> to vector<8x8xf32>
    %394 = arith.subf %390, %393 : vector<8x8xf32>
    %395 = math.exp %394 : vector<8x8xf32>
    %cst_138 = arith.constant dense<0.000000e+00> : vector<8xf32>
    %396 = vector.multi_reduction <add>, %395, %cst_138 [1] : vector<8x8xf32> to vector<8xf32>
    %397 = vector.shape_cast %396 : vector<8xf32> to vector<8x1xf32>
    %398 = tpu.reciprocal %397 {approx = true} : vector<8x1xf32> -> vector<8x1xf32>
    %399 = vector.broadcast %398 : vector<8x1xf32> to vector<8x8xf32>
    %400 = arith.mulf %395, %399 : vector<8x8xf32>
    %401 = arith.truncf %400 : vector<8x8xf32> to vector<8x8xbf16>
    %cst_139 = arith.constant dense<0.000000e+00> : vector<8x128xf32>
    %402 = tpu.matmul %401, %389, %cst_139 {dimension_numbers = #tpu.dot_dimension_numbers<[1], [0], [0], [1], [0, 0, 1, 1], [], []>} : vector<8x8xbf16>, vector<8x128xbf16>, vector<8x128xf32> -> vector<8x128xf32>
    %403 = vector.extract_strided_slice %300 {offsets = [8, 128], sizes = [8, 128], strides = [1, 1]} : vector<16x1536xf32> to vector<8x128xf32>
    %404 = arith.truncf %403 : vector<8x128xf32> to vector<8x128xbf16>
    %405 = vector.extract_strided_slice %300 {offsets = [8, 640], sizes = [8, 128], strides = [1, 1]} : vector<16x1536xf32> to vector<8x128xf32>
    %406 = arith.truncf %405 : vector<8x128xf32> to vector<8x128xbf16>
    %407 = vector.extract_strided_slice %300 {offsets = [8, 1152], sizes = [8, 128], strides = [1, 1]} : vector<16x1536xf32> to vector<8x128xf32>
    %408 = arith.truncf %407 : vector<8x128xf32> to vector<8x128xbf16>
    %cst_140 = arith.constant dense<0.000000e+00> : vector<8x8xf32>
    %409 = tpu.matmul %404, %406, %cst_140 {dimension_numbers = #tpu.dot_dimension_numbers<[1], [1], [0], [0], [0, 0, 1, 0], [], []>} : vector<8x128xbf16>, vector<8x128xbf16>, vector<8x8xf32> -> vector<8x8xf32>
    %cst_141 = arith.constant dense<0xFF800000> : vector<8xf32>
    %410 = vector.multi_reduction <maximumf>, %409, %cst_141 [1] : vector<8x8xf32> to vector<8xf32>
    %411 = vector.shape_cast %410 : vector<8xf32> to vector<8x1xf32>
    %412 = vector.broadcast %411 : vector<8x1xf32> to vector<8x8xf32>
    %413 = arith.subf %409, %412 : vector<8x8xf32>
    %414 = math.exp %413 : vector<8x8xf32>
    %cst_142 = arith.constant dense<0.000000e+00> : vector<8xf32>
    %415 = vector.multi_reduction <add>, %414, %cst_142 [1] : vector<8x8xf32> to vector<8xf32>
    %416 = vector.shape_cast %415 : vector<8xf32> to vector<8x1xf32>
    %417 = tpu.reciprocal %416 {approx = true} : vector<8x1xf32> -> vector<8x1xf32>
    %418 = vector.broadcast %417 : vector<8x1xf32> to vector<8x8xf32>
    %419 = arith.mulf %414, %418 : vector<8x8xf32>
    %420 = arith.truncf %419 : vector<8x8xf32> to vector<8x8xbf16>
    %cst_143 = arith.constant dense<0.000000e+00> : vector<8x128xf32>
    %421 = tpu.matmul %420, %408, %cst_143 {dimension_numbers = #tpu.dot_dimension_numbers<[1], [0], [0], [1], [0, 0, 1, 1], [], []>} : vector<8x8xbf16>, vector<8x128xbf16>, vector<8x128xf32> -> vector<8x128xf32>
    %422 = vector.extract_strided_slice %300 {offsets = [8, 256], sizes = [8, 128], strides = [1, 1]} : vector<16x1536xf32> to vector<8x128xf32>
    %423 = arith.truncf %422 : vector<8x128xf32> to vector<8x128xbf16>
    %424 = vector.extract_strided_slice %300 {offsets = [8, 768], sizes = [8, 128], strides = [1, 1]} : vector<16x1536xf32> to vector<8x128xf32>
    %425 = arith.truncf %424 : vector<8x128xf32> to vector<8x128xbf16>
    %426 = vector.extract_strided_slice %300 {offsets = [8, 1280], sizes = [8, 128], strides = [1, 1]} : vector<16x1536xf32> to vector<8x128xf32>
    %427 = arith.truncf %426 : vector<8x128xf32> to vector<8x128xbf16>
    %cst_144 = arith.constant dense<0.000000e+00> : vector<8x8xf32>
    %428 = tpu.matmul %423, %425, %cst_144 {dimension_numbers = #tpu.dot_dimension_numbers<[1], [1], [0], [0], [0, 0, 1, 0], [], []>} : vector<8x128xbf16>, vector<8x128xbf16>, vector<8x8xf32> -> vector<8x8xf32>
    %cst_145 = arith.constant dense<0xFF800000> : vector<8xf32>
    %429 = vector.multi_reduction <maximumf>, %428, %cst_145 [1] : vector<8x8xf32> to vector<8xf32>
    %430 = vector.shape_cast %429 : vector<8xf32> to vector<8x1xf32>
    %431 = vector.broadcast %430 : vector<8x1xf32> to vector<8x8xf32>
    %432 = arith.subf %428, %431 : vector<8x8xf32>
    %433 = math.exp %432 : vector<8x8xf32>
    %cst_146 = arith.constant dense<0.000000e+00> : vector<8xf32>
    %434 = vector.multi_reduction <add>, %433, %cst_146 [1] : vector<8x8xf32> to vector<8xf32>
    %435 = vector.shape_cast %434 : vector<8xf32> to vector<8x1xf32>
    %436 = tpu.reciprocal %435 {approx = true} : vector<8x1xf32> -> vector<8x1xf32>
    %437 = vector.broadcast %436 : vector<8x1xf32> to vector<8x8xf32>
    %438 = arith.mulf %433, %437 : vector<8x8xf32>
    %439 = arith.truncf %438 : vector<8x8xf32> to vector<8x8xbf16>
    %cst_147 = arith.constant dense<0.000000e+00> : vector<8x128xf32>
    %440 = tpu.matmul %439, %427, %cst_147 {dimension_numbers = #tpu.dot_dimension_numbers<[1], [0], [0], [1], [0, 0, 1, 1], [], []>} : vector<8x8xbf16>, vector<8x128xbf16>, vector<8x128xf32> -> vector<8x128xf32>
    %441 = vector.extract_strided_slice %300 {offsets = [8, 384], sizes = [8, 128], strides = [1, 1]} : vector<16x1536xf32> to vector<8x128xf32>
    %442 = arith.truncf %441 : vector<8x128xf32> to vector<8x128xbf16>
    %443 = vector.extract_strided_slice %300 {offsets = [8, 896], sizes = [8, 128], strides = [1, 1]} : vector<16x1536xf32> to vector<8x128xf32>
    %444 = arith.truncf %443 : vector<8x128xf32> to vector<8x128xbf16>
    %445 = vector.extract_strided_slice %300 {offsets = [8, 1408], sizes = [8, 128], strides = [1, 1]} : vector<16x1536xf32> to vector<8x128xf32>
    %446 = arith.truncf %445 : vector<8x128xf32> to vector<8x128xbf16>
    %cst_148 = arith.constant dense<0.000000e+00> : vector<8x8xf32>
    %447 = tpu.matmul %442, %444, %cst_148 {dimension_numbers = #tpu.dot_dimension_numbers<[1], [1], [0], [0], [0, 0, 1, 0], [], []>} : vector<8x128xbf16>, vector<8x128xbf16>, vector<8x8xf32> -> vector<8x8xf32>
    %cst_149 = arith.constant dense<0xFF800000> : vector<8xf32>
    %448 = vector.multi_reduction <maximumf>, %447, %cst_149 [1] : vector<8x8xf32> to vector<8xf32>
    %449 = vector.shape_cast %448 : vector<8xf32> to vector<8x1xf32>
    %450 = vector.broadcast %449 : vector<8x1xf32> to vector<8x8xf32>
    %451 = arith.subf %447, %450 : vector<8x8xf32>
    %452 = math.exp %451 : vector<8x8xf32>
    %cst_150 = arith.constant dense<0.000000e+00> : vector<8xf32>
    %453 = vector.multi_reduction <add>, %452, %cst_150 [1] : vector<8x8xf32> to vector<8xf32>
    %454 = vector.shape_cast %453 : vector<8xf32> to vector<8x1xf32>
    %455 = tpu.reciprocal %454 {approx = true} : vector<8x1xf32> -> vector<8x1xf32>
    %456 = vector.broadcast %455 : vector<8x1xf32> to vector<8x8xf32>
    %457 = arith.mulf %452, %456 : vector<8x8xf32>
    %458 = arith.truncf %457 : vector<8x8xf32> to vector<8x8xbf16>
    %cst_151 = arith.constant dense<0.000000e+00> : vector<8x128xf32>
    %459 = tpu.matmul %458, %446, %cst_151 {dimension_numbers = #tpu.dot_dimension_numbers<[1], [0], [0], [1], [0, 0, 1, 1], [], []>} : vector<8x8xbf16>, vector<8x128xbf16>, vector<8x128xf32> -> vector<8x128xf32>
    %460 = tpu.concatenate %402, %421, %440, %459 in 1 : vector<8x128xf32>, vector<8x128xf32>, vector<8x128xf32>, vector<8x128xf32> -> vector<8x512xf32>
    %461 = arith.truncf %460 : vector<8x512xf32> to vector<8x512xbf16>
    %cst_152 = arith.constant dense<0.000000e+00> : vector<8x32xf32>
    %462 = tpu.matmul %461, %274, %cst_152 {dimension_numbers = #tpu.dot_dimension_numbers<[1], [0], [0], [1], [0, 0, 1, 1], [], []>} : vector<8x512xbf16>, vector<512x32xbf16>, vector<8x32xf32> -> vector<8x32xf32>
    %463 = vector.extract_strided_slice %252 {offsets = [8, 0], sizes = [8, 32], strides = [1, 1]} : vector<16x32xf32> to vector<8x32xf32>
    %464 = arith.addf %463, %462 : vector<8x32xf32>
    %465 = vector.broadcast %258 : vector<1x32xf32> to vector<8x32xf32>
    %466 = arith.addf %464, %465 : vector<8x32xf32>
    %467 = tpu.concatenate %383, %466 in 0 : vector<8x32xf32>, vector<8x32xf32> -> vector<16x32xf32>
    %cst_153 = arith.constant dense<0.000000e+00> : vector<16xf32>
    %468 = vector.multi_reduction <add>, %467, %cst_153 [1] : vector<16x32xf32> to vector<16xf32>
    %469 = vector.shape_cast %468 : vector<16xf32> to vector<16x1xf32>
    %cst_154 = arith.constant 3.200000e+01 : f32
    %470 = vector.broadcast %cst_154 : f32 to vector<16x1xf32>
    %471 = arith.divf %469, %470 : vector<16x1xf32>
    %472 = vector.broadcast %471 : vector<16x1xf32> to vector<16x32xf32>
    %473 = arith.subf %467, %472 : vector<16x32xf32>
    %474 = arith.mulf %473, %473 : vector<16x32xf32>
    %cst_155 = arith.constant dense<0.000000e+00> : vector<16xf32>
    %475 = vector.multi_reduction <add>, %474, %cst_155 [1] : vector<16x32xf32> to vector<16xf32>
    %476 = vector.shape_cast %475 : vector<16xf32> to vector<16x1xf32>
    %cst_156 = arith.constant 3.200000e+01 : f32
    %477 = vector.broadcast %cst_156 : f32 to vector<16x1xf32>
    %478 = arith.divf %476, %477 : vector<16x1xf32>
    %cst_157 = arith.constant 9.99999974E-6 : f32
    %479 = vector.broadcast %cst_157 : f32 to vector<16x1xf32>
    %480 = arith.addf %478, %479 : vector<16x1xf32>
    %481 = math.rsqrt %480 : vector<16x1xf32>
    %482 = vector.broadcast %481 : vector<16x1xf32> to vector<16x32xf32>
    %483 = arith.mulf %473, %482 : vector<16x32xf32>
    %484 = vector.broadcast %260 : vector<1x32xf32> to vector<16x32xf32>
    %485 = arith.mulf %483, %484 : vector<16x32xf32>
    %486 = vector.broadcast %262 : vector<1x32xf32> to vector<16x32xf32>
    %487 = arith.addf %485, %486 : vector<16x32xf32>
    %488 = arith.truncf %487 : vector<16x32xf32> to vector<16x32xbf16>
    %cst_158 = arith.constant dense<0.000000e+00> : vector<16x256xf32>
    %489 = tpu.matmul %488, %272, %cst_158 {dimension_numbers = #tpu.dot_dimension_numbers<[1], [0], [0], [1], [0, 0, 1, 1], [], []>} : vector<16x32xbf16>, vector<32x256xbf16>, vector<16x256xf32> -> vector<16x256xf32>
    %490 = vector.broadcast %264 : vector<1x256xf32> to vector<16x256xf32>
    %491 = arith.addf %489, %490 : vector<16x256xf32>
    %cst_159 = arith.constant 5.000000e-01 : f32
    %492 = vector.broadcast %cst_159 : f32 to vector<16x256xf32>
    %493 = arith.mulf %492, %491 : vector<16x256xf32>
    %cst_160 = arith.constant 0.707106769 : f32
    %494 = vector.broadcast %cst_160 : f32 to vector<16x256xf32>
    %495 = arith.mulf %491, %494 : vector<16x256xf32>
    %496 = math.erf %495 : vector<16x256xf32>
    %cst_161 = arith.constant 1.000000e+00 : f32
    %497 = vector.broadcast %cst_161 : f32 to vector<16x256xf32>
    %498 = arith.addf %497, %496 : vector<16x256xf32>
    %499 = arith.mulf %493, %498 : vector<16x256xf32>
    %500 = arith.truncf %499 : vector<16x256xf32> to vector<16x256xbf16>
    %cst_162 = arith.constant dense<0.000000e+00> : vector<16x32xf32>
    %501 = tpu.matmul %500, %276, %cst_162 {dimension_numbers = #tpu.dot_dimension_numbers<[1], [0], [0], [1], [0, 0, 1, 1], [], []>} : vector<16x256xbf16>, vector<256x32xbf16>, vector<16x32xf32> -> vector<16x32xf32>
    %502 = vector.broadcast %266 : vector<1x32xf32> to vector<16x32xf32>
    %503 = arith.addf %501, %502 : vector<16x32xf32>
    %504 = arith.addf %467, %503 : vector<16x32xf32>
    %c0_163 = arith.constant 0 : index
    %c0_164 = arith.constant 0 : index
    %505 = vector.load %arg4[%c0_163, %c0_164] : memref<16x32xf32, #tpu.memory_space<vmem>>, vector<16x32xf32>
    tpu.vector_store %arg4[%c0_163, %c0_164], %504 {strides = array<i32>} : memref<16x32xf32, #tpu.memory_space<vmem>>, vector<16x32xf32>,
    return
  }
}

</mosaic_0001>

<llo_original>
// kernel: tpu_custom_call.1
$region0: #{tpu_custom_call.1}
  #allocation0 [shape = 'u32[]', space=smem, size = 0x4, offset = 0x4, fixed_abs, tag = 'smem constant byte address 0x4 - core index']
  #allocation1 [shape = 'u32[144,128]{1,0:T(1,128)}', space=vmem, size = 0x12000, scoped, tag = 'internal scratch']
  %s0 = inlined_call_operand.vmem [shape: f32[16,32], index: 0, kind: input, shape index: {}]
  %s1 = inlined_call_operand.vmem [shape: bf16[2,32,1792], index: 1, kind: input, shape index: {}]
  %s2 = inlined_call_operand.vmem [shape: bf16[2,768,32], index: 2, kind: input, shape index: {}]
  %s3 = inlined_call_operand.vmem [shape: f32[2,8,1536], index: 3, kind: input, shape index: {}]
  %s4 = inlined_call_operand.hbm [shape: f32[16,32], index: 4, kind: output, shape index: {}]
  %s5 = sld [smem:[#allocation0]]
  $region26: #{tpu_custom_call.1} parent=0
    _
  %s7 = ssub.s32 1, %s5
  %s8 = scalar_select 0, %s7, %s5
  $region1: #{tpu_custom_call.1} parent=0
    #allocation2 [shape = 'u8[8192]{0}', space=vmem, size = 0x2000, scoped, tag = 'output window, operand 0, single buffered']
    #allocation3 [shape = 's32[1]{0}', space=sflag, size = 0x4, scoped, tag = 'scoped memory for tpu_custom_call.1']
    %9 = vsyncpa [#allocation3], 0
    // Predicated region
    $region2: #{tpu_custom_call.1} parent=1 // pred_check
      _
    $region3: #{tpu_custom_call.1} parent=1 // pred_check_branch
      %11 = sbr.rel (0) target = $region5
    $region4: #{tpu_custom_call.1} parent=1 // pred_region
      _
    $region5: #{tpu_custom_call.1} parent=1 // pred_fallthru
      _
    // Predicated region
    $region6: #{tpu_custom_call.1} parent=1 // pred_check
      _
    $region7: #{tpu_custom_call.1} parent=1 // pred_check_branch
      %13 = sbr.rel (0) target = $region9
    $region8: #{tpu_custom_call.1} parent=1 // pred_region
      _
    $region9: #{tpu_custom_call.1} parent=1 // pred_fallthru
      _
    // Predicated region
    $region10: #{tpu_custom_call.1} parent=1 // pred_check
      _
    $region11: #{tpu_custom_call.1} parent=1 // pred_check_branch
      %15 = sbr.rel (0) target = $region13
    $region12: #{tpu_custom_call.1} parent=1 // pred_region
      _
    $region13: #{tpu_custom_call.1} parent=1 // pred_fallthru
      _
    // Predicated region
    $region14: #{tpu_custom_call.1} parent=1 // pred_check
      _
    $region15: #{tpu_custom_call.1} parent=1 // pred_check_branch
      %17 = sbr.rel (0) target = $region17
    $region16: #{tpu_custom_call.1} parent=1 // pred_region
      _
    $region17: #{tpu_custom_call.1} parent=1 // pred_fallthru
      _
    %v19 = vld [vmem:[%s0] sm:$0xff]
    %v20 = vld [vmem:[%s0 + $0x8] sm:$0xff]
    %v21 = vld [vmem:[%s3] ss:$0 sm:$0xff]
    %v22 = vld [vmem:[%s3 + $0x1] ss:$0 sm:$0xff]
    %v23 = vld [vmem:[%s3 + $0x2] ss:$0 sm:$0xff]
    %v24 = vld [vmem:[%s3 + $0x3] ss:$0 sm:$0xff]
    %v25 = vld [vmem:[%s3 + $0x4] ss:$0 sm:$0xff]
    %s26 = scalar_lea.vmem %s3, 5
    %v27 = vld [vmem:[%s26] ss:$8 sm:$0x3]
    %v28 = vld [vmem:[%s3 + $0x6] ss:$0 sm:$0xff]
    %s29 = scalar_lea.vmem %s3, 7
    %v30 = vld [vmem:[%s29] ss:$8 sm:$0xf]
    %v31 = vld [vmem:[%s29] ss:$8 sm:$0xf0]
    %v32 = vor.u32 %v30, %v31
    %s33 = scalar_lea.vmem %s3, 71
    %v34 = vld [vmem:[%s33] ss:$8 sm:$0xf]
    %v35 = vld [vmem:[%s1] sm:$0xff]
    %v36 = vld [vmem:[%s1 + $0x8] sm:$0xff]
    %v37 = vld [vmem:[%s1 + $0x10] sm:$0xff]
    %v38 = vld [vmem:[%s1 + $0x18] sm:$0xff]
    %v39 = vld [vmem:[%s1 + $0x20] sm:$0xff]
    %v40 = vld [vmem:[%s1 + $0x28] sm:$0xff]
    %v41 = vld [vmem:[%s1 + $0x38] sm:$0xff]
    %v42 = vld [vmem:[%s1 + $0x40] sm:$0xff]
    %v43 = vld [vmem:[%s1 + $0x48] sm:$0xff]
    %v44 = vld [vmem:[%s1 + $0x50] sm:$0xff]
    %v45 = vld [vmem:[%s1 + $0x58] sm:$0xff]
    %v46 = vld [vmem:[%s1 + $0x60] sm:$0xff]
    %v47 = vld [vmem:[%s1 + $0x70] sm:$0xff]
    %v48 = vld [vmem:[%s1 + $0x78] sm:$0xff]
    %v49 = vld [vmem:[%s1 + $0x80] sm:$0xff]
    %v50 = vld [vmem:[%s1 + $0x88] sm:$0xff]
    %v51 = vld [vmem:[%s1 + $0x90] sm:$0xff]
    %v52 = vld [vmem:[%s1 + $0x98] sm:$0xff]
    %v53 = vld [vmem:[%s1 + $0xa8] sm:$0xff]
    %v54 = vld [vmem:[%s1 + $0xb0] sm:$0xff]
    %v55 = vld [vmem:[%s1 + $0xb8] sm:$0xff]
    %v56 = vld [vmem:[%s1 + $0xc0] sm:$0xff]
    %v57 = vld [vmem:[%s1 + $0xc8] sm:$0xff]
    %v58 = vld [vmem:[%s1 + $0xd0] sm:$0xff]
    %v59 = vld [vmem:[%s1 + $0x30] sm:$0xff]
    %v60 = vld [vmem:[%s1 + $0x68] sm:$0xff]
    %v61 = vld [vmem:[%s1 + $0xa0] sm:$0xff]
    %v62 = vld [vmem:[%s1 + $0xd8] sm:$0xff]
    %v63 = vld [vmem:[%s2] sm:$0xf]
    %v64 = vld [vmem:[%s2 + $0x4] sm:$0xf]
    %v65 = vld [vmem:[%s2 + $0x8] sm:$0xf]
    %v66 = vld [vmem:[%s2 + $0xc] sm:$0xf]
    %v67 = vld [vmem:[%s2 + $0x10] sm:$0xf]
    %v68 = vld [vmem:[%s2 + $0x14] sm:$0xf]
    %v69 = vld [vmem:[%s2 + $0x18] sm:$0xf]
    %v70 = vld [vmem:[%s2 + $0x1c] sm:$0xf]
    %v71 = vld [vmem:[%s2 + $0x20] sm:$0xf]
    %v72 = vld [vmem:[%s2 + $0x24] sm:$0xf]
    %v73 = vld [vmem:[%s2 + $0x28] sm:$0xf]
    %v74 = vld [vmem:[%s2 + $0x2c] sm:$0xf]
    %v75 = vld [vmem:[%s2 + $0x30] sm:$0xf]
    %v76 = vld [vmem:[%s2 + $0x34] sm:$0xf]
    %v77 = vld [vmem:[%s2 + $0x38] sm:$0xf]
    %v78 = vld [vmem:[%s2 + $0x3c] sm:$0xf]
    %v79 = vld [vmem:[%s2 + $0x40] sm:$0xf]
    %v80 = vld [vmem:[%s2 + $0x44] sm:$0xf]
    %v81 = vld [vmem:[%s2 + $0x48] sm:$0xf]
    %v82 = vld [vmem:[%s2 + $0x4c] sm:$0xf]
    %v83 = vld [vmem:[%s2 + $0x50] sm:$0xf]
    %v84 = vld [vmem:[%s2 + $0x54] sm:$0xf]
    %v85 = vld [vmem:[%s2 + $0x58] sm:$0xf]
    %v86 = vld [vmem:[%s2 + $0x5c] sm:$0xf]
    %v87 = vld [vmem:[%s2 + $0x60] sm:$0xf]
    %v88 = vld [vmem:[%s2 + $0x64] sm:$0xf]
    %v89 = vld [vmem:[%s2 + $0x68] sm:$0xf]
    %v90 = vld [vmem:[%s2 + $0x6c] sm:$0xf]
    %v91 = vld [vmem:[%s2 + $0x70] sm:$0xf]
    %v92 = vld [vmem:[%s2 + $0x74] sm:$0xf]
    %v93 = vld [vmem:[%s2 + $0x78] sm:$0xf]
    %v94 = vld [vmem:[%s2 + $0x7c] sm:$0xf]
    %v95 = vld [vmem:[%s2 + $0x80] sm:$0xf]
    %v96 = vld [vmem:[%s2 + $0x84] sm:$0xf]
    %v97 = vld [vmem:[%s2 + $0x88] sm:$0xf]
    %v98 = vld [vmem:[%s2 + $0x8c] sm:$0xf]
    %v99 = vld [vmem:[%s2 + $0x90] sm:$0xf]
    %v100 = vld [vmem:[%s2 + $0x94] sm:$0xf]
    %v101 = vld [vmem:[%s2 + $0x98] sm:$0xf]
    %v102 = vld [vmem:[%s2 + $0x9c] sm:$0xf]
    %v103 = vld [vmem:[%s2 + $0xa0] sm:$0xf]
    %v104 = vld [vmem:[%s2 + $0xa4] sm:$0xf]
    %v105 = vld [vmem:[%s2 + $0xa8] sm:$0xf]
    %v106 = vld [vmem:[%s2 + $0xac] sm:$0xf]
    %v107 = vld [vmem:[%s2 + $0xb0] sm:$0xf]
    %v108 = vld [vmem:[%s2 + $0xb4] sm:$0xf]
    %v109 = vld [vmem:[%s2 + $0xb8] sm:$0xf]
    %v110 = vld [vmem:[%s2 + $0xbc] sm:$0xf]
    %v111 = vld [vmem:[%s2 + $0xc0] sm:$0xf]
    %v112 = vld [vmem:[%s2 + $0xc4] sm:$0xf]
    %v113 = vld [vmem:[%s2 + $0xc8] sm:$0xf]
    %v114 = vld [vmem:[%s2 + $0xcc] sm:$0xf]
    %v115 = vld [vmem:[%s2 + $0xd0] sm:$0xf]
    %v116 = vld [vmem:[%s2 + $0xd4] sm:$0xf]
    %v117 = vld [vmem:[%s2 + $0xd8] sm:$0xf]
    %v118 = vld [vmem:[%s2 + $0xdc] sm:$0xf]
    %v119 = vld [vmem:[%s2 + $0xe0] sm:$0xf]
    %v120 = vld [vmem:[%s2 + $0xe4] sm:$0xf]
    %v121 = vld [vmem:[%s2 + $0xe8] sm:$0xf]
    %v122 = vld [vmem:[%s2 + $0xec] sm:$0xf]
    %v123 = vld [vmem:[%s2 + $0xf0] sm:$0xf]
    %v124 = vld [vmem:[%s2 + $0xf4] sm:$0xf]
    %v125 = vld [vmem:[%s2 + $0xf8] sm:$0xf]
    %v126 = vld [vmem:[%s2 + $0xfc] sm:$0xf]
    %v127 = vld [vmem:[%s2 + $0x100] sm:$0xf]
    %v128 = vld [vmem:[%s2 + $0x104] sm:$0xf]
    %v129 = vld [vmem:[%s2 + $0x108] sm:$0xf]
    %v130 = vld [vmem:[%s2 + $0x10c] sm:$0xf]
    %v131 = vld [vmem:[%s2 + $0x110] sm:$0xf]
    %v132 = vld [vmem:[%s2 + $0x114] sm:$0xf]
    %v133 = vld [vmem:[%s2 + $0x118] sm:$0xf]
    %v134 = vld [vmem:[%s2 + $0x11c] sm:$0xf]
    %v135 = vld [vmem:[%s2 + $0x120] sm:$0xf]
    %v136 = vld [vmem:[%s2 + $0x124] sm:$0xf]
    %v137 = vld [vmem:[%s2 + $0x128] sm:$0xf]
    %v138 = vld [vmem:[%s2 + $0x12c] sm:$0xf]
    %v139 = vld [vmem:[%s2 + $0x130] sm:$0xf]
    %v140 = vld [vmem:[%s2 + $0x134] sm:$0xf]
    %v141 = vld [vmem:[%s2 + $0x138] sm:$0xf]
    %v142 = vld [vmem:[%s2 + $0x13c] sm:$0xf]
    %v143 = vld [vmem:[%s2 + $0x140] sm:$0xf]
    %v144 = vld [vmem:[%s2 + $0x144] sm:$0xf]
    %v145 = vld [vmem:[%s2 + $0x148] sm:$0xf]
    %v146 = vld [vmem:[%s2 + $0x14c] sm:$0xf]
    %v147 = vld [vmem:[%s2 + $0x150] sm:$0xf]
    %v148 = vld [vmem:[%s2 + $0x154] sm:$0xf]
    %v149 = vld [vmem:[%s2 + $0x158] sm:$0xf]
    %v150 = vld [vmem:[%s2 + $0x15c] sm:$0xf]
    %v151 = vld [vmem:[%s2 + $0x160] sm:$0xf]
    %v152 = vld [vmem:[%s2 + $0x164] sm:$0xf]
    %v153 = vld [vmem:[%s2 + $0x168] sm:$0xf]
    %v154 = vld [vmem:[%s2 + $0x16c] sm:$0xf]
    %v155 = vld [vmem:[%s2 + $0x170] sm:$0xf]
    %v156 = vld [vmem:[%s2 + $0x174] sm:$0xf]
    %v157 = vld [vmem:[%s2 + $0x178] sm:$0xf]
    %v158 = vld [vmem:[%s2 + $0x17c] sm:$0xf]
    %vm159 = vcmask 261120
    %v160 = vsel %vm159, %v19, 0.0
    %161 = vadd.xlane.f32.xlu0 %v160
    %v162 = vpop.xlane.xlu0 %161
    %v163 = vsel %vm159, %v20, 0.0
    %164 = vadd.xlane.f32.xlu0 %v163
    %v165 = vpop.xlane.xlu0 %164
    %v166 = vrcp.pop 32.0
    %v167 = vmul.f32 %v162, %v166
    %v168 = vmul.f32 %v165, %v166
    %v169 = vsub.f32 %v19, %v167
    %v170 = vsub.f32 %v20, %v168
    %v171 = vmul.f32 %v169, %v169
    %v172 = vmul.f32 %v170, %v170
    %v173 = vsel %vm159, %v171, 0.0
    %174 = vadd.xlane.f32.xlu0 %v173
    %v175 = vpop.xlane.xlu0 %174
    %v176 = vsel %vm159, %v172, 0.0
    %177 = vadd.xlane.f32.xlu0 %v176
    %v178 = vpop.xlane.xlu0 %177
    %v179 = vmul.f32 %v175, %v166
    %v180 = vmul.f32 %v178, %v166
    %v181 = vadd.f32 %v179, 1e-05
    %v182 = vadd.f32 %v180, 1e-05
    %v183 = vrsqrt.pop %v181
    %v184 = vrsqrt.pop %v182
    %v185 = vmul.f32 %v169, %v183
    %v186 = vmul.f32 %v170, %v184
    %v187 = vmul.f32 %v185, %v21
    %v188 = vmul.f32 %v186, %v21
    %v189 = vadd.f32 %v187, %v22
    %v190 = vadd.f32 %v188, %v22
    %v191 = vpack.c.bf16 %v190, %v189
    %v194 = vlaneseq
    %v195 = vshrl.u32 %v194, 7
    %v196 = vsub.s32 0, %v195
    %v197 = vrot.slane %v32, %v196
    %v198 = vlaneseq
    %v199 = vshrl.u32 %v198, 7
    %v200 = vsub.s32 1, %v199
    %v201 = vrot.slane %v32, %v200
    %v202 = vlaneseq
    %v203 = vshrl.u32 %v202, 7
    %v204 = vsub.s32 2, %v203
    %v205 = vrot.slane %v32, %v204
    %v206 = vlaneseq
    %v207 = vshrl.u32 %v206, 7
    %v208 = vsub.s32 3, %v207
    %v209 = vrot.slane %v32, %v208
    %v210 = vlaneseq
    %v211 = vshrl.u32 %v210, 7
    %v212 = vsub.s32 4, %v211
    %v213 = vrot.slane %v32, %v212
    %v214 = vlaneseq
    %v215 = vshrl.u32 %v214, 7
    %v216 = vsub.s32 5, %v215
    %v217 = vrot.slane %v32, %v216
    %v218 = vlaneseq
    %v219 = vshrl.u32 %v218, 7
    %v220 = vsub.s32 6, %v219
    %v221 = vrot.slane %v32, %v220
    %v222 = vlaneseq
    %v223 = vshrl.u32 %v222, 7
    %v224 = vsub.s32 7, %v223
    %v225 = vrot.slane %v32, %v224
    %v226 = vlaneseq
    %v227 = vshrl.u32 %v226, 7
    %v228 = vsub.s32 0, %v227
    %v229 = vrot.slane %v34, %v228
    %v230 = vlaneseq
    %v231 = vshrl.u32 %v230, 7
    %v232 = vsub.s32 1, %v231
    %v233 = vrot.slane %v34, %v232
    %v234 = vlaneseq
    %v235 = vshrl.u32 %v234, 7
    %v236 = vsub.s32 2, %v235
    %v237 = vrot.slane %v34, %v236
    %v238 = vlaneseq
    %v239 = vshrl.u32 %v238, 7
    %v240 = vsub.s32 3, %v239
    %v241 = vrot.slane %v34, %v240
    %v278 = vunpack.c.l.b16 %v35
    %v279 = vunpack.c.h.b16 %v35
    %v280 = vunpack.c.l.b16 %v36
    %v281 = vunpack.c.h.b16 %v36
    %v282 = vunpack.c.l.b16 %v37
    %v283 = vunpack.c.h.b16 %v37
    %v284 = vunpack.c.l.b16 %v38
    %v285 = vunpack.c.h.b16 %v38
    %v286 = vunpack.c.l.b16 %v39
    %v287 = vunpack.c.h.b16 %v39
    %v288 = vunpack.c.l.b16 %v40
    %v289 = vunpack.c.h.b16 %v40
    %v290 = vunpack.c.l.b16 %v41
    %v291 = vunpack.c.h.b16 %v41
    %v292 = vunpack.c.l.b16 %v42
    %v293 = vunpack.c.h.b16 %v42
    %v294 = vunpack.c.l.b16 %v43
    %v295 = vunpack.c.h.b16 %v43
    %v296 = vunpack.c.l.b16 %v44
    %v297 = vunpack.c.h.b16 %v44
    %v298 = vunpack.c.l.b16 %v45
    %v299 = vunpack.c.h.b16 %v45
    %v300 = vunpack.c.l.b16 %v46
    %v301 = vunpack.c.h.b16 %v46
    %v302 = vunpack.c.l.b16 %v47
    %v303 = vunpack.c.h.b16 %v47
    %v304 = vunpack.c.l.b16 %v48
    %v305 = vunpack.c.h.b16 %v48
    %v306 = vunpack.c.l.b16 %v49
    %v307 = vunpack.c.h.b16 %v49
    %v308 = vunpack.c.l.b16 %v50
    %v309 = vunpack.c.h.b16 %v50
    %v310 = vunpack.c.l.b16 %v51
    %v311 = vunpack.c.h.b16 %v51
    %v312 = vunpack.c.l.b16 %v52
    %v313 = vunpack.c.h.b16 %v52
    %v314 = vunpack.c.l.b16 %v53
    %v315 = vunpack.c.h.b16 %v53
    %v316 = vunpack.c.l.b16 %v54
    %v317 = vunpack.c.h.b16 %v54
    %v318 = vunpack.c.l.b16 %v55
    %v319 = vunpack.c.h.b16 %v55
    %v320 = vunpack.c.l.b16 %v56
    %v321 = vunpack.c.h.b16 %v56
    %v322 = vunpack.c.l.b16 %v57
    %v323 = vunpack.c.h.b16 %v57
    %v324 = vunpack.c.l.b16 %v58
    %v325 = vunpack.c.h.b16 %v58
    %v326 = vpack.c.b16 %v290, %v278
    %v327 = vpack.c.b16 %v291, %v279
    %v328 = vpack.c.b16 %v292, %v280
    %v329 = vpack.c.b16 %v293, %v281
    %v330 = vpack.c.b16 %v294, %v282
    %v331 = vpack.c.b16 %v295, %v283
    %v332 = vpack.c.b16 %v296, %v284
    %v333 = vpack.c.b16 %v297, %v285
    %v334 = vpack.c.b16 %v298, %v286
    %v335 = vpack.c.b16 %v299, %v287
    %v336 = vpack.c.b16 %v300, %v288
    %v337 = vpack.c.b16 %v301, %v289
    %v338 = vpack.c.b16 %v314, %v302
    %v339 = vpack.c.b16 %v315, %v303
    %v340 = vpack.c.b16 %v316, %v304
    %v341 = vpack.c.b16 %v317, %v305
    %v342 = vpack.c.b16 %v318, %v306
    %v343 = vpack.c.b16 %v319, %v307
    %v344 = vpack.c.b16 %v320, %v308
    %v345 = vpack.c.b16 %v321, %v309
    %v346 = vpack.c.b16 %v322, %v310
    %v347 = vpack.c.b16 %v323, %v311
    %v348 = vpack.c.b16 %v324, %v312
    %v349 = vpack.c.b16 %v325, %v313
    %v375 = vsel %vm159, %v191, 0
    %377 = vmatprep.subr.bf16.mxu0 %v327
    %378 = vmatpush1.bf16.msra.mxu0 %v326
    %379 = vmatprep.subr.bf16.mxu0 %v339
    %380 = vmatpush1.bf16.msra.mxu0 %v338
    %381 = vmatprep.subr.bf16.mxu0 0
    %382 = vmatpush1.bf16.msra.mxu0 0
    %383 = vmatprep.subr.bf16.mxu0 0
    %384 = vmatpush1.bf16.msra.mxu0 0
    %385 = vmatprep.subr.bf16.mxu0 0
    %386 = vmatpush1.bf16.msra.mxu0 0
    %387 = vmatprep.subr.bf16.mxu0 0
    %388 = vmatpush1.bf16.msra.mxu0 0
    %389 = vmatprep.subr.bf16.mxu0 0
    %390 = vmatpush1.bf16.msra.mxu0 0
    %391 = vmatprep.subr.bf16.mxu0 0
    %392 = vmatpush1.bf16.msra.mxu0 0
    %393 = vmatprep.subr.bf16.mxu0 0
    %394 = vmatpush1.bf16.msra.mxu0 0
    %395 = vmatprep.subr.bf16.mxu0 0
    %396 = vmatpush1.bf16.msra.mxu0 0
    %397 = vmatprep.subr.bf16.mxu0 0
    %398 = vmatpush1.bf16.msra.mxu0 0
    %399 = vmatprep.subr.bf16.mxu0 0
    %400 = vmatpush1.bf16.msra.mxu0 0
    %401 = vmatprep.subr.bf16.mxu0 0
    %402 = vmatpush1.bf16.msra.mxu0 0
    %403 = vmatprep.subr.bf16.mxu0 0
    %404 = vmatpush1.bf16.msra.mxu0 0
    %405 = vmatprep.subr.bf16.mxu0 0
    %406 = vmatpush1.bf16.msra.mxu0 0
    %407 = vmatprep.subr.bf16.mxu0 0
    %408 = vmatpush1.bf16.msra.mxu0 0
    %409 = vmatprep.mubr.bf16.mxu0 0
    %410 = vmatmul.mubr.bf16.gmra.mrb[0].mxu0 %v375
    %v411 = vpop.f32.mrb[0].mxu0
    %v412 = vadd.f32 %v197, %v411
    %v413 = vpop.f32.mrb[0].mxu0
    %v414 = vadd.f32 %v201, %v413
    %v415 = vpop.f32.mrb[0].mxu0
    %v416 = vadd.f32 %v197, %v415
    %v417 = vpop.f32.mrb[0].mxu0
    %v418 = vadd.f32 %v201, %v417
    %419 = vdwg.mxu0
    %420 = vmatprep.subr.bf16.mxu0 %v329
    %421 = vmatpush1.bf16.msra.mxu0 %v328
    %422 = vmatprep.subr.bf16.mxu0 %v341
    %423 = vmatpush1.bf16.msra.mxu0 %v340
    %424 = vmatprep.subr.bf16.mxu0 0
    %425 = vmatpush1.bf16.msra.mxu0 0
    %426 = vmatprep.subr.bf16.mxu0 0
    %427 = vmatpush1.bf16.msra.mxu0 0
    %428 = vmatprep.subr.bf16.mxu0 0
    %429 = vmatpush1.bf16.msra.mxu0 0
    %430 = vmatprep.subr.bf16.mxu0 0
    %431 = vmatpush1.bf16.msra.mxu0 0
    %432 = vmatprep.subr.bf16.mxu0 0
    %433 = vmatpush1.bf16.msra.mxu0 0
    %434 = vmatprep.subr.bf16.mxu0 0
    %435 = vmatpush1.bf16.msra.mxu0 0
    %436 = vmatprep.subr.bf16.mxu0 0
    %437 = vmatpush1.bf16.msra.mxu0 0
    %438 = vmatprep.subr.bf16.mxu0 0
    %439 = vmatpush1.bf16.msra.mxu0 0
    %440 = vmatprep.subr.bf16.mxu0 0
    %441 = vmatpush1.bf16.msra.mxu0 0
    %442 = vmatprep.subr.bf16.mxu0 0
    %443 = vmatpush1.bf16.msra.mxu0 0
    %444 = vmatprep.subr.bf16.mxu0 0
    %445 = vmatpush1.bf16.msra.mxu0 0
    %446 = vmatprep.subr.bf16.mxu0 0
    %447 = vmatpush1.bf16.msra.mxu0 0
    %448 = vmatprep.subr.bf16.mxu0 0
    %449 = vmatpush1.bf16.msra.mxu0 0
    %450 = vmatprep.subr.bf16.mxu0 0
    %451 = vmatpush1.bf16.msra.mxu0 0
    %452 = vmatprep.mubr.bf16.mxu0 0
    %453 = vmatmul.mubr.bf16.gmra.mrb[0].mxu0 %v375
    %v454 = vpop.f32.mrb[0].mxu0
    %v455 = vadd.f32 %v205, %v454
    %v456 = vpop.f32.mrb[0].mxu0
    %v457 = vadd.f32 %v209, %v456
    %v458 = vpop.f32.mrb[0].mxu0
    %v459 = vadd.f32 %v205, %v458
    %v460 = vpop.f32.mrb[0].mxu0
    %v461 = vadd.f32 %v209, %v460
    %462 = vdwg.mxu0
    %463 = vmatprep.subr.bf16.mxu0 %v331
    %464 = vmatpush1.bf16.msra.mxu0 %v330
    %465 = vmatprep.subr.bf16.mxu0 %v343
    %466 = vmatpush1.bf16.msra.mxu0 %v342
    %467 = vmatprep.subr.bf16.mxu0 0
    %468 = vmatpush1.bf16.msra.mxu0 0
    %469 = vmatprep.subr.bf16.mxu0 0
    %470 = vmatpush1.bf16.msra.mxu0 0
    %471 = vmatprep.subr.bf16.mxu0 0
    %472 = vmatpush1.bf16.msra.mxu0 0
    %473 = vmatprep.subr.bf16.mxu0 0
    %474 = vmatpush1.bf16.msra.mxu0 0
    %475 = vmatprep.subr.bf16.mxu0 0
    %476 = vmatpush1.bf16.msra.mxu0 0
    %477 = vmatprep.subr.bf16.mxu0 0
    %478 = vmatpush1.bf16.msra.mxu0 0
    %479 = vmatprep.subr.bf16.mxu0 0
    %480 = vmatpush1.bf16.msra.mxu0 0
    %481 = vmatprep.subr.bf16.mxu0 0
    %482 = vmatpush1.bf16.msra.mxu0 0
    %483 = vmatprep.subr.bf16.mxu0 0
    %484 = vmatpush1.bf16.msra.mxu0 0
    %485 = vmatprep.subr.bf16.mxu0 0
    %486 = vmatpush1.bf16.msra.mxu0 0
    %487 = vmatprep.subr.bf16.mxu0 0
    %488 = vmatpush1.bf16.msra.mxu0 0
    %489 = vmatprep.subr.bf16.mxu0 0
    %490 = vmatpush1.bf16.msra.mxu0 0
    %491 = vmatprep.subr.bf16.mxu0 0
    %492 = vmatpush1.bf16.msra.mxu0 0
    %493 = vmatprep.subr.bf16.mxu0 0
    %494 = vmatpush1.bf16.msra.mxu0 0
    %495 = vmatprep.mubr.bf16.mxu0 0
    %496 = vmatmul.mubr.bf16.gmra.mrb[0].mxu0 %v375
    %v497 = vpop.f32.mrb[0].mxu0
    %v498 = vadd.f32 %v213, %v497
    %v499 = vpop.f32.mrb[0].mxu0
    %v500 = vadd.f32 %v217, %v499
    %v501 = vpop.f32.mrb[0].mxu0
    %v502 = vadd.f32 %v213, %v501
    %v503 = vpop.f32.mrb[0].mxu0
    %v504 = vadd.f32 %v217, %v503
    %505 = vdwg.mxu0
    %506 = vmatprep.subr.bf16.mxu0 %v333
    %507 = vmatpush1.bf16.msra.mxu0 %v332
    %508 = vmatprep.subr.bf16.mxu0 %v345
    %509 = vmatpush1.bf16.msra.mxu0 %v344
    %510 = vmatprep.subr.bf16.mxu0 0
    %511 = vmatpush1.bf16.msra.mxu0 0
    %512 = vmatprep.subr.bf16.mxu0 0
    %513 = vmatpush1.bf16.msra.mxu0 0
    %514 = vmatprep.subr.bf16.mxu0 0
    %515 = vmatpush1.bf16.msra.mxu0 0
    %516 = vmatprep.subr.bf16.mxu0 0
    %517 = vmatpush1.bf16.msra.mxu0 0
    %518 = vmatprep.subr.bf16.mxu0 0
    %519 = vmatpush1.bf16.msra.mxu0 0
    %520 = vmatprep.subr.bf16.mxu0 0
    %521 = vmatpush1.bf16.msra.mxu0 0
    %522 = vmatprep.subr.bf16.mxu0 0
    %523 = vmatpush1.bf16.msra.mxu0 0
    %524 = vmatprep.subr.bf16.mxu0 0
    %525 = vmatpush1.bf16.msra.mxu0 0
    %526 = vmatprep.subr.bf16.mxu0 0
    %527 = vmatpush1.bf16.msra.mxu0 0
    %528 = vmatprep.subr.bf16.mxu0 0
    %529 = vmatpush1.bf16.msra.mxu0 0
    %530 = vmatprep.subr.bf16.mxu0 0
    %531 = vmatpush1.bf16.msra.mxu0 0
    %532 = vmatprep.subr.bf16.mxu0 0
    %533 = vmatpush1.bf16.msra.mxu0 0
    %534 = vmatprep.subr.bf16.mxu0 0
    %535 = vmatpush1.bf16.msra.mxu0 0
    %536 = vmatprep.subr.bf16.mxu0 0
    %537 = vmatpush1.bf16.msra.mxu0 0
    %538 = vmatprep.mubr.bf16.mxu0 0
    %539 = vmatmul.mubr.bf16.gmra.mrb[0].mxu0 %v375
    %v540 = vpop.f32.mrb[0].mxu0
    %v541 = vadd.f32 %v221, %v540
    %v542 = vpop.f32.mrb[0].mxu0
    %v543 = vadd.f32 %v225, %v542
    %v544 = vpop.f32.mrb[0].mxu0
    %v545 = vadd.f32 %v221, %v544
    %v546 = vpop.f32.mrb[0].mxu0
    %v547 = vadd.f32 %v225, %v546
    %548 = vdwg.mxu0
    %549 = vmatprep.subr.bf16.mxu0 %v335
    %550 = vmatpush1.bf16.msra.mxu0 %v334
    %551 = vmatprep.subr.bf16.mxu0 %v347
    %552 = vmatpush1.bf16.msra.mxu0 %v346
    %553 = vmatprep.subr.bf16.mxu0 0
    %554 = vmatpush1.bf16.msra.mxu0 0
    %555 = vmatprep.subr.bf16.mxu0 0
    %556 = vmatpush1.bf16.msra.mxu0 0
    %557 = vmatprep.subr.bf16.mxu0 0
    %558 = vmatpush1.bf16.msra.mxu0 0
    %559 = vmatprep.subr.bf16.mxu0 0
    %560 = vmatpush1.bf16.msra.mxu0 0
    %561 = vmatprep.subr.bf16.mxu0 0
    %562 = vmatpush1.bf16.msra.mxu0 0
    %563 = vmatprep.subr.bf16.mxu0 0
    %564 = vmatpush1.bf16.msra.mxu0 0
    %565 = vmatprep.subr.bf16.mxu0 0
    %566 = vmatpush1.bf16.msra.mxu0 0
    %567 = vmatprep.subr.bf16.mxu0 0
    %568 = vmatpush1.bf16.msra.mxu0 0
    %569 = vmatprep.subr.bf16.mxu0 0
    %570 = vmatpush1.bf16.msra.mxu0 0
    %571 = vmatprep.subr.bf16.mxu0 0
    %572 = vmatpush1.bf16.msra.mxu0 0
    %573 = vmatprep.subr.bf16.mxu0 0
    %574 = vmatpush1.bf16.msra.mxu0 0
    %575 = vmatprep.subr.bf16.mxu0 0
    %576 = vmatpush1.bf16.msra.mxu0 0
    %577 = vmatprep.subr.bf16.mxu0 0
    %578 = vmatpush1.bf16.msra.mxu0 0
    %579 = vmatprep.subr.bf16.mxu0 0
    %580 = vmatpush1.bf16.msra.mxu0 0
    %581 = vmatprep.mubr.bf16.mxu0 0
    %582 = vmatmul.mubr.bf16.gmra.mrb[0].mxu0 %v375
    %v583 = vpop.f32.mrb[0].mxu0
    %v584 = vadd.f32 %v229, %v583
    %v585 = vpop.f32.mrb[0].mxu0
    %v586 = vadd.f32 %v233, %v585
    %v587 = vpop.f32.mrb[0].mxu0
    %v588 = vadd.f32 %v229, %v587
    %v589 = vpop.f32.mrb[0].mxu0
    %v590 = vadd.f32 %v233, %v589
    %591 = vdwg.mxu0
    %592 = vmatprep.subr.bf16.mxu0 %v337
    %593 = vmatpush1.bf16.msra.mxu0 %v336
    %594 = vmatprep.subr.bf16.mxu0 %v349
    %595 = vmatpush1.bf16.msra.mxu0 %v348
    %596 = vmatprep.subr.bf16.mxu0 0
    %597 = vmatpush1.bf16.msra.mxu0 0
    %598 = vmatprep.subr.bf16.mxu0 0
    %599 = vmatpush1.bf16.msra.mxu0 0
    %600 = vmatprep.subr.bf16.mxu0 0
    %601 = vmatpush1.bf16.msra.mxu0 0
    %602 = vmatprep.subr.bf16.mxu0 0
    %603 = vmatpush1.bf16.msra.mxu0 0
    %604 = vmatprep.subr.bf16.mxu0 0
    %605 = vmatpush1.bf16.msra.mxu0 0
    %606 = vmatprep.subr.bf16.mxu0 0
    %607 = vmatpush1.bf16.msra.mxu0 0
    %608 = vmatprep.subr.bf16.mxu0 0
    %609 = vmatpush1.bf16.msra.mxu0 0
    %610 = vmatprep.subr.bf16.mxu0 0
    %611 = vmatpush1.bf16.msra.mxu0 0
    %612 = vmatprep.subr.bf16.mxu0 0
    %613 = vmatpush1.bf16.msra.mxu0 0
    %614 = vmatprep.subr.bf16.mxu0 0
    %615 = vmatpush1.bf16.msra.mxu0 0
    %616 = vmatprep.subr.bf16.mxu0 0
    %617 = vmatpush1.bf16.msra.mxu0 0
    %618 = vmatprep.subr.bf16.mxu0 0
    %619 = vmatpush1.bf16.msra.mxu0 0
    %620 = vmatprep.subr.bf16.mxu0 0
    %621 = vmatpush1.bf16.msra.mxu0 0
    %622 = vmatprep.subr.bf16.mxu0 0
    %623 = vmatpush1.bf16.msra.mxu0 0
    %624 = vmatprep.mubr.bf16.mxu0 0
    %625 = vmatmul.mubr.bf16.gmra.mrb[0].mxu0 %v375
    %v626 = vpop.f32.mrb[0].mxu0
    %v627 = vadd.f32 %v237, %v626
    %v628 = vpop.f32.mrb[0].mxu0
    %v629 = vadd.f32 %v241, %v628
    %v630 = vpop.f32.mrb[0].mxu0
    %v631 = vadd.f32 %v237, %v630
    %v632 = vpop.f32.mrb[0].mxu0
    %v633 = vadd.f32 %v241, %v632
    %634 = vdwg.mxu0
    %v635 = vpack.c.bf16 %v412, %v412
    %v636 = vpack.c.bf16 %v498, %v498
    %v637 = vpack.c.bf16 %v584, %v584
    %638 = vmatprep.subr.bf16.mxu0 0
    %639 = vmatpush1.bf16.xpose.msra.mxu0 %v636
    %640 = vmatprep.subr.bf16.mxu0 0
    %641 = vmatpush1.bf16.xpose.msra.mxu0 0
    %642 = vmatprep.subr.bf16.mxu0 0
    %643 = vmatpush1.bf16.xpose.msra.mxu0 0
    %644 = vmatprep.subr.bf16.mxu0 0
    %645 = vmatpush1.bf16.xpose.msra.mxu0 0
    %646 = vmatprep.subr.bf16.mxu0 0
    %647 = vmatpush1.bf16.xpose.msra.mxu0 0
    %648 = vmatprep.subr.bf16.mxu0 0
    %649 = vmatpush1.bf16.xpose.msra.mxu0 0
    %650 = vmatprep.subr.bf16.mxu0 0
    %651 = vmatpush1.bf16.xpose.msra.mxu0 0
    %652 = vmatprep.subr.bf16.mxu0 0
    %653 = vmatpush1.bf16.xpose.msra.mxu0 0
    %654 = vmatprep.subr.bf16.mxu0 0
    %655 = vmatpush1.bf16.xpose.msra.mxu0 0
    %656 = vmatprep.subr.bf16.mxu0 0
    %657 = vmatpush1.bf16.xpose.msra.mxu0 0
    %658 = vmatprep.subr.bf16.mxu0 0
    %659 = vmatpush1.bf16.xpose.msra.mxu0 0
    %660 = vmatprep.subr.bf16.mxu0 0
    %661 = vmatpush1.bf16.xpose.msra.mxu0 0
    %662 = vmatprep.subr.bf16.mxu0 0
    %663 = vmatpush1.bf16.xpose.msra.mxu0 0
    %664 = vmatprep.subr.bf16.mxu0 0
    %665 = vmatpush1.bf16.xpose.msra.mxu0 0
    %666 = vmatprep.subr.bf16.mxu0 0
    %667 = vmatpush1.bf16.xpose.msra.mxu0 0
    %668 = vmatprep.subr.bf16.mxu0 0
    %669 = vmatpush1.bf16.xpose.msra.mxu0 0
    %670 = vmatprep.mubr.bf16.mxu0 0
    %671 = vmatmul.mubr.bf16.gmra.mrb[0].mxu0 %v635
    %v672 = vpop.f32.mrb[0].mxu0
    %v673 = vadd.f32 0.0, %v672
    %v674 = vpop.f32.mrb[0].mxu0
    %v675 = vpop.f32.mrb[0].mxu0
    %v676 = vpop.f32.mrb[0].mxu0
    %677 = vdwg.mxu0
    %vm678 = vcmask 64512
    %v679 = vsel %vm678, %v673, -inf
    %680 = vmax.xlane.f32.xlu0 %v679
    %v681 = vpop.xlane.xlu0 %680
    %v682 = vsub.f32 %v673, %v681
    %v683 = vmul.f32 %v682, 1.442695
    %v684 = vpow.pop %v683
    %v685 = vsel %vm678, %v684, 0.0
    %686 = vadd.xlane.f32.xlu0 %v685
    %v687 = vpop.xlane.xlu0 %686
    %v688 = vrcp.pop %v687
    %v689 = vmul.f32 %v684, %v688
    %v690 = vpack.c.bf16 %v689, %v689
    %v692 = vsel %vm678, %v690, 0
    %vm694 = vcmask 1043456
    %v696 = vsel %vm694, %v637, 0
    %698 = vmatprep.subr.bf16.mxu0 0
    %699 = vmatpush1.bf16.msra.mxu0 %v696
    %700 = vmatprep.subr.bf16.mxu0 0
    %701 = vmatpush1.bf16.msra.mxu0 0
    %702 = vmatprep.subr.bf16.mxu0 0
    %703 = vmatpush1.bf16.msra.mxu0 0
    %704 = vmatprep.subr.bf16.mxu0 0
    %705 = vmatpush1.bf16.msra.mxu0 0
    %706 = vmatprep.subr.bf16.mxu0 0
    %707 = vmatpush1.bf16.msra.mxu0 0
    %708 = vmatprep.subr.bf16.mxu0 0
    %709 = vmatpush1.bf16.msra.mxu0 0
    %710 = vmatprep.subr.bf16.mxu0 0
    %711 = vmatpush1.bf16.msra.mxu0 0
    %712 = vmatprep.subr.bf16.mxu0 0
    %713 = vmatpush1.bf16.msra.mxu0 0
    %714 = vmatprep.subr.bf16.mxu0 0
    %715 = vmatpush1.bf16.msra.mxu0 0
    %716 = vmatprep.subr.bf16.mxu0 0
    %717 = vmatpush1.bf16.msra.mxu0 0
    %718 = vmatprep.subr.bf16.mxu0 0
    %719 = vmatpush1.bf16.msra.mxu0 0
    %720 = vmatprep.subr.bf16.mxu0 0
    %721 = vmatpush1.bf16.msra.mxu0 0
    %722 = vmatprep.subr.bf16.mxu0 0
    %723 = vmatpush1.bf16.msra.mxu0 0
    %724 = vmatprep.subr.bf16.mxu0 0
    %725 = vmatpush1.bf16.msra.mxu0 0
    %726 = vmatprep.subr.bf16.mxu0 0
    %727 = vmatpush1.bf16.msra.mxu0 0
    %728 = vmatprep.subr.bf16.mxu0 0
    %729 = vmatpush1.bf16.msra.mxu0 0
    %730 = vmatprep.mubr.bf16.mxu0 0
    %731 = vmatmul.mubr.bf16.gmra.mrb[0].mxu0 %v692
    %v732 = vpop.f32.mrb[0].mxu0
    %v733 = vadd.f32 0.0, %v732
    %v734 = vpop.f32.mrb[0].mxu0
    %v735 = vpop.f32.mrb[0].mxu0
    %v736 = vpop.f32.mrb[0].mxu0
    %737 = vdwg.mxu0
    %v738 = vpack.c.bf16 %v414, %v414
    %v739 = vpack.c.bf16 %v500, %v500
    %v740 = vpack.c.bf16 %v586, %v586
    %741 = vmatprep.subr.bf16.mxu0 0
    %742 = vmatpush1.bf16.xpose.msra.mxu0 %v739
    %743 = vmatprep.subr.bf16.mxu0 0
    %744 = vmatpush1.bf16.xpose.msra.mxu0 0
    %745 = vmatprep.subr.bf16.mxu0 0
    %746 = vmatpush1.bf16.xpose.msra.mxu0 0
    %747 = vmatprep.subr.bf16.mxu0 0
    %748 = vmatpush1.bf16.xpose.msra.mxu0 0
    %749 = vmatprep.subr.bf16.mxu0 0
    %750 = vmatpush1.bf16.xpose.msra.mxu0 0
    %751 = vmatprep.subr.bf16.mxu0 0
    %752 = vmatpush1.bf16.xpose.msra.mxu0 0
    %753 = vmatprep.subr.bf16.mxu0 0
    %754 = vmatpush1.bf16.xpose.msra.mxu0 0
    %755 = vmatprep.subr.bf16.mxu0 0
    %756 = vmatpush1.bf16.xpose.msra.mxu0 0
    %757 = vmatprep.subr.bf16.mxu0 0
    %758 = vmatpush1.bf16.xpose.msra.mxu0 0
    %759 = vmatprep.subr.bf16.mxu0 0
    %760 = vmatpush1.bf16.xpose.msra.mxu0 0
    %761 = vmatprep.subr.bf16.mxu0 0
    %762 = vmatpush1.bf16.xpose.msra.mxu0 0
    %763 = vmatprep.subr.bf16.mxu0 0
    %764 = vmatpush1.bf16.xpose.msra.mxu0 0
    %765 = vmatprep.subr.bf16.mxu0 0
    %766 = vmatpush1.bf16.xpose.msra.mxu0 0
    %767 = vmatprep.subr.bf16.mxu0 0
    %768 = vmatpush1.bf16.xpose.msra.mxu0 0
    %769 = vmatprep.subr.bf16.mxu0 0
    %770 = vmatpush1.bf16.xpose.msra.mxu0 0
    %771 = vmatprep.subr.bf16.mxu0 0
    %772 = vmatpush1.bf16.xpose.msra.mxu0 0
    %773 = vmatprep.mubr.bf16.mxu0 0
    %774 = vmatmul.mubr.bf16.gmra.mrb[0].mxu0 %v738
    %v775 = vpop.f32.mrb[0].mxu0
    %v776 = vadd.f32 0.0, %v775
    %v777 = vpop.f32.mrb[0].mxu0
    %v778 = vpop.f32.mrb[0].mxu0
    %v779 = vpop.f32.mrb[0].mxu0
    %780 = vdwg.mxu0
    %v781 = vsel %vm678, %v776, -inf
    %782 = vmax.xlane.f32.xlu0 %v781
    %v783 = vpop.xlane.xlu0 %782
    %v784 = vsub.f32 %v776, %v783
    %v785 = vmul.f32 %v784, 1.442695
    %v786 = vpow.pop %v785
    %v787 = vsel %vm678, %v786, 0.0
    %788 = vadd.xlane.f32.xlu0 %v787
    %v789 = vpop.xlane.xlu0 %788
    %v790 = vrcp.pop %v789
    %v791 = vmul.f32 %v786, %v790
    %v792 = vpack.c.bf16 %v791, %v791
    %v794 = vsel %vm678, %v792, 0
    %v797 = vsel %vm694, %v740, 0
    %799 = vmatprep.subr.bf16.mxu0 0
    %800 = vmatpush1.bf16.msra.mxu0 %v797
    %801 = vmatprep.subr.bf16.mxu0 0
    %802 = vmatpush1.bf16.msra.mxu0 0
    %803 = vmatprep.subr.bf16.mxu0 0
    %804 = vmatpush1.bf16.msra.mxu0 0
    %805 = vmatprep.subr.bf16.mxu0 0
    %806 = vmatpush1.bf16.msra.mxu0 0
    %807 = vmatprep.subr.bf16.mxu0 0
    %808 = vmatpush1.bf16.msra.mxu0 0
    %809 = vmatprep.subr.bf16.mxu0 0
    %810 = vmatpush1.bf16.msra.mxu0 0
    %811 = vmatprep.subr.bf16.mxu0 0
    %812 = vmatpush1.bf16.msra.mxu0 0
    %813 = vmatprep.subr.bf16.mxu0 0
    %814 = vmatpush1.bf16.msra.mxu0 0
    %815 = vmatprep.subr.bf16.mxu0 0
    %816 = vmatpush1.bf16.msra.mxu0 0
    %817 = vmatprep.subr.bf16.mxu0 0
    %818 = vmatpush1.bf16.msra.mxu0 0
    %819 = vmatprep.subr.bf16.mxu0 0
    %820 = vmatpush1.bf16.msra.mxu0 0
    %821 = vmatprep.subr.bf16.mxu0 0
    %822 = vmatpush1.bf16.msra.mxu0 0
    %823 = vmatprep.subr.bf16.mxu0 0
    %824 = vmatpush1.bf16.msra.mxu0 0
    %825 = vmatprep.subr.bf16.mxu0 0
    %826 = vmatpush1.bf16.msra.mxu0 0
    %827 = vmatprep.subr.bf16.mxu0 0
    %828 = vmatpush1.bf16.msra.mxu0 0
    %829 = vmatprep.subr.bf16.mxu0 0
    %830 = vmatpush1.bf16.msra.mxu0 0
    %831 = vmatprep.mubr.bf16.mxu0 0
    %832 = vmatmul.mubr.bf16.gmra.mrb[0].mxu0 %v794
    %v833 = vpop.f32.mrb[0].mxu0
    %v834 = vadd.f32 0.0, %v833
    %v835 = vpop.f32.mrb[0].mxu0
    %v836 = vpop.f32.mrb[0].mxu0
    %v837 = vpop.f32.mrb[0].mxu0
    %838 = vdwg.mxu0
    %v839 = vpack.c.bf16 %v455, %v455
    %v840 = vpack.c.bf16 %v541, %v541
    %v841 = vpack.c.bf16 %v627, %v627
    %842 = vmatprep.subr.bf16.mxu0 0
    %843 = vmatpush1.bf16.xpose.msra.mxu0 %v840
    %844 = vmatprep.subr.bf16.mxu0 0
    %845 = vmatpush1.bf16.xpose.msra.mxu0 0
    %846 = vmatprep.subr.bf16.mxu0 0
    %847 = vmatpush1.bf16.xpose.msra.mxu0 0
    %848 = vmatprep.subr.bf16.mxu0 0
    %849 = vmatpush1.bf16.xpose.msra.mxu0 0
    %850 = vmatprep.subr.bf16.mxu0 0
    %851 = vmatpush1.bf16.xpose.msra.mxu0 0
    %852 = vmatprep.subr.bf16.mxu0 0
    %853 = vmatpush1.bf16.xpose.msra.mxu0 0
    %854 = vmatprep.subr.bf16.mxu0 0
    %855 = vmatpush1.bf16.xpose.msra.mxu0 0
    %856 = vmatprep.subr.bf16.mxu0 0
    %857 = vmatpush1.bf16.xpose.msra.mxu0 0
    %858 = vmatprep.subr.bf16.mxu0 0
    %859 = vmatpush1.bf16.xpose.msra.mxu0 0
    %860 = vmatprep.subr.bf16.mxu0 0
    %861 = vmatpush1.bf16.xpose.msra.mxu0 0
    %862 = vmatprep.subr.bf16.mxu0 0
    %863 = vmatpush1.bf16.xpose.msra.mxu0 0
    %864 = vmatprep.subr.bf16.mxu0 0
    %865 = vmatpush1.bf16.xpose.msra.mxu0 0
    %866 = vmatprep.subr.bf16.mxu0 0
    %867 = vmatpush1.bf16.xpose.msra.mxu0 0
    %868 = vmatprep.subr.bf16.mxu0 0
    %869 = vmatpush1.bf16.xpose.msra.mxu0 0
    %870 = vmatprep.subr.bf16.mxu0 0
    %871 = vmatpush1.bf16.xpose.msra.mxu0 0
    %872 = vmatprep.subr.bf16.mxu0 0
    %873 = vmatpush1.bf16.xpose.msra.mxu0 0
    %874 = vmatprep.mubr.bf16.mxu0 0
    %875 = vmatmul.mubr.bf16.gmra.mrb[0].mxu0 %v839
    %v876 = vpop.f32.mrb[0].mxu0
    %v877 = vadd.f32 0.0, %v876
    %v878 = vpop.f32.mrb[0].mxu0
    %v879 = vpop.f32.mrb[0].mxu0
    %v880 = vpop.f32.mrb[0].mxu0
    %881 = vdwg.mxu0
    %v882 = vsel %vm678, %v877, -inf
    %883 = vmax.xlane.f32.xlu0 %v882
    %v884 = vpop.xlane.xlu0 %883
    %v885 = vsub.f32 %v877, %v884
    %v886 = vmul.f32 %v885, 1.442695
    %v887 = vpow.pop %v886
    %v888 = vsel %vm678, %v887, 0.0
    %889 = vadd.xlane.f32.xlu0 %v888
    %v890 = vpop.xlane.xlu0 %889
    %v891 = vrcp.pop %v890
    %v892 = vmul.f32 %v887, %v891
    %v893 = vpack.c.bf16 %v892, %v892
    %v895 = vsel %vm678, %v893, 0
    %v898 = vsel %vm694, %v841, 0
    %900 = vmatprep.subr.bf16.mxu0 0
    %901 = vmatpush1.bf16.msra.mxu0 %v898
    %902 = vmatprep.subr.bf16.mxu0 0
    %903 = vmatpush1.bf16.msra.mxu0 0
    %904 = vmatprep.subr.bf16.mxu0 0
    %905 = vmatpush1.bf16.msra.mxu0 0
    %906 = vmatprep.subr.bf16.mxu0 0
    %907 = vmatpush1.bf16.msra.mxu0 0
    %908 = vmatprep.subr.bf16.mxu0 0
    %909 = vmatpush1.bf16.msra.mxu0 0
    %910 = vmatprep.subr.bf16.mxu0 0
    %911 = vmatpush1.bf16.msra.mxu0 0
    %912 = vmatprep.subr.bf16.mxu0 0
    %913 = vmatpush1.bf16.msra.mxu0 0
    %914 = vmatprep.subr.bf16.mxu0 0
    %915 = vmatpush1.bf16.msra.mxu0 0
    %916 = vmatprep.subr.bf16.mxu0 0
    %917 = vmatpush1.bf16.msra.mxu0 0
    %918 = vmatprep.subr.bf16.mxu0 0
    %919 = vmatpush1.bf16.msra.mxu0 0
    %920 = vmatprep.subr.bf16.mxu0 0
    %921 = vmatpush1.bf16.msra.mxu0 0
    %922 = vmatprep.subr.bf16.mxu0 0
    %923 = vmatpush1.bf16.msra.mxu0 0
    %924 = vmatprep.subr.bf16.mxu0 0
    %925 = vmatpush1.bf16.msra.mxu0 0
    %926 = vmatprep.subr.bf16.mxu0 0
    %927 = vmatpush1.bf16.msra.mxu0 0
    %928 = vmatprep.subr.bf16.mxu0 0
    %929 = vmatpush1.bf16.msra.mxu0 0
    %930 = vmatprep.subr.bf16.mxu0 0
    %931 = vmatpush1.bf16.msra.mxu0 0
    %932 = vmatprep.mubr.bf16.mxu0 0
    %933 = vmatmul.mubr.bf16.gmra.mrb[0].mxu0 %v895
    %v934 = vpop.f32.mrb[0].mxu0
    %v935 = vadd.f32 0.0, %v934
    %v936 = vpop.f32.mrb[0].mxu0
    %v937 = vpop.f32.mrb[0].mxu0
    %v938 = vpop.f32.mrb[0].mxu0
    %939 = vdwg.mxu0
    %v940 = vpack.c.bf16 %v457, %v457
    %v941 = vpack.c.bf16 %v543, %v543
    %v942 = vpack.c.bf16 %v629, %v629
    %943 = vmatprep.subr.bf16.mxu0 0
    %944 = vmatpush1.bf16.xpose.msra.mxu0 %v941
    %945 = vmatprep.subr.bf16.mxu0 0
    %946 = vmatpush1.bf16.xpose.msra.mxu0 0
    %947 = vmatprep.subr.bf16.mxu0 0
    %948 = vmatpush1.bf16.xpose.msra.mxu0 0
    %949 = vmatprep.subr.bf16.mxu0 0
    %950 = vmatpush1.bf16.xpose.msra.mxu0 0
    %951 = vmatprep.subr.bf16.mxu0 0
    %952 = vmatpush1.bf16.xpose.msra.mxu0 0
    %953 = vmatprep.subr.bf16.mxu0 0
    %954 = vmatpush1.bf16.xpose.msra.mxu0 0
    %955 = vmatprep.subr.bf16.mxu0 0
    %956 = vmatpush1.bf16.xpose.msra.mxu0 0
    %957 = vmatprep.subr.bf16.mxu0 0
    %958 = vmatpush1.bf16.xpose.msra.mxu0 0
    %959 = vmatprep.subr.bf16.mxu0 0
    %960 = vmatpush1.bf16.xpose.msra.mxu0 0
    %961 = vmatprep.subr.bf16.mxu0 0
    %962 = vmatpush1.bf16.xpose.msra.mxu0 0
    %963 = vmatprep.subr.bf16.mxu0 0
    %964 = vmatpush1.bf16.xpose.msra.mxu0 0
    %965 = vmatprep.subr.bf16.mxu0 0
    %966 = vmatpush1.bf16.xpose.msra.mxu0 0
    %967 = vmatprep.subr.bf16.mxu0 0
    %968 = vmatpush1.bf16.xpose.msra.mxu0 0
    %969 = vmatprep.subr.bf16.mxu0 0
    %970 = vmatpush1.bf16.xpose.msra.mxu0 0
    %971 = vmatprep.subr.bf16.mxu0 0
    %972 = vmatpush1.bf16.xpose.msra.mxu0 0
    %973 = vmatprep.subr.bf16.mxu0 0
    %974 = vmatpush1.bf16.xpose.msra.mxu0 0
    %975 = vmatprep.mubr.bf16.mxu0 0
    %976 = vmatmul.mubr.bf16.gmra.mrb[0].mxu0 %v940
    %v977 = vpop.f32.mrb[0].mxu0
    %v978 = vadd.f32 0.0, %v977
    %v979 = vpop.f32.mrb[0].mxu0
    %v980 = vpop.f32.mrb[0].mxu0
    %v981 = vpop.f32.mrb[0].mxu0
    %982 = vdwg.mxu0
    %v983 = vsel %vm678, %v978, -inf
    %984 = vmax.xlane.f32.xlu0 %v983
    %v985 = vpop.xlane.xlu0 %984
    %v986 = vsub.f32 %v978, %v985
    %v987 = vmul.f32 %v986, 1.442695
    %v988 = vpow.pop %v987
    %v989 = vsel %vm678, %v988, 0.0
    %990 = vadd.xlane.f32.xlu0 %v989
    %v991 = vpop.xlane.xlu0 %990
    %v992 = vrcp.pop %v991
    %v993 = vmul.f32 %v988, %v992
    %v994 = vpack.c.bf16 %v993, %v993
    %v996 = vsel %vm678, %v994, 0
    %v999 = vsel %vm694, %v942, 0
    %1001 = vmatprep.subr.bf16.mxu0 0
    %1002 = vmatpush1.bf16.msra.mxu0 %v999
    %1003 = vmatprep.subr.bf16.mxu0 0
    %1004 = vmatpush1.bf16.msra.mxu0 0
    %1005 = vmatprep.subr.bf16.mxu0 0
    %1006 = vmatpush1.bf16.msra.mxu0 0
    %1007 = vmatprep.subr.bf16.mxu0 0
    %1008 = vmatpush1.bf16.msra.mxu0 0
    %1009 = vmatprep.subr.bf16.mxu0 0
    %1010 = vmatpush1.bf16.msra.mxu0 0
    %1011 = vmatprep.subr.bf16.mxu0 0
    %1012 = vmatpush1.bf16.msra.mxu0 0
    %1013 = vmatprep.subr.bf16.mxu0 0
    %1014 = vmatpush1.bf16.msra.mxu0 0
    %1015 = vmatprep.subr.bf16.mxu0 0
    %1016 = vmatpush1.bf16.msra.mxu0 0
    %1017 = vmatprep.subr.bf16.mxu0 0
    %1018 = vmatpush1.bf16.msra.mxu0 0
    %1019 = vmatprep.subr.bf16.mxu0 0
    %1020 = vmatpush1.bf16.msra.mxu0 0
    %1021 = vmatprep.subr.bf16.mxu0 0
    %1022 = vmatpush1.bf16.msra.mxu0 0
    %1023 = vmatprep.subr.bf16.mxu0 0
    %1024 = vmatpush1.bf16.msra.mxu0 0
    %1025 = vmatprep.subr.bf16.mxu0 0
    %1026 = vmatpush1.bf16.msra.mxu0 0
    %1027 = vmatprep.subr.bf16.mxu0 0
    %1028 = vmatpush1.bf16.msra.mxu0 0
    %1029 = vmatprep.subr.bf16.mxu0 0
    %1030 = vmatpush1.bf16.msra.mxu0 0
    %1031 = vmatprep.subr.bf16.mxu0 0
    %1032 = vmatpush1.bf16.msra.mxu0 0
    %1033 = vmatprep.mubr.bf16.mxu0 0
    %1034 = vmatmul.mubr.bf16.gmra.mrb[0].mxu0 %v996
    %v1035 = vpop.f32.mrb[0].mxu0
    %v1036 = vadd.f32 0.0, %v1035
    %v1037 = vpop.f32.mrb[0].mxu0
    %v1038 = vpop.f32.mrb[0].mxu0
    %v1039 = vpop.f32.mrb[0].mxu0
    %1040 = vdwg.mxu0
    %v1041 = vpack.c.bf16 %v733, %v733
    %v1042 = vpack.c.bf16 %v834, %v834
    %v1043 = vpack.c.bf16 %v935, %v935
    %v1044 = vpack.c.bf16 %v1036, %v1036
    %v1109 = vunpack.c.l.b16 %v63
    %v1110 = vunpack.c.l.b16 %v64
    %v1111 = vunpack.c.l.b16 %v65
    %v1112 = vunpack.c.l.b16 %v66
    %v1113 = vunpack.c.l.b16 %v67
    %v1114 = vunpack.c.l.b16 %v68
    %v1115 = vunpack.c.l.b16 %v69
    %v1116 = vunpack.c.l.b16 %v70
    %v1117 = vunpack.c.l.b16 %v71
    %v1118 = vunpack.c.l.b16 %v72
    %v1119 = vunpack.c.l.b16 %v73
    %v1120 = vunpack.c.l.b16 %v74
    %v1121 = vunpack.c.l.b16 %v75
    %v1122 = vunpack.c.l.b16 %v76
    %v1123 = vunpack.c.l.b16 %v77
    %v1124 = vunpack.c.l.b16 %v78
    %v1125 = vunpack.c.l.b16 %v79
    %v1126 = vunpack.c.l.b16 %v80
    %v1127 = vunpack.c.l.b16 %v81
    %v1128 = vunpack.c.l.b16 %v82
    %v1129 = vunpack.c.l.b16 %v83
    %v1130 = vunpack.c.l.b16 %v84
    %v1131 = vunpack.c.l.b16 %v85
    %v1132 = vunpack.c.l.b16 %v86
    %v1133 = vunpack.c.l.b16 %v87
    %v1134 = vunpack.c.l.b16 %v88
    %v1135 = vunpack.c.l.b16 %v89
    %v1136 = vunpack.c.l.b16 %v90
    %v1137 = vunpack.c.l.b16 %v91
    %v1138 = vunpack.c.l.b16 %v92
    %v1139 = vunpack.c.l.b16 %v93
    %v1140 = vunpack.c.l.b16 %v94
    %v1141 = vunpack.c.l.b16 %v95
    %v1142 = vunpack.c.l.b16 %v96
    %v1143 = vunpack.c.l.b16 %v97
    %v1144 = vunpack.c.l.b16 %v98
    %v1145 = vunpack.c.l.b16 %v99
    %v1146 = vunpack.c.l.b16 %v100
    %v1147 = vunpack.c.l.b16 %v101
    %v1148 = vunpack.c.l.b16 %v102
    %v1149 = vunpack.c.l.b16 %v103
    %v1150 = vunpack.c.l.b16 %v104
    %v1151 = vunpack.c.l.b16 %v105
    %v1152 = vunpack.c.l.b16 %v106
    %v1153 = vunpack.c.l.b16 %v107
    %v1154 = vunpack.c.l.b16 %v108
    %v1155 = vunpack.c.l.b16 %v109
    %v1156 = vunpack.c.l.b16 %v110
    %v1157 = vunpack.c.l.b16 %v111
    %v1158 = vunpack.c.l.b16 %v112
    %v1159 = vunpack.c.l.b16 %v113
    %v1160 = vunpack.c.l.b16 %v114
    %v1161 = vunpack.c.l.b16 %v115
    %v1162 = vunpack.c.l.b16 %v116
    %v1163 = vunpack.c.l.b16 %v117
    %v1164 = vunpack.c.l.b16 %v118
    %v1165 = vunpack.c.l.b16 %v119
    %v1166 = vunpack.c.l.b16 %v120
    %v1167 = vunpack.c.l.b16 %v121
    %v1168 = vunpack.c.l.b16 %v122
    %v1169 = vunpack.c.l.b16 %v123
    %v1170 = vunpack.c.l.b16 %v124
    %v1171 = vunpack.c.l.b16 %v125
    %v1172 = vunpack.c.l.b16 %v126
    %v1173 = vpack.c.b16 %v1110, %v1109
    %v1174 = vpack.c.b16 %v1112, %v1111
    %v1175 = vpack.c.b16 %v1114, %v1113
    %v1176 = vpack.c.b16 %v1116, %v1115
    %v1177 = vpack.c.b16 %v1118, %v1117
    %v1178 = vpack.c.b16 %v1120, %v1119
    %v1179 = vpack.c.b16 %v1122, %v1121
    %v1180 = vpack.c.b16 %v1124, %v1123
    %v1181 = vpack.c.b16 %v1126, %v1125
    %v1182 = vpack.c.b16 %v1128, %v1127
    %v1183 = vpack.c.b16 %v1130, %v1129
    %v1184 = vpack.c.b16 %v1132, %v1131
    %v1185 = vpack.c.b16 %v1134, %v1133
    %v1186 = vpack.c.b16 %v1136, %v1135
    %v1187 = vpack.c.b16 %v1138, %v1137
    %v1188 = vpack.c.b16 %v1140, %v1139
    %v1189 = vpack.c.b16 %v1142, %v1141
    %v1190 = vpack.c.b16 %v1144, %v1143
    %v1191 = vpack.c.b16 %v1146, %v1145
    %v1192 = vpack.c.b16 %v1148, %v1147
    %v1193 = vpack.c.b16 %v1150, %v1149
    %v1194 = vpack.c.b16 %v1152, %v1151
    %v1195 = vpack.c.b16 %v1154, %v1153
    %v1196 = vpack.c.b16 %v1156, %v1155
    %v1197 = vpack.c.b16 %v1158, %v1157
    %v1198 = vpack.c.b16 %v1160, %v1159
    %v1199 = vpack.c.b16 %v1162, %v1161
    %v1200 = vpack.c.b16 %v1164, %v1163
    %v1201 = vpack.c.b16 %v1166, %v1165
    %v1202 = vpack.c.b16 %v1168, %v1167
    %v1203 = vpack.c.b16 %v1170, %v1169
    %v1204 = vpack.c.b16 %v1172, %v1171
    %1237 = vmatprep.subr.bf16.mxu0 0
    %1238 = vmatpush1.bf16.msra.mxu0 %v1173
    %1239 = vmatprep.subr.bf16.mxu0 0
    %1240 = vmatpush1.bf16.msra.mxu0 %v1174
    %1241 = vmatprep.subr.bf16.mxu0 0
    %1242 = vmatpush1.bf16.msra.mxu0 %v1175
    %1243 = vmatprep.subr.bf16.mxu0 0
    %1244 = vmatpush1.bf16.msra.mxu0 %v1176
    %1245 = vmatprep.subr.bf16.mxu0 0
    %1246 = vmatpush1.bf16.msra.mxu0 %v1177
    %1247 = vmatprep.subr.bf16.mxu0 0
    %1248 = vmatpush1.bf16.msra.mxu0 %v1178
    %1249 = vmatprep.subr.bf16.mxu0 0
    %1250 = vmatpush1.bf16.msra.mxu0 %v1179
    %1251 = vmatprep.subr.bf16.mxu0 0
    %1252 = vmatpush1.bf16.msra.mxu0 %v1180
    %1253 = vmatprep.subr.bf16.mxu0 0
    %1254 = vmatpush1.bf16.msra.mxu0 %v1181
    %1255 = vmatprep.subr.bf16.mxu0 0
    %1256 = vmatpush1.bf16.msra.mxu0 %v1182
    %1257 = vmatprep.subr.bf16.mxu0 0
    %1258 = vmatpush1.bf16.msra.mxu0 %v1183
    %1259 = vmatprep.subr.bf16.mxu0 0
    %1260 = vmatpush1.bf16.msra.mxu0 %v1184
    %1261 = vmatprep.subr.bf16.mxu0 0
    %1262 = vmatpush1.bf16.msra.mxu0 %v1185
    %1263 = vmatprep.subr.bf16.mxu0 0
    %1264 = vmatpush1.bf16.msra.mxu0 %v1186
    %1265 = vmatprep.subr.bf16.mxu0 0
    %1266 = vmatpush1.bf16.msra.mxu0 %v1187
    %1267 = vmatprep.subr.bf16.mxu0 0
    %1268 = vmatpush1.bf16.msra.mxu0 %v1188
    %1269 = vmatprep.mubr.bf16.mxu0 %v1042
    %1270 = vmatmul.mubr.bf16.gmra.mrb[0].mxu0 %v1041
    %v1271 = vpop.f32.mrb[0].mxu0
    %v1272 = vadd.f32 0.0, %v1271
    %v1273 = vpop.f32.mrb[0].mxu0
    %v1274 = vpop.f32.mrb[0].mxu0
    %v1275 = vpop.f32.mrb[0].mxu0
    %1276 = vdwg.mxu0
    %1277 = vmatprep.subr.bf16.mxu0 0
    %1278 = vmatpush1.bf16.msra.mxu0 %v1189
    %1279 = vmatprep.subr.bf16.mxu0 0
    %1280 = vmatpush1.bf16.msra.mxu0 %v1190
    %1281 = vmatprep.subr.bf16.mxu0 0
    %1282 = vmatpush1.bf16.msra.mxu0 %v1191
    %1283 = vmatprep.subr.bf16.mxu0 0
    %1284 = vmatpush1.bf16.msra.mxu0 %v1192
    %1285 = vmatprep.subr.bf16.mxu0 0
    %1286 = vmatpush1.bf16.msra.mxu0 %v1193
    %1287 = vmatprep.subr.bf16.mxu0 0
    %1288 = vmatpush1.bf16.msra.mxu0 %v1194
    %1289 = vmatprep.subr.bf16.mxu0 0
    %1290 = vmatpush1.bf16.msra.mxu0 %v1195
    %1291 = vmatprep.subr.bf16.mxu0 0
    %1292 = vmatpush1.bf16.msra.mxu0 %v1196
    %1293 = vmatprep.subr.bf16.mxu0 0
    %1294 = vmatpush1.bf16.msra.mxu0 %v1197
    %1295 = vmatprep.subr.bf16.mxu0 0
    %1296 = vmatpush1.bf16.msra.mxu0 %v1198
    %1297 = vmatprep.subr.bf16.mxu0 0
    %1298 = vmatpush1.bf16.msra.mxu0 %v1199
    %1299 = vmatprep.subr.bf16.mxu0 0
    %1300 = vmatpush1.bf16.msra.mxu0 %v1200
    %1301 = vmatprep.subr.bf16.mxu0 0
    %1302 = vmatpush1.bf16.msra.mxu0 %v1201
    %1303 = vmatprep.subr.bf16.mxu0 0
    %1304 = vmatpush1.bf16.msra.mxu0 %v1202
    %1305 = vmatprep.subr.bf16.mxu0 0
    %1306 = vmatpush1.bf16.msra.mxu0 %v1203
    %1307 = vmatprep.subr.bf16.mxu0 0
    %1308 = vmatpush1.bf16.msra.mxu0 %v1204
    %1309 = vmatprep.mubr.bf16.mxu0 %v1044
    %1310 = vmatmul.mubr.bf16.gmra.mrb[0].mxu0 %v1043
    %v1311 = vpop.f32.mrb[0].mxu0
    %v1312 = vadd.f32 %v1272, %v1311
    %v1313 = vpop.f32.mrb[0].mxu0
    %v1314 = vpop.f32.mrb[0].mxu0
    %v1315 = vpop.f32.mrb[0].mxu0
    %1316 = vdwg.mxu0
    %v1317 = vadd.f32 %v19, %v1312
    %v1318 = vadd.f32 %v1317, %v23
    %v1319 = vpack.c.bf16 %v416, %v416
    %v1320 = vpack.c.bf16 %v502, %v502
    %v1321 = vpack.c.bf16 %v588, %v588
    %1322 = vmatprep.subr.bf16.mxu0 0
    %1323 = vmatpush1.bf16.xpose.msra.mxu0 %v1320
    %1324 = vmatprep.subr.bf16.mxu0 0
    %1325 = vmatpush1.bf16.xpose.msra.mxu0 0
    %1326 = vmatprep.subr.bf16.mxu0 0
    %1327 = vmatpush1.bf16.xpose.msra.mxu0 0
    %1328 = vmatprep.subr.bf16.mxu0 0
    %1329 = vmatpush1.bf16.xpose.msra.mxu0 0
    %1330 = vmatprep.subr.bf16.mxu0 0
    %1331 = vmatpush1.bf16.xpose.msra.mxu0 0
    %1332 = vmatprep.subr.bf16.mxu0 0
    %1333 = vmatpush1.bf16.xpose.msra.mxu0 0
    %1334 = vmatprep.subr.bf16.mxu0 0
    %1335 = vmatpush1.bf16.xpose.msra.mxu0 0
    %1336 = vmatprep.subr.bf16.mxu0 0
    %1337 = vmatpush1.bf16.xpose.msra.mxu0 0
    %1338 = vmatprep.subr.bf16.mxu0 0
    %1339 = vmatpush1.bf16.xpose.msra.mxu0 0
    %1340 = vmatprep.subr.bf16.mxu0 0
    %1341 = vmatpush1.bf16.xpose.msra.mxu0 0
    %1342 = vmatprep.subr.bf16.mxu0 0
    %1343 = vmatpush1.bf16.xpose.msra.mxu0 0
    %1344 = vmatprep.subr.bf16.mxu0 0
    %1345 = vmatpush1.bf16.xpose.msra.mxu0 0
    %1346 = vmatprep.subr.bf16.mxu0 0
    %1347 = vmatpush1.bf16.xpose.msra.mxu0 0
    %1348 = vmatprep.subr.bf16.mxu0 0
    %1349 = vmatpush1.bf16.xpose.msra.mxu0 0
    %1350 = vmatprep.subr.bf16.mxu0 0
    %1351 = vmatpush1.bf16.xpose.msra.mxu0 0
    %1352 = vmatprep.subr.bf16.mxu0 0
    %1353 = vmatpush1.bf16.xpose.msra.mxu0 0
    %1354 = vmatprep.mubr.bf16.mxu0 0
    %1355 = vmatmul.mubr.bf16.gmra.mrb[0].mxu0 %v1319
    %v1356 = vpop.f32.mrb[0].mxu0
    %v1357 = vadd.f32 0.0, %v1356
    %v1358 = vpop.f32.mrb[0].mxu0
    %v1359 = vpop.f32.mrb[0].mxu0
    %v1360 = vpop.f32.mrb[0].mxu0
    %1361 = vdwg.mxu0
    %v1362 = vsel %vm678, %v1357, -inf
    %1363 = vmax.xlane.f32.xlu0 %v1362
    %v1364 = vpop.xlane.xlu0 %1363
    %v1365 = vsub.f32 %v1357, %v1364
    %v1366 = vmul.f32 %v1365, 1.442695
    %v1367 = vpow.pop %v1366
    %v1368 = vsel %vm678, %v1367, 0.0
    %1369 = vadd.xlane.f32.xlu0 %v1368
    %v1370 = vpop.xlane.xlu0 %1369
    %v1371 = vrcp.pop %v1370
    %v1372 = vmul.f32 %v1367, %v1371
    %v1373 = vpack.c.bf16 %v1372, %v1372
    %v1375 = vsel %vm678, %v1373, 0
    %v1378 = vsel %vm694, %v1321, 0
    %1380 = vmatprep.subr.bf16.mxu0 0
    %1381 = vmatpush1.bf16.msra.mxu0 %v1378
    %1382 = vmatprep.subr.bf16.mxu0 0
    %1383 = vmatpush1.bf16.msra.mxu0 0
    %1384 = vmatprep.subr.bf16.mxu0 0
    %1385 = vmatpush1.bf16.msra.mxu0 0
    %1386 = vmatprep.subr.bf16.mxu0 0
    %1387 = vmatpush1.bf16.msra.mxu0 0
    %1388 = vmatprep.subr.bf16.mxu0 0
    %1389 = vmatpush1.bf16.msra.mxu0 0
    %1390 = vmatprep.subr.bf16.mxu0 0
    %1391 = vmatpush1.bf16.msra.mxu0 0
    %1392 = vmatprep.subr.bf16.mxu0 0
    %1393 = vmatpush1.bf16.msra.mxu0 0
    %1394 = vmatprep.subr.bf16.mxu0 0
    %1395 = vmatpush1.bf16.msra.mxu0 0
    %1396 = vmatprep.subr.bf16.mxu0 0
    %1397 = vmatpush1.bf16.msra.mxu0 0
    %1398 = vmatprep.subr.bf16.mxu0 0
    %1399 = vmatpush1.bf16.msra.mxu0 0
    %1400 = vmatprep.subr.bf16.mxu0 0
    %1401 = vmatpush1.bf16.msra.mxu0 0
    %1402 = vmatprep.subr.bf16.mxu0 0
    %1403 = vmatpush1.bf16.msra.mxu0 0
    %1404 = vmatprep.subr.bf16.mxu0 0
    %1405 = vmatpush1.bf16.msra.mxu0 0
    %1406 = vmatprep.subr.bf16.mxu0 0
    %1407 = vmatpush1.bf16.msra.mxu0 0
    %1408 = vmatprep.subr.bf16.mxu0 0
    %1409 = vmatpush1.bf16.msra.mxu0 0
    %1410 = vmatprep.subr.bf16.mxu0 0
    %1411 = vmatpush1.bf16.msra.mxu0 0
    %1412 = vmatprep.mubr.bf16.mxu0 0
    %1413 = vmatmul.mubr.bf16.gmra.mrb[0].mxu0 %v1375
    %v1414 = vpop.f32.mrb[0].mxu0
    %v1415 = vadd.f32 0.0, %v1414
    %v1416 = vpop.f32.mrb[0].mxu0
    %v1417 = vpop.f32.mrb[0].mxu0
    %v1418 = vpop.f32.mrb[0].mxu0
    %1419 = vdwg.mxu0
    %v1420 = vpack.c.bf16 %v418, %v418
    %v1421 = vpack.c.bf16 %v504, %v504
    %v1422 = vpack.c.bf16 %v590, %v590
    %1423 = vmatprep.subr.bf16.mxu0 0
    %1424 = vmatpush1.bf16.xpose.msra.mxu0 %v1421
    %1425 = vmatprep.subr.bf16.mxu0 0
    %1426 = vmatpush1.bf16.xpose.msra.mxu0 0
    %1427 = vmatprep.subr.bf16.mxu0 0
    %1428 = vmatpush1.bf16.xpose.msra.mxu0 0
    %1429 = vmatprep.subr.bf16.mxu0 0
    %1430 = vmatpush1.bf16.xpose.msra.mxu0 0
    %1431 = vmatprep.subr.bf16.mxu0 0
    %1432 = vmatpush1.bf16.xpose.msra.mxu0 0
    %1433 = vmatprep.subr.bf16.mxu0 0
    %1434 = vmatpush1.bf16.xpose.msra.mxu0 0
    %1435 = vmatprep.subr.bf16.mxu0 0
    %1436 = vmatpush1.bf16.xpose.msra.mxu0 0
    %1437 = vmatprep.subr.bf16.mxu0 0
    %1438 = vmatpush1.bf16.xpose.msra.mxu0 0
    %1439 = vmatprep.subr.bf16.mxu0 0
    %1440 = vmatpush1.bf16.xpose.msra.mxu0 0
    %1441 = vmatprep.subr.bf16.mxu0 0
    %1442 = vmatpush1.bf16.xpose.msra.mxu0 0
    %1443 = vmatprep.subr.bf16.mxu0 0
    %1444 = vmatpush1.bf16.xpose.msra.mxu0 0
    %1445 = vmatprep.subr.bf16.mxu0 0
    %1446 = vmatpush1.bf16.xpose.msra.mxu0 0
    %1447 = vmatprep.subr.bf16.mxu0 0
    %1448 = vmatpush1.bf16.xpose.msra.mxu0 0
    %1449 = vmatprep.subr.bf16.mxu0 0
    %1450 = vmatpush1.bf16.xpose.msra.mxu0 0
    %1451 = vmatprep.subr.bf16.mxu0 0
    %1452 = vmatpush1.bf16.xpose.msra.mxu0 0
    %1453 = vmatprep.subr.bf16.mxu0 0
    %1454 = vmatpush1.bf16.xpose.msra.mxu0 0
    %1455 = vmatprep.mubr.bf16.mxu0 0
    %1456 = vmatmul.mubr.bf16.gmra.mrb[0].mxu0 %v1420
    %v1457 = vpop.f32.mrb[0].mxu0
    %v1458 = vadd.f32 0.0, %v1457
    %v1459 = vpop.f32.mrb[0].mxu0
    %v1460 = vpop.f32.mrb[0].mxu0
    %v1461 = vpop.f32.mrb[0].mxu0
    %1462 = vdwg.mxu0
    %v1463 = vsel %vm678, %v1458, -inf
    %1464 = vmax.xlane.f32.xlu0 %v1463
    %v1465 = vpop.xlane.xlu0 %1464
    %v1466 = vsub.f32 %v1458, %v1465
    %v1467 = vmul.f32 %v1466, 1.442695
    %v1468 = vpow.pop %v1467
    %v1469 = vsel %vm678, %v1468, 0.0
    %1470 = vadd.xlane.f32.xlu0 %v1469
    %v1471 = vpop.xlane.xlu0 %1470
    %v1472 = vrcp.pop %v1471
    %v1473 = vmul.f32 %v1468, %v1472
    %v1474 = vpack.c.bf16 %v1473, %v1473
    %v1476 = vsel %vm678, %v1474, 0
    %v1479 = vsel %vm694, %v1422, 0
    %1481 = vmatprep.subr.bf16.mxu0 0
    %1482 = vmatpush1.bf16.msra.mxu0 %v1479
    %1483 = vmatprep.subr.bf16.mxu0 0
    %1484 = vmatpush1.bf16.msra.mxu0 0
    %1485 = vmatprep.subr.bf16.mxu0 0
    %1486 = vmatpush1.bf16.msra.mxu0 0
    %1487 = vmatprep.subr.bf16.mxu0 0
    %1488 = vmatpush1.bf16.msra.mxu0 0
    %1489 = vmatprep.subr.bf16.mxu0 0
    %1490 = vmatpush1.bf16.msra.mxu0 0
    %1491 = vmatprep.subr.bf16.mxu0 0
    %1492 = vmatpush1.bf16.msra.mxu0 0
    %1493 = vmatprep.subr.bf16.mxu0 0
    %1494 = vmatpush1.bf16.msra.mxu0 0
    %1495 = vmatprep.subr.bf16.mxu0 0
    %1496 = vmatpush1.bf16.msra.mxu0 0
    %1497 = vmatprep.subr.bf16.mxu0 0
    %1498 = vmatpush1.bf16.msra.mxu0 0
    %1499 = vmatprep.subr.bf16.mxu0 0
    %1500 = vmatpush1.bf16.msra.mxu0 0
    %1501 = vmatprep.subr.bf16.mxu0 0
    %1502 = vmatpush1.bf16.msra.mxu0 0
    %1503 = vmatprep.subr.bf16.mxu0 0
    %1504 = vmatpush1.bf16.msra.mxu0 0
    %1505 = vmatprep.subr.bf16.mxu0 0
    %1506 = vmatpush1.bf16.msra.mxu0 0
    %1507 = vmatprep.subr.bf16.mxu0 0
    %1508 = vmatpush1.bf16.msra.mxu0 0
    %1509 = vmatprep.subr.bf16.mxu0 0
    %1510 = vmatpush1.bf16.msra.mxu0 0
    %1511 = vmatprep.subr.bf16.mxu0 0
    %1512 = vmatpush1.bf16.msra.mxu0 0
    %1513 = vmatprep.mubr.bf16.mxu0 0
    %1514 = vmatmul.mubr.bf16.gmra.mrb[0].mxu0 %v1476
    %v1515 = vpop.f32.mrb[0].mxu0
    %v1516 = vadd.f32 0.0, %v1515
    %v1517 = vpop.f32.mrb[0].mxu0
    %v1518 = vpop.f32.mrb[0].mxu0
    %v1519 = vpop.f32.mrb[0].mxu0
    %1520 = vdwg.mxu0
    %v1521 = vpack.c.bf16 %v459, %v459
    %v1522 = vpack.c.bf16 %v545, %v545
    %v1523 = vpack.c.bf16 %v631, %v631
    %1524 = vmatprep.subr.bf16.mxu0 0
    %1525 = vmatpush1.bf16.xpose.msra.mxu0 %v1522
    %1526 = vmatprep.subr.bf16.mxu0 0
    %1527 = vmatpush1.bf16.xpose.msra.mxu0 0
    %1528 = vmatprep.subr.bf16.mxu0 0
    %1529 = vmatpush1.bf16.xpose.msra.mxu0 0
    %1530 = vmatprep.subr.bf16.mxu0 0
    %1531 = vmatpush1.bf16.xpose.msra.mxu0 0
    %1532 = vmatprep.subr.bf16.mxu0 0
    %1533 = vmatpush1.bf16.xpose.msra.mxu0 0
    %1534 = vmatprep.subr.bf16.mxu0 0
    %1535 = vmatpush1.bf16.xpose.msra.mxu0 0
    %1536 = vmatprep.subr.bf16.mxu0 0
    %1537 = vmatpush1.bf16.xpose.msra.mxu0 0
    %1538 = vmatprep.subr.bf16.mxu0 0
    %1539 = vmatpush1.bf16.xpose.msra.mxu0 0
    %1540 = vmatprep.subr.bf16.mxu0 0
    %1541 = vmatpush1.bf16.xpose.msra.mxu0 0
    %1542 = vmatprep.subr.bf16.mxu0 0
    %1543 = vmatpush1.bf16.xpose.msra.mxu0 0
    %1544 = vmatprep.subr.bf16.mxu0 0
    %1545 = vmatpush1.bf16.xpose.msra.mxu0 0
    %1546 = vmatprep.subr.bf16.mxu0 0
    %1547 = vmatpush1.bf16.xpose.msra.mxu0 0
    %1548 = vmatprep.subr.bf16.mxu0 0
    %1549 = vmatpush1.bf16.xpose.msra.mxu0 0
    %1550 = vmatprep.subr.bf16.mxu0 0
    %1551 = vmatpush1.bf16.xpose.msra.mxu0 0
    %1552 = vmatprep.subr.bf16.mxu0 0
    %1553 = vmatpush1.bf16.xpose.msra.mxu0 0
    %1554 = vmatprep.subr.bf16.mxu0 0
    %1555 = vmatpush1.bf16.xpose.msra.mxu0 0
    %1556 = vmatprep.mubr.bf16.mxu0 0
    %1557 = vmatmul.mubr.bf16.gmra.mrb[0].mxu0 %v1521
    %v1558 = vpop.f32.mrb[0].mxu0
    %v1559 = vadd.f32 0.0, %v1558
    %v1560 = vpop.f32.mrb[0].mxu0
    %v1561 = vpop.f32.mrb[0].mxu0
    %v1562 = vpop.f32.mrb[0].mxu0
    %1563 = vdwg.mxu0
    %v1564 = vsel %vm678, %v1559, -inf
    %1565 = vmax.xlane.f32.xlu0 %v1564
    %v1566 = vpop.xlane.xlu0 %1565
    %v1567 = vsub.f32 %v1559, %v1566
    %v1568 = vmul.f32 %v1567, 1.442695
    %v1569 = vpow.pop %v1568
    %v1570 = vsel %vm678, %v1569, 0.0
    %1571 = vadd.xlane.f32.xlu0 %v1570
    %v1572 = vpop.xlane.xlu0 %1571
    %v1573 = vrcp.pop %v1572
    %v1574 = vmul.f32 %v1569, %v1573
    %v1575 = vpack.c.bf16 %v1574, %v1574
    %v1577 = vsel %vm678, %v1575, 0
    %v1580 = vsel %vm694, %v1523, 0
    %1582 = vmatprep.subr.bf16.mxu0 0
    %1583 = vmatpush1.bf16.msra.mxu0 %v1580
    %1584 = vmatprep.subr.bf16.mxu0 0
    %1585 = vmatpush1.bf16.msra.mxu0 0
    %1586 = vmatprep.subr.bf16.mxu0 0
    %1587 = vmatpush1.bf16.msra.mxu0 0
    %1588 = vmatprep.subr.bf16.mxu0 0
    %1589 = vmatpush1.bf16.msra.mxu0 0
    %1590 = vmatprep.subr.bf16.mxu0 0
    %1591 = vmatpush1.bf16.msra.mxu0 0
    %1592 = vmatprep.subr.bf16.mxu0 0
    %1593 = vmatpush1.bf16.msra.mxu0 0
    %1594 = vmatprep.subr.bf16.mxu0 0
    %1595 = vmatpush1.bf16.msra.mxu0 0
    %1596 = vmatprep.subr.bf16.mxu0 0
    %1597 = vmatpush1.bf16.msra.mxu0 0
    %1598 = vmatprep.subr.bf16.mxu0 0
    %1599 = vmatpush1.bf16.msra.mxu0 0
    %1600 = vmatprep.subr.bf16.mxu0 0
    %1601 = vmatpush1.bf16.msra.mxu0 0
    %1602 = vmatprep.subr.bf16.mxu0 0
    %1603 = vmatpush1.bf16.msra.mxu0 0
    %1604 = vmatprep.subr.bf16.mxu0 0
    %1605 = vmatpush1.bf16.msra.mxu0 0
    %1606 = vmatprep.subr.bf16.mxu0 0
    %1607 = vmatpush1.bf16.msra.mxu0 0
    %1608 = vmatprep.subr.bf16.mxu0 0
    %1609 = vmatpush1.bf16.msra.mxu0 0
    %1610 = vmatprep.subr.bf16.mxu0 0
    %1611 = vmatpush1.bf16.msra.mxu0 0
    %1612 = vmatprep.subr.bf16.mxu0 0
    %1613 = vmatpush1.bf16.msra.mxu0 0
    %1614 = vmatprep.mubr.bf16.mxu0 0
    %1615 = vmatmul.mubr.bf16.gmra.mrb[0].mxu0 %v1577
    %v1616 = vpop.f32.mrb[0].mxu0
    %v1617 = vadd.f32 0.0, %v1616
    %v1618 = vpop.f32.mrb[0].mxu0
    %v1619 = vpop.f32.mrb[0].mxu0
    %v1620 = vpop.f32.mrb[0].mxu0
    %1621 = vdwg.mxu0
    %v1622 = vpack.c.bf16 %v461, %v461
    %v1623 = vpack.c.bf16 %v547, %v547
    %v1624 = vpack.c.bf16 %v633, %v633
    %1625 = vmatprep.subr.bf16.mxu0 0
    %1626 = vmatpush1.bf16.xpose.msra.mxu0 %v1623
    %1627 = vmatprep.subr.bf16.mxu0 0
    %1628 = vmatpush1.bf16.xpose.msra.mxu0 0
    %1629 = vmatprep.subr.bf16.mxu0 0
    %1630 = vmatpush1.bf16.xpose.msra.mxu0 0
    %1631 = vmatprep.subr.bf16.mxu0 0
    %1632 = vmatpush1.bf16.xpose.msra.mxu0 0
    %1633 = vmatprep.subr.bf16.mxu0 0
    %1634 = vmatpush1.bf16.xpose.msra.mxu0 0
    %1635 = vmatprep.subr.bf16.mxu0 0
    %1636 = vmatpush1.bf16.xpose.msra.mxu0 0
    %1637 = vmatprep.subr.bf16.mxu0 0
    %1638 = vmatpush1.bf16.xpose.msra.mxu0 0
    %1639 = vmatprep.subr.bf16.mxu0 0
    %1640 = vmatpush1.bf16.xpose.msra.mxu0 0
    %1641 = vmatprep.subr.bf16.mxu0 0
    %1642 = vmatpush1.bf16.xpose.msra.mxu0 0
    %1643 = vmatprep.subr.bf16.mxu0 0
    %1644 = vmatpush1.bf16.xpose.msra.mxu0 0
    %1645 = vmatprep.subr.bf16.mxu0 0
    %1646 = vmatpush1.bf16.xpose.msra.mxu0 0
    %1647 = vmatprep.subr.bf16.mxu0 0
    %1648 = vmatpush1.bf16.xpose.msra.mxu0 0
    %1649 = vmatprep.subr.bf16.mxu0 0
    %1650 = vmatpush1.bf16.xpose.msra.mxu0 0
    %1651 = vmatprep.subr.bf16.mxu0 0
    %1652 = vmatpush1.bf16.xpose.msra.mxu0 0
    %1653 = vmatprep.subr.bf16.mxu0 0
    %1654 = vmatpush1.bf16.xpose.msra.mxu0 0
    %1655 = vmatprep.subr.bf16.mxu0 0
    %1656 = vmatpush1.bf16.xpose.msra.mxu0 0
    %1657 = vmatprep.mubr.bf16.mxu0 0
    %1658 = vmatmul.mubr.bf16.gmra.mrb[0].mxu0 %v1622
    %v1659 = vpop.f32.mrb[0].mxu0
    %v1660 = vadd.f32 0.0, %v1659
    %v1661 = vpop.f32.mrb[0].mxu0
    %v1662 = vpop.f32.mrb[0].mxu0
    %v1663 = vpop.f32.mrb[0].mxu0
    %1664 = vdwg.mxu0
    %v1665 = vsel %vm678, %v1660, -inf
    %1666 = vmax.xlane.f32.xlu0 %v1665
    %v1667 = vpop.xlane.xlu0 %1666
    %v1668 = vsub.f32 %v1660, %v1667
    %v1669 = vmul.f32 %v1668, 1.442695
    %v1670 = vpow.pop %v1669
    %v1671 = vsel %vm678, %v1670, 0.0
    %1672 = vadd.xlane.f32.xlu0 %v1671
    %v1673 = vpop.xlane.xlu0 %1672
    %v1674 = vrcp.pop %v1673
    %v1675 = vmul.f32 %v1670, %v1674
    %v1676 = vpack.c.bf16 %v1675, %v1675
    %v1678 = vsel %vm678, %v1676, 0
    %v1681 = vsel %vm694, %v1624, 0
    %1683 = vmatprep.subr.bf16.mxu0 0
    %1684 = vmatpush1.bf16.msra.mxu0 %v1681
    %1685 = vmatprep.subr.bf16.mxu0 0
    %1686 = vmatpush1.bf16.msra.mxu0 0
    %1687 = vmatprep.subr.bf16.mxu0 0
    %1688 = vmatpush1.bf16.msra.mxu0 0
    %1689 = vmatprep.subr.bf16.mxu0 0
    %1690 = vmatpush1.bf16.msra.mxu0 0
    %1691 = vmatprep.subr.bf16.mxu0 0
    %1692 = vmatpush1.bf16.msra.mxu0 0
    %1693 = vmatprep.subr.bf16.mxu0 0
    %1694 = vmatpush1.bf16.msra.mxu0 0
    %1695 = vmatprep.subr.bf16.mxu0 0
    %1696 = vmatpush1.bf16.msra.mxu0 0
    %1697 = vmatprep.subr.bf16.mxu0 0
    %1698 = vmatpush1.bf16.msra.mxu0 0
    %1699 = vmatprep.subr.bf16.mxu0 0
    %1700 = vmatpush1.bf16.msra.mxu0 0
    %1701 = vmatprep.subr.bf16.mxu0 0
    %1702 = vmatpush1.bf16.msra.mxu0 0
    %1703 = vmatprep.subr.bf16.mxu0 0
    %1704 = vmatpush1.bf16.msra.mxu0 0
    %1705 = vmatprep.subr.bf16.mxu0 0
    %1706 = vmatpush1.bf16.msra.mxu0 0
    %1707 = vmatprep.subr.bf16.mxu0 0
    %1708 = vmatpush1.bf16.msra.mxu0 0
    %1709 = vmatprep.subr.bf16.mxu0 0
    %1710 = vmatpush1.bf16.msra.mxu0 0
    %1711 = vmatprep.subr.bf16.mxu0 0
    %1712 = vmatpush1.bf16.msra.mxu0 0
    %1713 = vmatprep.subr.bf16.mxu0 0
    %1714 = vmatpush1.bf16.msra.mxu0 0
    %1715 = vmatprep.mubr.bf16.mxu0 0
    %1716 = vmatmul.mubr.bf16.gmra.mrb[0].mxu0 %v1678
    %v1717 = vpop.f32.mrb[0].mxu0
    %v1718 = vadd.f32 0.0, %v1717
    %v1719 = vpop.f32.mrb[0].mxu0
    %v1720 = vpop.f32.mrb[0].mxu0
    %v1721 = vpop.f32.mrb[0].mxu0
    %1722 = vdwg.mxu0
    %v1723 = vpack.c.bf16 %v1415, %v1415
    %v1724 = vpack.c.bf16 %v1516, %v1516
    %v1725 = vpack.c.bf16 %v1617, %v1617
    %v1726 = vpack.c.bf16 %v1718, %v1718
    %1727 = vmatprep.subr.bf16.mxu0 0
    %1728 = vmatpush1.bf16.msra.mxu0 %v1173
    %1729 = vmatprep.subr.bf16.mxu0 0
    %1730 = vmatpush1.bf16.msra.mxu0 %v1174
    %1731 = vmatprep.subr.bf16.mxu0 0
    %1732 = vmatpush1.bf16.msra.mxu0 %v1175
    %1733 = vmatprep.subr.bf16.mxu0 0
    %1734 = vmatpush1.bf16.msra.mxu0 %v1176
    %1735 = vmatprep.subr.bf16.mxu0 0
    %1736 = vmatpush1.bf16.msra.mxu0 %v1177
    %1737 = vmatprep.subr.bf16.mxu0 0
    %1738 = vmatpush1.bf16.msra.mxu0 %v1178
    %1739 = vmatprep.subr.bf16.mxu0 0
    %1740 = vmatpush1.bf16.msra.mxu0 %v1179
    %1741 = vmatprep.subr.bf16.mxu0 0
    %1742 = vmatpush1.bf16.msra.mxu0 %v1180
    %1743 = vmatprep.subr.bf16.mxu0 0
    %1744 = vmatpush1.bf16.msra.mxu0 %v1181
    %1745 = vmatprep.subr.bf16.mxu0 0
    %1746 = vmatpush1.bf16.msra.mxu0 %v1182
    %1747 = vmatprep.subr.bf16.mxu0 0
    %1748 = vmatpush1.bf16.msra.mxu0 %v1183
    %1749 = vmatprep.subr.bf16.mxu0 0
    %1750 = vmatpush1.bf16.msra.mxu0 %v1184
    %1751 = vmatprep.subr.bf16.mxu0 0
    %1752 = vmatpush1.bf16.msra.mxu0 %v1185
    %1753 = vmatprep.subr.bf16.mxu0 0
    %1754 = vmatpush1.bf16.msra.mxu0 %v1186
    %1755 = vmatprep.subr.bf16.mxu0 0
    %1756 = vmatpush1.bf16.msra.mxu0 %v1187
    %1757 = vmatprep.subr.bf16.mxu0 0
    %1758 = vmatpush1.bf16.msra.mxu0 %v1188
    %1759 = vmatprep.mubr.bf16.mxu0 %v1724
    %1760 = vmatmul.mubr.bf16.gmra.mrb[0].mxu0 %v1723
    %v1761 = vpop.f32.mrb[0].mxu0
    %v1762 = vadd.f32 0.0, %v1761
    %v1763 = vpop.f32.mrb[0].mxu0
    %v1764 = vpop.f32.mrb[0].mxu0
    %v1765 = vpop.f32.mrb[0].mxu0
    %1766 = vdwg.mxu0
    %1767 = vmatprep.subr.bf16.mxu0 0
    %1768 = vmatpush1.bf16.msra.mxu0 %v1189
    %1769 = vmatprep.subr.bf16.mxu0 0
    %1770 = vmatpush1.bf16.msra.mxu0 %v1190
    %1771 = vmatprep.subr.bf16.mxu0 0
    %1772 = vmatpush1.bf16.msra.mxu0 %v1191
    %1773 = vmatprep.subr.bf16.mxu0 0
    %1774 = vmatpush1.bf16.msra.mxu0 %v1192
    %1775 = vmatprep.subr.bf16.mxu0 0
    %1776 = vmatpush1.bf16.msra.mxu0 %v1193
    %1777 = vmatprep.subr.bf16.mxu0 0
    %1778 = vmatpush1.bf16.msra.mxu0 %v1194
    %1779 = vmatprep.subr.bf16.mxu0 0
    %1780 = vmatpush1.bf16.msra.mxu0 %v1195
    %1781 = vmatprep.subr.bf16.mxu0 0
    %1782 = vmatpush1.bf16.msra.mxu0 %v1196
    %1783 = vmatprep.subr.bf16.mxu0 0
    %1784 = vmatpush1.bf16.msra.mxu0 %v1197
    %1785 = vmatprep.subr.bf16.mxu0 0
    %1786 = vmatpush1.bf16.msra.mxu0 %v1198
    %1787 = vmatprep.subr.bf16.mxu0 0
    %1788 = vmatpush1.bf16.msra.mxu0 %v1199
    %1789 = vmatprep.subr.bf16.mxu0 0
    %1790 = vmatpush1.bf16.msra.mxu0 %v1200
    %1791 = vmatprep.subr.bf16.mxu0 0
    %1792 = vmatpush1.bf16.msra.mxu0 %v1201
    %1793 = vmatprep.subr.bf16.mxu0 0
    %1794 = vmatpush1.bf16.msra.mxu0 %v1202
    %1795 = vmatprep.subr.bf16.mxu0 0
    %1796 = vmatpush1.bf16.msra.mxu0 %v1203
    %1797 = vmatprep.subr.bf16.mxu0 0
    %1798 = vmatpush1.bf16.msra.mxu0 %v1204
    %1799 = vmatprep.mubr.bf16.mxu0 %v1726
    %1800 = vmatmul.mubr.bf16.gmra.mrb[0].mxu0 %v1725
    %v1801 = vpop.f32.mrb[0].mxu0
    %v1802 = vadd.f32 %v1762, %v1801
    %v1803 = vpop.f32.mrb[0].mxu0
    %v1804 = vpop.f32.mrb[0].mxu0
    %v1805 = vpop.f32.mrb[0].mxu0
    %1806 = vdwg.mxu0
    %v1807 = vadd.f32 %v20, %v1802
    %v1808 = vadd.f32 %v1807, %v23
    %v1809 = vsel %vm159, %v1318, 0.0
    %1810 = vadd.xlane.f32.xlu0 %v1809
    %v1811 = vpop.xlane.xlu0 %1810
    %v1812 = vsel %vm159, %v1808, 0.0
    %1813 = vadd.xlane.f32.xlu0 %v1812
    %v1814 = vpop.xlane.xlu0 %1813
    %v1815 = vmul.f32 %v1811, %v166
    %v1816 = vmul.f32 %v1814, %v166
    %v1817 = vsub.f32 %v1318, %v1815
    %v1818 = vsub.f32 %v1808, %v1816
    %v1819 = vmul.f32 %v1817, %v1817
    %v1820 = vmul.f32 %v1818, %v1818
    %v1821 = vsel %vm159, %v1819, 0.0
    %1822 = vadd.xlane.f32.xlu0 %v1821
    %v1823 = vpop.xlane.xlu0 %1822
    %v1824 = vsel %vm159, %v1820, 0.0
    %1825 = vadd.xlane.f32.xlu0 %v1824
    %v1826 = vpop.xlane.xlu0 %1825
    %v1827 = vmul.f32 %v1823, %v166
    %v1828 = vmul.f32 %v1826, %v166
    %v1829 = vadd.f32 %v1827, 1e-05
    %v1830 = vadd.f32 %v1828, 1e-05
    %v1831 = vrsqrt.pop %v1829
    %v1832 = vrsqrt.pop %v1830
    %v1833 = vmul.f32 %v1817, %v1831
    %v1834 = vmul.f32 %v1818, %v1832
    %v1835 = vmul.f32 %v1833, %v24
    %v1836 = vmul.f32 %v1834, %v24
    %v1837 = vadd.f32 %v1835, %v25
    %v1838 = vadd.f32 %v1836, %v25
    %v1839 = vpack.c.bf16 %v1838, %v1837
    %v1841 = vlaneseq
    %v1842 = vshrl.u32 %v1841, 7
    %v1843 = vsub.s32 0, %v1842
    %v1844 = vrot.slane %v27, %v1843
    %v1845 = vlaneseq
    %v1846 = vshrl.u32 %v1845, 7
    %v1847 = vsub.s32 1, %v1846
    %v1848 = vrot.slane %v27, %v1847
    %v1855 = vunpack.c.l.b16 %v59
    %v1856 = vunpack.c.h.b16 %v59
    %v1857 = vunpack.c.l.b16 %v60
    %v1858 = vunpack.c.h.b16 %v60
    %v1859 = vunpack.c.l.b16 %v61
    %v1860 = vunpack.c.h.b16 %v61
    %v1861 = vunpack.c.l.b16 %v62
    %v1862 = vunpack.c.h.b16 %v62
    %v1863 = vpack.c.b16 %v1857, %v1855
    %v1864 = vpack.c.b16 %v1858, %v1856
    %v1865 = vpack.c.b16 %v1861, %v1859
    %v1866 = vpack.c.b16 %v1862, %v1860
    %v1872 = vsel %vm159, %v1839, 0
    %1874 = vmatprep.subr.bf16.mxu0 %v1864
    %1875 = vmatpush1.bf16.msra.mxu0 %v1863
    %1876 = vmatprep.subr.bf16.mxu0 %v1866
    %1877 = vmatpush1.bf16.msra.mxu0 %v1865
    %1878 = vmatprep.subr.bf16.mxu0 0
    %1879 = vmatpush1.bf16.msra.mxu0 0
    %1880 = vmatprep.subr.bf16.mxu0 0
    %1881 = vmatpush1.bf16.msra.mxu0 0
    %1882 = vmatprep.subr.bf16.mxu0 0
    %1883 = vmatpush1.bf16.msra.mxu0 0
    %1884 = vmatprep.subr.bf16.mxu0 0
    %1885 = vmatpush1.bf16.msra.mxu0 0
    %1886 = vmatprep.subr.bf16.mxu0 0
    %1887 = vmatpush1.bf16.msra.mxu0 0
    %1888 = vmatprep.subr.bf16.mxu0 0
    %1889 = vmatpush1.bf16.msra.mxu0 0
    %1890 = vmatprep.subr.bf16.mxu0 0
    %1891 = vmatpush1.bf16.msra.mxu0 0
    %1892 = vmatprep.subr.bf16.mxu0 0
    %1893 = vmatpush1.bf16.msra.mxu0 0
    %1894 = vmatprep.subr.bf16.mxu0 0
    %1895 = vmatpush1.bf16.msra.mxu0 0
    %1896 = vmatprep.subr.bf16.mxu0 0
    %1897 = vmatpush1.bf16.msra.mxu0 0
    %1898 = vmatprep.subr.bf16.mxu0 0
    %1899 = vmatpush1.bf16.msra.mxu0 0
    %1900 = vmatprep.subr.bf16.mxu0 0
    %1901 = vmatpush1.bf16.msra.mxu0 0
    %1902 = vmatprep.subr.bf16.mxu0 0
    %1903 = vmatpush1.bf16.msra.mxu0 0
    %1904 = vmatprep.subr.bf16.mxu0 0
    %1905 = vmatpush1.bf16.msra.mxu0 0
    %1906 = vmatprep.mubr.bf16.mxu0 0
    %1907 = vmatmul.mubr.bf16.gmra.mrb[0].mxu0 %v1872
    %v1908 = vpop.f32.mrb[0].mxu0
    %v1909 = vadd.f32 %v1844, %v1908
    %v1910 = vpop.f32.mrb[0].mxu0
    %v1911 = vadd.f32 %v1848, %v1910
    %v1912 = vpop.f32.mrb[0].mxu0
    %v1913 = vadd.f32 %v1844, %v1912
    %v1914 = vpop.f32.mrb[0].mxu0
    %v1915 = vadd.f32 %v1848, %v1914
    %1916 = vdwg.mxu0
    %v1917 = vmul.f32 %v1909, 0.5
    %v1918 = vmul.f32 %v1911, 0.5
    %v1919 = vmul.f32 %v1913, 0.5
    %v1920 = vmul.f32 %v1915, 0.5
    %v1921 = vmul.f32 %v1909, 0.70710677
    %v1922 = vmul.f32 %v1911, 0.70710677
    %v1923 = vmul.f32 %v1913, 0.70710677
    %v1924 = vmul.f32 %v1915, 0.70710677
    %v1925 = verf.f32.pop %v1921
    %v1926 = verf.f32.pop %v1922
    %v1927 = verf.f32.pop %v1923
    %v1928 = verf.f32.pop %v1924
    %v1929 = vadd.f32 %v1925, 1.0
    %v1930 = vadd.f32 %v1926, 1.0
    %v1931 = vadd.f32 %v1927, 1.0
    %v1932 = vadd.f32 %v1928, 1.0
    %v1933 = vmul.f32 %v1917, %v1929
    %v1934 = vmul.f32 %v1918, %v1930
    %v1935 = vmul.f32 %v1919, %v1931
    %v1936 = vmul.f32 %v1920, %v1932
    %v1937 = vpack.c.bf16 %v1935, %v1933
    %v1938 = vpack.c.bf16 %v1936, %v1934
    %v1971 = vunpack.c.l.b16 %v127
    %v1972 = vunpack.c.l.b16 %v128
    %v1973 = vunpack.c.l.b16 %v129
    %v1974 = vunpack.c.l.b16 %v130
    %v1975 = vunpack.c.l.b16 %v131
    %v1976 = vunpack.c.l.b16 %v132
    %v1977 = vunpack.c.l.b16 %v133
    %v1978 = vunpack.c.l.b16 %v134
    %v1979 = vunpack.c.l.b16 %v135
    %v1980 = vunpack.c.l.b16 %v136
    %v1981 = vunpack.c.l.b16 %v137
    %v1982 = vunpack.c.l.b16 %v138
    %v1983 = vunpack.c.l.b16 %v139
    %v1984 = vunpack.c.l.b16 %v140
    %v1985 = vunpack.c.l.b16 %v141
    %v1986 = vunpack.c.l.b16 %v142
    %v1987 = vunpack.c.l.b16 %v143
    %v1988 = vunpack.c.l.b16 %v144
    %v1989 = vunpack.c.l.b16 %v145
    %v1990 = vunpack.c.l.b16 %v146
    %v1991 = vunpack.c.l.b16 %v147
    %v1992 = vunpack.c.l.b16 %v148
    %v1993 = vunpack.c.l.b16 %v149
    %v1994 = vunpack.c.l.b16 %v150
    %v1995 = vunpack.c.l.b16 %v151
    %v1996 = vunpack.c.l.b16 %v152
    %v1997 = vunpack.c.l.b16 %v153
    %v1998 = vunpack.c.l.b16 %v154
    %v1999 = vunpack.c.l.b16 %v155
    %v2000 = vunpack.c.l.b16 %v156
    %v2001 = vunpack.c.l.b16 %v157
    %v2002 = vunpack.c.l.b16 %v158
    %v2003 = vpack.c.b16 %v1972, %v1971
    %v2004 = vpack.c.b16 %v1974, %v1973
    %v2005 = vpack.c.b16 %v1976, %v1975
    %v2006 = vpack.c.b16 %v1978, %v1977
    %v2007 = vpack.c.b16 %v1980, %v1979
    %v2008 = vpack.c.b16 %v1982, %v1981
    %v2009 = vpack.c.b16 %v1984, %v1983
    %v2010 = vpack.c.b16 %v1986, %v1985
    %v2011 = vpack.c.b16 %v1988, %v1987
    %v2012 = vpack.c.b16 %v1990, %v1989
    %v2013 = vpack.c.b16 %v1992, %v1991
    %v2014 = vpack.c.b16 %v1994, %v1993
    %v2015 = vpack.c.b16 %v1996, %v1995
    %v2016 = vpack.c.b16 %v1998, %v1997
    %v2017 = vpack.c.b16 %v2000, %v1999
    %v2018 = vpack.c.b16 %v2002, %v2001
    %2035 = vmatprep.subr.bf16.mxu0 0
    %2036 = vmatpush1.bf16.msra.mxu0 %v2003
    %2037 = vmatprep.subr.bf16.mxu0 0
    %2038 = vmatpush1.bf16.msra.mxu0 %v2004
    %2039 = vmatprep.subr.bf16.mxu0 0
    %2040 = vmatpush1.bf16.msra.mxu0 %v2005
    %2041 = vmatprep.subr.bf16.mxu0 0
    %2042 = vmatpush1.bf16.msra.mxu0 %v2006
    %2043 = vmatprep.subr.bf16.mxu0 0
    %2044 = vmatpush1.bf16.msra.mxu0 %v2007
    %2045 = vmatprep.subr.bf16.mxu0 0
    %2046 = vmatpush1.bf16.msra.mxu0 %v2008
    %2047 = vmatprep.subr.bf16.mxu0 0
    %2048 = vmatpush1.bf16.msra.mxu0 %v2009
    %2049 = vmatprep.subr.bf16.mxu0 0
    %2050 = vmatpush1.bf16.msra.mxu0 %v2010
    %2051 = vmatprep.subr.bf16.mxu0 0
    %2052 = vmatpush1.bf16.msra.mxu0 %v2011
    %2053 = vmatprep.subr.bf16.mxu0 0
    %2054 = vmatpush1.bf16.msra.mxu0 %v2012
    %2055 = vmatprep.subr.bf16.mxu0 0
    %2056 = vmatpush1.bf16.msra.mxu0 %v2013
    %2057 = vmatprep.subr.bf16.mxu0 0
    %2058 = vmatpush1.bf16.msra.mxu0 %v2014
    %2059 = vmatprep.subr.bf16.mxu0 0
    %2060 = vmatpush1.bf16.msra.mxu0 %v2015
    %2061 = vmatprep.subr.bf16.mxu0 0
    %2062 = vmatpush1.bf16.msra.mxu0 %v2016
    %2063 = vmatprep.subr.bf16.mxu0 0
    %2064 = vmatpush1.bf16.msra.mxu0 %v2017
    %2065 = vmatprep.subr.bf16.mxu0 0
    %2066 = vmatpush1.bf16.msra.mxu0 %v2018
    %2067 = vmatprep.mubr.bf16.mxu0 %v1938
    %2068 = vmatmul.mubr.bf16.gmra.mrb[0].mxu0 %v1937
    %v2069 = vpop.f32.mrb[0].mxu0
    %v2070 = vadd.f32 %v28, %v2069
    %v2071 = vpop.f32.mrb[0].mxu0
    %v2072 = vpop.f32.mrb[0].mxu0
    %v2073 = vadd.f32 %v28, %v2072
    %v2074 = vpop.f32.mrb[0].mxu0
    %2075 = vdwg.mxu0
    %v2076 = vadd.f32 %v1318, %v2070
    %v2077 = vadd.f32 %v1808, %v2073
    %s2078 = scalar_lea.vmem %s3, 96
    %v2079 = vld [vmem:[%s2078] ss:$0 sm:$0xff]
    %v2080 = vld [vmem:[%s2078 + $0x1] ss:$0 sm:$0xff]
    %v2081 = vld [vmem:[%s2078 + $0x2] ss:$0 sm:$0xff]
    %v2082 = vld [vmem:[%s2078 + $0x3] ss:$0 sm:$0xff]
    %v2083 = vld [vmem:[%s2078 + $0x4] ss:$0 sm:$0xff]
    %s2084 = scalar_lea.vmem %s2078, 5
    %v2085 = vld [vmem:[%s2084] ss:$8 sm:$0x3]
    %v2086 = vld [vmem:[%s2078 + $0x6] ss:$0 sm:$0xff]
    %s2087 = scalar_lea.vmem %s2078, 7
    %v2088 = vld [vmem:[%s2087] ss:$8 sm:$0xf]
    %v2089 = vld [vmem:[%s2087] ss:$8 sm:$0xf0]
    %v2090 = vor.u32 %v2088, %v2089
    %s2091 = scalar_lea.vmem %s2078, 71
    %v2092 = vld [vmem:[%s2091] ss:$8 sm:$0xf]
    %s2093 = scalar_lea.vmem %s1, 224
    %v2094 = vld [vmem:[%s2093] sm:$0xff]
    %v2095 = vld [vmem:[%s2093 + $0x8] sm:$0xff]
    %v2096 = vld [vmem:[%s2093 + $0x10] sm:$0xff]
    %v2097 = vld [vmem:[%s2093 + $0x18] sm:$0xff]
    %v2098 = vld [vmem:[%s2093 + $0x20] sm:$0xff]
    %v2099 = vld [vmem:[%s2093 + $0x28] sm:$0xff]
    %v2100 = vld [vmem:[%s2093 + $0x38] sm:$0xff]
    %v2101 = vld [vmem:[%s2093 + $0x40] sm:$0xff]
    %v2102 = vld [vmem:[%s2093 + $0x48] sm:$0xff]
    %v2103 = vld [vmem:[%s2093 + $0x50] sm:$0xff]
    %v2104 = vld [vmem:[%s2093 + $0x58] sm:$0xff]
    %v2105 = vld [vmem:[%s2093 + $0x60] sm:$0xff]
    %v2106 = vld [vmem:[%s2093 + $0x70] sm:$0xff]
    %v2107 = vld [vmem:[%s2093 + $0x78] sm:$0xff]
    %v2108 = vld [vmem:[%s2093 + $0x80] sm:$0xff]
    %v2109 = vld [vmem:[%s2093 + $0x88] sm:$0xff]
    %v2110 = vld [vmem:[%s2093 + $0x90] sm:$0xff]
    %v2111 = vld [vmem:[%s2093 + $0x98] sm:$0xff]
    %v2112 = vld [vmem:[%s2093 + $0xa8] sm:$0xff]
    %v2113 = vld [vmem:[%s2093 + $0xb0] sm:$0xff]
    %v2114 = vld [vmem:[%s2093 + $0xb8] sm:$0xff]
    %v2115 = vld [vmem:[%s2093 + $0xc0] sm:$0xff]
    %v2116 = vld [vmem:[%s2093 + $0xc8] sm:$0xff]
    %v2117 = vld [vmem:[%s2093 + $0xd0] sm:$0xff]
    %v2118 = vld [vmem:[%s2093 + $0x30] sm:$0xff]
    %v2119 = vld [vmem:[%s2093 + $0x68] sm:$0xff]
    %v2120 = vld [vmem:[%s2093 + $0xa0] sm:$0xff]
    %v2121 = vld [vmem:[%s2093 + $0xd8] sm:$0xff]
    %s2122 = scalar_lea.vmem %s2, 384
    %v2123 = vld [vmem:[%s2122] sm:$0xf]
    %v2124 = vld [vmem:[%s2122 + $0x4] sm:$0xf]
    %v2125 = vld [vmem:[%s2122 + $0x8] sm:$0xf]
    %v2126 = vld [vmem:[%s2122 + $0xc] sm:$0xf]
    %v2127 = vld [vmem:[%s2122 + $0x10] sm:$0xf]
    %v2128 = vld [vmem:[%s2122 + $0x14] sm:$0xf]
    %v2129 = vld [vmem:[%s2122 + $0x18] sm:$0xf]
    %v2130 = vld [vmem:[%s2122 + $0x1c] sm:$0xf]
    %v2131 = vld [vmem:[%s2122 + $0x20] sm:$0xf]
    %v2132 = vld [vmem:[%s2122 + $0x24] sm:$0xf]
    %v2133 = vld [vmem:[%s2122 + $0x28] sm:$0xf]
    %v2134 = vld [vmem:[%s2122 + $0x2c] sm:$0xf]
    %v2135 = vld [vmem:[%s2122 + $0x30] sm:$0xf]
    %v2136 = vld [vmem:[%s2122 + $0x34] sm:$0xf]
    %v2137 = vld [vmem:[%s2122 + $0x38] sm:$0xf]
    %v2138 = vld [vmem:[%s2122 + $0x3c] sm:$0xf]
    %v2139 = vld [vmem:[%s2122 + $0x40] sm:$0xf]
    %v2140 = vld [vmem:[%s2122 + $0x44] sm:$0xf]
    %v2141 = vld [vmem:[%s2122 + $0x48] sm:$0xf]
    %v2142 = vld [vmem:[%s2122 + $0x4c] sm:$0xf]
    %v2143 = vld [vmem:[%s2122 + $0x50] sm:$0xf]
    %v2144 = vld [vmem:[%s2122 + $0x54] sm:$0xf]
    %v2145 = vld [vmem:[%s2122 + $0x58] sm:$0xf]
    %v2146 = vld [vmem:[%s2122 + $0x5c] sm:$0xf]
    %v2147 = vld [vmem:[%s2122 + $0x60] sm:$0xf]
    %v2148 = vld [vmem:[%s2122 + $0x64] sm:$0xf]
    %v2149 = vld [vmem:[%s2122 + $0x68] sm:$0xf]
    %v2150 = vld [vmem:[%s2122 + $0x6c] sm:$0xf]
    %v2151 = vld [vmem:[%s2122 + $0x70] sm:$0xf]
    %v2152 = vld [vmem:[%s2122 + $0x74] sm:$0xf]
    %v2153 = vld [vmem:[%s2122 + $0x78] sm:$0xf]
    %v2154 = vld [vmem:[%s2122 + $0x7c] sm:$0xf]
    %v2155 = vld [vmem:[%s2122 + $0x80] sm:$0xf]
    %v2156 = vld [vmem:[%s2122 + $0x84] sm:$0xf]
    %v2157 = vld [vmem:[%s2122 + $0x88] sm:$0xf]
    %v2158 = vld [vmem:[%s2122 + $0x8c] sm:$0xf]
    %v2159 = vld [vmem:[%s2122 + $0x90] sm:$0xf]
    %v2160 = vld [vmem:[%s2122 + $0x94] sm:$0xf]
    %v2161 = vld [vmem:[%s2122 + $0x98] sm:$0xf]
    %v2162 = vld [vmem:[%s2122 + $0x9c] sm:$0xf]
    %v2163 = vld [vmem:[%s2122 + $0xa0] sm:$0xf]
    %v2164 = vld [vmem:[%s2122 + $0xa4] sm:$0xf]
    %v2165 = vld [vmem:[%s2122 + $0xa8] sm:$0xf]
    %v2166 = vld [vmem:[%s2122 + $0xac] sm:$0xf]
    %v2167 = vld [vmem:[%s2122 + $0xb0] sm:$0xf]
    %v2168 = vld [vmem:[%s2122 + $0xb4] sm:$0xf]
    %v2169 = vld [vmem:[%s2122 + $0xb8] sm:$0xf]
    %v2170 = vld [vmem:[%s2122 + $0xbc] sm:$0xf]
    %v2171 = vld [vmem:[%s2122 + $0xc0] sm:$0xf]
    %v2172 = vld [vmem:[%s2122 + $0xc4] sm:$0xf]
    %v2173 = vld [vmem:[%s2122 + $0xc8] sm:$0xf]
    %v2174 = vld [vmem:[%s2122 + $0xcc] sm:$0xf]
    %v2175 = vld [vmem:[%s2122 + $0xd0] sm:$0xf]
    %v2176 = vld [vmem:[%s2122 + $0xd4] sm:$0xf]
    %v2177 = vld [vmem:[%s2122 + $0xd8] sm:$0xf]
    %v2178 = vld [vmem:[%s2122 + $0xdc] sm:$0xf]
    %v2179 = vld [vmem:[%s2122 + $0xe0] sm:$0xf]
    %v2180 = vld [vmem:[%s2122 + $0xe4] sm:$0xf]
    %v2181 = vld [vmem:[%s2122 + $0xe8] sm:$0xf]
    %v2182 = vld [vmem:[%s2122 + $0xec] sm:$0xf]
    %v2183 = vld [vmem:[%s2122 + $0xf0] sm:$0xf]
    %v2184 = vld [vmem:[%s2122 + $0xf4] sm:$0xf]
    %v2185 = vld [vmem:[%s2122 + $0xf8] sm:$0xf]
    %v2186 = vld [vmem:[%s2122 + $0xfc] sm:$0xf]
    %v2187 = vld [vmem:[%s2122 + $0x100] sm:$0xf]
    %v2188 = vld [vmem:[%s2122 + $0x104] sm:$0xf]
    %v2189 = vld [vmem:[%s2122 + $0x108] sm:$0xf]
    %v2190 = vld [vmem:[%s2122 + $0x10c] sm:$0xf]
    %v2191 = vld [vmem:[%s2122 + $0x110] sm:$0xf]
    %v2192 = vld [vmem:[%s2122 + $0x114] sm:$0xf]
    %v2193 = vld [vmem:[%s2122 + $0x118] sm:$0xf]
    %v2194 = vld [vmem:[%s2122 + $0x11c] sm:$0xf]
    %v2195 = vld [vmem:[%s2122 + $0x120] sm:$0xf]
    %v2196 = vld [vmem:[%s2122 + $0x124] sm:$0xf]
    %v2197 = vld [vmem:[%s2122 + $0x128] sm:$0xf]
    %v2198 = vld [vmem:[%s2122 + $0x12c] sm:$0xf]
    %v2199 = vld [vmem:[%s2122 + $0x130] sm:$0xf]
    %v2200 = vld [vmem:[%s2122 + $0x134] sm:$0xf]
    %v2201 = vld [vmem:[%s2122 + $0x138] sm:$0xf]
    %v2202 = vld [vmem:[%s2122 + $0x13c] sm:$0xf]
    %v2203 = vld [vmem:[%s2122 + $0x140] sm:$0xf]
    %v2204 = vld [vmem:[%s2122 + $0x144] sm:$0xf]
    %v2205 = vld [vmem:[%s2122 + $0x148] sm:$0xf]
    %v2206 = vld [vmem:[%s2122 + $0x14c] sm:$0xf]
    %v2207 = vld [vmem:[%s2122 + $0x150] sm:$0xf]
    %v2208 = vld [vmem:[%s2122 + $0x154] sm:$0xf]
    %v2209 = vld [vmem:[%s2122 + $0x158] sm:$0xf]
    %v2210 = vld [vmem:[%s2122 + $0x15c] sm:$0xf]
    %v2211 = vld [vmem:[%s2122 + $0x160] sm:$0xf]
    %v2212 = vld [vmem:[%s2122 + $0x164] sm:$0xf]
    %v2213 = vld [vmem:[%s2122 + $0x168] sm:$0xf]
    %v2214 = vld [vmem:[%s2122 + $0x16c] sm:$0xf]
    %v2215 = vld [vmem:[%s2122 + $0x170] sm:$0xf]
    %v2216 = vld [vmem:[%s2122 + $0x174] sm:$0xf]
    %v2217 = vld [vmem:[%s2122 + $0x178] sm:$0xf]
    %v2218 = vld [vmem:[%s2122 + $0x17c] sm:$0xf]
    %v2219 = vsel %vm159, %v2076, 0.0
    %2220 = vadd.xlane.f32.xlu0 %v2219
    %v2221 = vpop.xlane.xlu0 %2220
    %v2222 = vsel %vm159, %v2077, 0.0
    %2223 = vadd.xlane.f32.xlu0 %v2222
    %v2224 = vpop.xlane.xlu0 %2223
    %v2225 = vmul.f32 %v2221, %v166
    %v2226 = vmul.f32 %v2224, %v166
    %v2227 = vsub.f32 %v2076, %v2225
    %v2228 = vsub.f32 %v2077, %v2226
    %v2229 = vmul.f32 %v2227, %v2227
    %v2230 = vmul.f32 %v2228, %v2228
    %v2231 = vsel %vm159, %v2229, 0.0
    %2232 = vadd.xlane.f32.xlu0 %v2231
    %v2233 = vpop.xlane.xlu0 %2232
    %v2234 = vsel %vm159, %v2230, 0.0
    %2235 = vadd.xlane.f32.xlu0 %v2234
    %v2236 = vpop.xlane.xlu0 %2235
    %v2237 = vmul.f32 %v2233, %v166
    %v2238 = vmul.f32 %v2236, %v166
    %v2239 = vadd.f32 %v2237, 1e-05
    %v2240 = vadd.f32 %v2238, 1e-05
    %v2241 = vrsqrt.pop %v2239
    %v2242 = vrsqrt.pop %v2240
    %v2243 = vmul.f32 %v2227, %v2241
    %v2244 = vmul.f32 %v2228, %v2242
    %v2245 = vmul.f32 %v2243, %v2079
    %v2246 = vmul.f32 %v2244, %v2079
    %v2247 = vadd.f32 %v2245, %v2080
    %v2248 = vadd.f32 %v2246, %v2080
    %v2249 = vpack.c.bf16 %v2248, %v2247
    %v2252 = vlaneseq
    %v2253 = vshrl.u32 %v2252, 7
    %v2254 = vsub.s32 0, %v2253
    %v2255 = vrot.slane %v2090, %v2254
    %v2256 = vlaneseq
    %v2257 = vshrl.u32 %v2256, 7
    %v2258 = vsub.s32 1, %v2257
    %v2259 = vrot.slane %v2090, %v2258
    %v2260 = vlaneseq
    %v2261 = vshrl.u32 %v2260, 7
    %v2262 = vsub.s32 2, %v2261
    %v2263 = vrot.slane %v2090, %v2262
    %v2264 = vlaneseq
    %v2265 = vshrl.u32 %v2264, 7
    %v2266 = vsub.s32 3, %v2265
    %v2267 = vrot.slane %v2090, %v2266
    %v2268 = vlaneseq
    %v2269 = vshrl.u32 %v2268, 7
    %v2270 = vsub.s32 4, %v2269
    %v2271 = vrot.slane %v2090, %v2270
    %v2272 = vlaneseq
    %v2273 = vshrl.u32 %v2272, 7
    %v2274 = vsub.s32 5, %v2273
    %v2275 = vrot.slane %v2090, %v2274
    %v2276 = vlaneseq
    %v2277 = vshrl.u32 %v2276, 7
    %v2278 = vsub.s32 6, %v2277
    %v2279 = vrot.slane %v2090, %v2278
    %v2280 = vlaneseq
    %v2281 = vshrl.u32 %v2280, 7
    %v2282 = vsub.s32 7, %v2281
    %v2283 = vrot.slane %v2090, %v2282
    %v2284 = vlaneseq
    %v2285 = vshrl.u32 %v2284, 7
    %v2286 = vsub.s32 0, %v2285
    %v2287 = vrot.slane %v2092, %v2286
    %v2288 = vlaneseq
    %v2289 = vshrl.u32 %v2288, 7
    %v2290 = vsub.s32 1, %v2289
    %v2291 = vrot.slane %v2092, %v2290
    %v2292 = vlaneseq
    %v2293 = vshrl.u32 %v2292, 7
    %v2294 = vsub.s32 2, %v2293
    %v2295 = vrot.slane %v2092, %v2294
    %v2296 = vlaneseq
    %v2297 = vshrl.u32 %v2296, 7
    %v2298 = vsub.s32 3, %v2297
    %v2299 = vrot.slane %v2092, %v2298
    %v2336 = vunpack.c.l.b16 %v2094
    %v2337 = vunpack.c.h.b16 %v2094
    %v2338 = vunpack.c.l.b16 %v2095
    %v2339 = vunpack.c.h.b16 %v2095
    %v2340 = vunpack.c.l.b16 %v2096
    %v2341 = vunpack.c.h.b16 %v2096
    %v2342 = vunpack.c.l.b16 %v2097
    %v2343 = vunpack.c.h.b16 %v2097
    %v2344 = vunpack.c.l.b16 %v2098
    %v2345 = vunpack.c.h.b16 %v2098
    %v2346 = vunpack.c.l.b16 %v2099
    %v2347 = vunpack.c.h.b16 %v2099
    %v2348 = vunpack.c.l.b16 %v2100
    %v2349 = vunpack.c.h.b16 %v2100
    %v2350 = vunpack.c.l.b16 %v2101
    %v2351 = vunpack.c.h.b16 %v2101
    %v2352 = vunpack.c.l.b16 %v2102
    %v2353 = vunpack.c.h.b16 %v2102
    %v2354 = vunpack.c.l.b16 %v2103
    %v2355 = vunpack.c.h.b16 %v2103
    %v2356 = vunpack.c.l.b16 %v2104
    %v2357 = vunpack.c.h.b16 %v2104
    %v2358 = vunpack.c.l.b16 %v2105
    %v2359 = vunpack.c.h.b16 %v2105
    %v2360 = vunpack.c.l.b16 %v2106
    %v2361 = vunpack.c.h.b16 %v2106
    %v2362 = vunpack.c.l.b16 %v2107
    %v2363 = vunpack.c.h.b16 %v2107
    %v2364 = vunpack.c.l.b16 %v2108
    %v2365 = vunpack.c.h.b16 %v2108
    %v2366 = vunpack.c.l.b16 %v2109
    %v2367 = vunpack.c.h.b16 %v2109
    %v2368 = vunpack.c.l.b16 %v2110
    %v2369 = vunpack.c.h.b16 %v2110
    %v2370 = vunpack.c.l.b16 %v2111
    %v2371 = vunpack.c.h.b16 %v2111
    %v2372 = vunpack.c.l.b16 %v2112
    %v2373 = vunpack.c.h.b16 %v2112
    %v2374 = vunpack.c.l.b16 %v2113
    %v2375 = vunpack.c.h.b16 %v2113
    %v2376 = vunpack.c.l.b16 %v2114
    %v2377 = vunpack.c.h.b16 %v2114
    %v2378 = vunpack.c.l.b16 %v2115
    %v2379 = vunpack.c.h.b16 %v2115
    %v2380 = vunpack.c.l.b16 %v2116
    %v2381 = vunpack.c.h.b16 %v2116
    %v2382 = vunpack.c.l.b16 %v2117
    %v2383 = vunpack.c.h.b16 %v2117
    %v2384 = vpack.c.b16 %v2348, %v2336
    %v2385 = vpack.c.b16 %v2349, %v2337
    %v2386 = vpack.c.b16 %v2350, %v2338
    %v2387 = vpack.c.b16 %v2351, %v2339
    %v2388 = vpack.c.b16 %v2352, %v2340
    %v2389 = vpack.c.b16 %v2353, %v2341
    %v2390 = vpack.c.b16 %v2354, %v2342
    %v2391 = vpack.c.b16 %v2355, %v2343
    %v2392 = vpack.c.b16 %v2356, %v2344
    %v2393 = vpack.c.b16 %v2357, %v2345
    %v2394 = vpack.c.b16 %v2358, %v2346
    %v2395 = vpack.c.b16 %v2359, %v2347
    %v2396 = vpack.c.b16 %v2372, %v2360
    %v2397 = vpack.c.b16 %v2373, %v2361
    %v2398 = vpack.c.b16 %v2374, %v2362
    %v2399 = vpack.c.b16 %v2375, %v2363
    %v2400 = vpack.c.b16 %v2376, %v2364
    %v2401 = vpack.c.b16 %v2377, %v2365
    %v2402 = vpack.c.b16 %v2378, %v2366
    %v2403 = vpack.c.b16 %v2379, %v2367
    %v2404 = vpack.c.b16 %v2380, %v2368
    %v2405 = vpack.c.b16 %v2381, %v2369
    %v2406 = vpack.c.b16 %v2382, %v2370
    %v2407 = vpack.c.b16 %v2383, %v2371
    %v2433 = vsel %vm159, %v2249, 0
    %2435 = vmatprep.subr.bf16.mxu0 %v2385
    %2436 = vmatpush1.bf16.msra.mxu0 %v2384
    %2437 = vmatprep.subr.bf16.mxu0 %v2397
    %2438 = vmatpush1.bf16.msra.mxu0 %v2396
    %2439 = vmatprep.subr.bf16.mxu0 0
    %2440 = vmatpush1.bf16.msra.mxu0 0
    %2441 = vmatprep.subr.bf16.mxu0 0
    %2442 = vmatpush1.bf16.msra.mxu0 0
    %2443 = vmatprep.subr.bf16.mxu0 0
    %2444 = vmatpush1.bf16.msra.mxu0 0
    %2445 = vmatprep.subr.bf16.mxu0 0
    %2446 = vmatpush1.bf16.msra.mxu0 0
    %2447 = vmatprep.subr.bf16.mxu0 0
    %2448 = vmatpush1.bf16.msra.mxu0 0
    %2449 = vmatprep.subr.bf16.mxu0 0
    %2450 = vmatpush1.bf16.msra.mxu0 0
    %2451 = vmatprep.subr.bf16.mxu0 0
    %2452 = vmatpush1.bf16.msra.mxu0 0
    %2453 = vmatprep.subr.bf16.mxu0 0
    %2454 = vmatpush1.bf16.msra.mxu0 0
    %2455 = vmatprep.subr.bf16.mxu0 0
    %2456 = vmatpush1.bf16.msra.mxu0 0
    %2457 = vmatprep.subr.bf16.mxu0 0
    %2458 = vmatpush1.bf16.msra.mxu0 0
    %2459 = vmatprep.subr.bf16.mxu0 0
    %2460 = vmatpush1.bf16.msra.mxu0 0
    %2461 = vmatprep.subr.bf16.mxu0 0
    %2462 = vmatpush1.bf16.msra.mxu0 0
    %2463 = vmatprep.subr.bf16.mxu0 0
    %2464 = vmatpush1.bf16.msra.mxu0 0
    %2465 = vmatprep.subr.bf16.mxu0 0
    %2466 = vmatpush1.bf16.msra.mxu0 0
    %2467 = vmatprep.mubr.bf16.mxu0 0
    %2468 = vmatmul.mubr.bf16.gmra.mrb[0].mxu0 %v2433
    %v2469 = vpop.f32.mrb[0].mxu0
    %v2470 = vadd.f32 %v2255, %v2469
    %v2471 = vpop.f32.mrb[0].mxu0
    %v2472 = vadd.f32 %v2259, %v2471
    %v2473 = vpop.f32.mrb[0].mxu0
    %v2474 = vadd.f32 %v2255, %v2473
    %v2475 = vpop.f32.mrb[0].mxu0
    %v2476 = vadd.f32 %v2259, %v2475
    %2477 = vdwg.mxu0
    %2478 = vmatprep.subr.bf16.mxu0 %v2387
    %2479 = vmatpush1.bf16.msra.mxu0 %v2386
    %2480 = vmatprep.subr.bf16.mxu0 %v2399
    %2481 = vmatpush1.bf16.msra.mxu0 %v2398
    %2482 = vmatprep.subr.bf16.mxu0 0
    %2483 = vmatpush1.bf16.msra.mxu0 0
    %2484 = vmatprep.subr.bf16.mxu0 0
    %2485 = vmatpush1.bf16.msra.mxu0 0
    %2486 = vmatprep.subr.bf16.mxu0 0
    %2487 = vmatpush1.bf16.msra.mxu0 0
    %2488 = vmatprep.subr.bf16.mxu0 0
    %2489 = vmatpush1.bf16.msra.mxu0 0
    %2490 = vmatprep.subr.bf16.mxu0 0
    %2491 = vmatpush1.bf16.msra.mxu0 0
    %2492 = vmatprep.subr.bf16.mxu0 0
    %2493 = vmatpush1.bf16.msra.mxu0 0
    %2494 = vmatprep.subr.bf16.mxu0 0
    %2495 = vmatpush1.bf16.msra.mxu0 0
    %2496 = vmatprep.subr.bf16.mxu0 0
    %2497 = vmatpush1.bf16.msra.mxu0 0
    %2498 = vmatprep.subr.bf16.mxu0 0
    %2499 = vmatpush1.bf16.msra.mxu0 0
    %2500 = vmatprep.subr.bf16.mxu0 0
    %2501 = vmatpush1.bf16.msra.mxu0 0
    %2502 = vmatprep.subr.bf16.mxu0 0
    %2503 = vmatpush1.bf16.msra.mxu0 0
    %2504 = vmatprep.subr.bf16.mxu0 0
    %2505 = vmatpush1.bf16.msra.mxu0 0
    %2506 = vmatprep.subr.bf16.mxu0 0
    %2507 = vmatpush1.bf16.msra.mxu0 0
    %2508 = vmatprep.subr.bf16.mxu0 0
    %2509 = vmatpush1.bf16.msra.mxu0 0
    %2510 = vmatprep.mubr.bf16.mxu0 0
    %2511 = vmatmul.mubr.bf16.gmra.mrb[0].mxu0 %v2433
    %v2512 = vpop.f32.mrb[0].mxu0
    %v2513 = vadd.f32 %v2263, %v2512
    %v2514 = vpop.f32.mrb[0].mxu0
    %v2515 = vadd.f32 %v2267, %v2514
    %v2516 = vpop.f32.mrb[0].mxu0
    %v2517 = vadd.f32 %v2263, %v2516
    %v2518 = vpop.f32.mrb[0].mxu0
    %v2519 = vadd.f32 %v2267, %v2518
    %2520 = vdwg.mxu0
    %2521 = vmatprep.subr.bf16.mxu0 %v2389
    %2522 = vmatpush1.bf16.msra.mxu0 %v2388
    %2523 = vmatprep.subr.bf16.mxu0 %v2401
    %2524 = vmatpush1.bf16.msra.mxu0 %v2400
    %2525 = vmatprep.subr.bf16.mxu0 0
    %2526 = vmatpush1.bf16.msra.mxu0 0
    %2527 = vmatprep.subr.bf16.mxu0 0
    %2528 = vmatpush1.bf16.msra.mxu0 0
    %2529 = vmatprep.subr.bf16.mxu0 0
    %2530 = vmatpush1.bf16.msra.mxu0 0
    %2531 = vmatprep.subr.bf16.mxu0 0
    %2532 = vmatpush1.bf16.msra.mxu0 0
    %2533 = vmatprep.subr.bf16.mxu0 0
    %2534 = vmatpush1.bf16.msra.mxu0 0
    %2535 = vmatprep.subr.bf16.mxu0 0
    %2536 = vmatpush1.bf16.msra.mxu0 0
    %2537 = vmatprep.subr.bf16.mxu0 0
    %2538 = vmatpush1.bf16.msra.mxu0 0
    %2539 = vmatprep.subr.bf16.mxu0 0
    %2540 = vmatpush1.bf16.msra.mxu0 0
    %2541 = vmatprep.subr.bf16.mxu0 0
    %2542 = vmatpush1.bf16.msra.mxu0 0
    %2543 = vmatprep.subr.bf16.mxu0 0
    %2544 = vmatpush1.bf16.msra.mxu0 0
    %2545 = vmatprep.subr.bf16.mxu0 0
    %2546 = vmatpush1.bf16.msra.mxu0 0
    %2547 = vmatprep.subr.bf16.mxu0 0
    %2548 = vmatpush1.bf16.msra.mxu0 0
    %2549 = vmatprep.subr.bf16.mxu0 0
    %2550 = vmatpush1.bf16.msra.mxu0 0
    %2551 = vmatprep.subr.bf16.mxu0 0
    %2552 = vmatpush1.bf16.msra.mxu0 0
    %2553 = vmatprep.mubr.bf16.mxu0 0
    %2554 = vmatmul.mubr.bf16.gmra.mrb[0].mxu0 %v2433
    %v2555 = vpop.f32.mrb[0].mxu0
    %v2556 = vadd.f32 %v2271, %v2555
    %v2557 = vpop.f32.mrb[0].mxu0
    %v2558 = vadd.f32 %v2275, %v2557
    %v2559 = vpop.f32.mrb[0].mxu0
    %v2560 = vadd.f32 %v2271, %v2559
    %v2561 = vpop.f32.mrb[0].mxu0
    %v2562 = vadd.f32 %v2275, %v2561
    %2563 = vdwg.mxu0
    %2564 = vmatprep.subr.bf16.mxu0 %v2391
    %2565 = vmatpush1.bf16.msra.mxu0 %v2390
    %2566 = vmatprep.subr.bf16.mxu0 %v2403
    %2567 = vmatpush1.bf16.msra.mxu0 %v2402
    %2568 = vmatprep.subr.bf16.mxu0 0
    %2569 = vmatpush1.bf16.msra.mxu0 0
    %2570 = vmatprep.subr.bf16.mxu0 0
    %2571 = vmatpush1.bf16.msra.mxu0 0
    %2572 = vmatprep.subr.bf16.mxu0 0
    %2573 = vmatpush1.bf16.msra.mxu0 0
    %2574 = vmatprep.subr.bf16.mxu0 0
    %2575 = vmatpush1.bf16.msra.mxu0 0
    %2576 = vmatprep.subr.bf16.mxu0 0
    %2577 = vmatpush1.bf16.msra.mxu0 0
    %2578 = vmatprep.subr.bf16.mxu0 0
    %2579 = vmatpush1.bf16.msra.mxu0 0
    %2580 = vmatprep.subr.bf16.mxu0 0
    %2581 = vmatpush1.bf16.msra.mxu0 0
    %2582 = vmatprep.subr.bf16.mxu0 0
    %2583 = vmatpush1.bf16.msra.mxu0 0
    %2584 = vmatprep.subr.bf16.mxu0 0
    %2585 = vmatpush1.bf16.msra.mxu0 0
    %2586 = vmatprep.subr.bf16.mxu0 0
    %2587 = vmatpush1.bf16.msra.mxu0 0
    %2588 = vmatprep.subr.bf16.mxu0 0
    %2589 = vmatpush1.bf16.msra.mxu0 0
    %2590 = vmatprep.subr.bf16.mxu0 0
    %2591 = vmatpush1.bf16.msra.mxu0 0
    %2592 = vmatprep.subr.bf16.mxu0 0
    %2593 = vmatpush1.bf16.msra.mxu0 0
    %2594 = vmatprep.subr.bf16.mxu0 0
    %2595 = vmatpush1.bf16.msra.mxu0 0
    %2596 = vmatprep.mubr.bf16.mxu0 0
    %2597 = vmatmul.mubr.bf16.gmra.mrb[0].mxu0 %v2433
    %v2598 = vpop.f32.mrb[0].mxu0
    %v2599 = vadd.f32 %v2279, %v2598
    %v2600 = vpop.f32.mrb[0].mxu0
    %v2601 = vadd.f32 %v2283, %v2600
    %v2602 = vpop.f32.mrb[0].mxu0
    %v2603 = vadd.f32 %v2279, %v2602
    %v2604 = vpop.f32.mrb[0].mxu0
    %v2605 = vadd.f32 %v2283, %v2604
    %2606 = vdwg.mxu0
    %2607 = vmatprep.subr.bf16.mxu0 %v2393
    %2608 = vmatpush1.bf16.msra.mxu0 %v2392
    %2609 = vmatprep.subr.bf16.mxu0 %v2405
    %2610 = vmatpush1.bf16.msra.mxu0 %v2404
    %2611 = vmatprep.subr.bf16.mxu0 0
    %2612 = vmatpush1.bf16.msra.mxu0 0
    %2613 = vmatprep.subr.bf16.mxu0 0
    %2614 = vmatpush1.bf16.msra.mxu0 0
    %2615 = vmatprep.subr.bf16.mxu0 0
    %2616 = vmatpush1.bf16.msra.mxu0 0
    %2617 = vmatprep.subr.bf16.mxu0 0
    %2618 = vmatpush1.bf16.msra.mxu0 0
    %2619 = vmatprep.subr.bf16.mxu0 0
    %2620 = vmatpush1.bf16.msra.mxu0 0
    %2621 = vmatprep.subr.bf16.mxu0 0
    %2622 = vmatpush1.bf16.msra.mxu0 0
    %2623 = vmatprep.subr.bf16.mxu0 0
    %2624 = vmatpush1.bf16.msra.mxu0 0
    %2625 = vmatprep.subr.bf16.mxu0 0
    %2626 = vmatpush1.bf16.msra.mxu0 0
    %2627 = vmatprep.subr.bf16.mxu0 0
    %2628 = vmatpush1.bf16.msra.mxu0 0
    %2629 = vmatprep.subr.bf16.mxu0 0
    %2630 = vmatpush1.bf16.msra.mxu0 0
    %2631 = vmatprep.subr.bf16.mxu0 0
    %2632 = vmatpush1.bf16.msra.mxu0 0
    %2633 = vmatprep.subr.bf16.mxu0 0
    %2634 = vmatpush1.bf16.msra.mxu0 0
    %2635 = vmatprep.subr.bf16.mxu0 0
    %2636 = vmatpush1.bf16.msra.mxu0 0
    %2637 = vmatprep.subr.bf16.mxu0 0
    %2638 = vmatpush1.bf16.msra.mxu0 0
    %2639 = vmatprep.mubr.bf16.mxu0 0
    %2640 = vmatmul.mubr.bf16.gmra.mrb[0].mxu0 %v2433
    %v2641 = vpop.f32.mrb[0].mxu0
    %v2642 = vadd.f32 %v2287, %v2641
    %v2643 = vpop.f32.mrb[0].mxu0
    %v2644 = vadd.f32 %v2291, %v2643
    %v2645 = vpop.f32.mrb[0].mxu0
    %v2646 = vadd.f32 %v2287, %v2645
    %v2647 = vpop.f32.mrb[0].mxu0
    %v2648 = vadd.f32 %v2291, %v2647
    %2649 = vdwg.mxu0
    %2650 = vmatprep.subr.bf16.mxu0 %v2395
    %2651 = vmatpush1.bf16.msra.mxu0 %v2394
    %2652 = vmatprep.subr.bf16.mxu0 %v2407
    %2653 = vmatpush1.bf16.msra.mxu0 %v2406
    %2654 = vmatprep.subr.bf16.mxu0 0
    %2655 = vmatpush1.bf16.msra.mxu0 0
    %2656 = vmatprep.subr.bf16.mxu0 0
    %2657 = vmatpush1.bf16.msra.mxu0 0
    %2658 = vmatprep.subr.bf16.mxu0 0
    %2659 = vmatpush1.bf16.msra.mxu0 0
    %2660 = vmatprep.subr.bf16.mxu0 0
    %2661 = vmatpush1.bf16.msra.mxu0 0
    %2662 = vmatprep.subr.bf16.mxu0 0
    %2663 = vmatpush1.bf16.msra.mxu0 0
    %2664 = vmatprep.subr.bf16.mxu0 0
    %2665 = vmatpush1.bf16.msra.mxu0 0
    %2666 = vmatprep.subr.bf16.mxu0 0
    %2667 = vmatpush1.bf16.msra.mxu0 0
    %2668 = vmatprep.subr.bf16.mxu0 0
    %2669 = vmatpush1.bf16.msra.mxu0 0
    %2670 = vmatprep.subr.bf16.mxu0 0
    %2671 = vmatpush1.bf16.msra.mxu0 0
    %2672 = vmatprep.subr.bf16.mxu0 0
    %2673 = vmatpush1.bf16.msra.mxu0 0
    %2674 = vmatprep.subr.bf16.mxu0 0
    %2675 = vmatpush1.bf16.msra.mxu0 0
    %2676 = vmatprep.subr.bf16.mxu0 0
    %2677 = vmatpush1.bf16.msra.mxu0 0
    %2678 = vmatprep.subr.bf16.mxu0 0
    %2679 = vmatpush1.bf16.msra.mxu0 0
    %2680 = vmatprep.subr.bf16.mxu0 0
    %2681 = vmatpush1.bf16.msra.mxu0 0
    %2682 = vmatprep.mubr.bf16.mxu0 0
    %2683 = vmatmul.mubr.bf16.gmra.mrb[0].mxu0 %v2433
    %v2684 = vpop.f32.mrb[0].mxu0
    %v2685 = vadd.f32 %v2295, %v2684
    %v2686 = vpop.f32.mrb[0].mxu0
    %v2687 = vadd.f32 %v2299, %v2686
    %v2688 = vpop.f32.mrb[0].mxu0
    %v2689 = vadd.f32 %v2295, %v2688
    %v2690 = vpop.f32.mrb[0].mxu0
    %v2691 = vadd.f32 %v2299, %v2690
    %2692 = vdwg.mxu0
    %v2693 = vpack.c.bf16 %v2470, %v2470
    %v2694 = vpack.c.bf16 %v2556, %v2556
    %v2695 = vpack.c.bf16 %v2642, %v2642
    %2696 = vmatprep.subr.bf16.mxu0 0
    %2697 = vmatpush1.bf16.xpose.msra.mxu0 %v2694
    %2698 = vmatprep.subr.bf16.mxu0 0
    %2699 = vmatpush1.bf16.xpose.msra.mxu0 0
    %2700 = vmatprep.subr.bf16.mxu0 0
    %2701 = vmatpush1.bf16.xpose.msra.mxu0 0
    %2702 = vmatprep.subr.bf16.mxu0 0
    %2703 = vmatpush1.bf16.xpose.msra.mxu0 0
    %2704 = vmatprep.subr.bf16.mxu0 0
    %2705 = vmatpush1.bf16.xpose.msra.mxu0 0
    %2706 = vmatprep.subr.bf16.mxu0 0
    %2707 = vmatpush1.bf16.xpose.msra.mxu0 0
    %2708 = vmatprep.subr.bf16.mxu0 0
    %2709 = vmatpush1.bf16.xpose.msra.mxu0 0
    %2710 = vmatprep.subr.bf16.mxu0 0
    %2711 = vmatpush1.bf16.xpose.msra.mxu0 0
    %2712 = vmatprep.subr.bf16.mxu0 0
    %2713 = vmatpush1.bf16.xpose.msra.mxu0 0
    %2714 = vmatprep.subr.bf16.mxu0 0
    %2715 = vmatpush1.bf16.xpose.msra.mxu0 0
    %2716 = vmatprep.subr.bf16.mxu0 0
    %2717 = vmatpush1.bf16.xpose.msra.mxu0 0
    %2718 = vmatprep.subr.bf16.mxu0 0
    %2719 = vmatpush1.bf16.xpose.msra.mxu0 0
    %2720 = vmatprep.subr.bf16.mxu0 0
    %2721 = vmatpush1.bf16.xpose.msra.mxu0 0
    %2722 = vmatprep.subr.bf16.mxu0 0
    %2723 = vmatpush1.bf16.xpose.msra.mxu0 0
    %2724 = vmatprep.subr.bf16.mxu0 0
    %2725 = vmatpush1.bf16.xpose.msra.mxu0 0
    %2726 = vmatprep.subr.bf16.mxu0 0
    %2727 = vmatpush1.bf16.xpose.msra.mxu0 0
    %2728 = vmatprep.mubr.bf16.mxu0 0
    %2729 = vmatmul.mubr.bf16.gmra.mrb[0].mxu0 %v2693
    %v2730 = vpop.f32.mrb[0].mxu0
    %v2731 = vadd.f32 0.0, %v2730
    %v2732 = vpop.f32.mrb[0].mxu0
    %v2733 = vpop.f32.mrb[0].mxu0
    %v2734 = vpop.f32.mrb[0].mxu0
    %2735 = vdwg.mxu0
    %v2736 = vsel %vm678, %v2731, -inf
    %2737 = vmax.xlane.f32.xlu0 %v2736
    %v2738 = vpop.xlane.xlu0 %2737
    %v2739 = vsub.f32 %v2731, %v2738
    %v2740 = vmul.f32 %v2739, 1.442695
    %v2741 = vpow.pop %v2740
    %v2742 = vsel %vm678, %v2741, 0.0
    %2743 = vadd.xlane.f32.xlu0 %v2742
    %v2744 = vpop.xlane.xlu0 %2743
    %v2745 = vrcp.pop %v2744
    %v2746 = vmul.f32 %v2741, %v2745
    %v2747 = vpack.c.bf16 %v2746, %v2746
    %v2749 = vsel %vm678, %v2747, 0
    %v2752 = vsel %vm694, %v2695, 0
    %2754 = vmatprep.subr.bf16.mxu0 0
    %2755 = vmatpush1.bf16.msra.mxu0 %v2752
    %2756 = vmatprep.subr.bf16.mxu0 0
    %2757 = vmatpush1.bf16.msra.mxu0 0
    %2758 = vmatprep.subr.bf16.mxu0 0
    %2759 = vmatpush1.bf16.msra.mxu0 0
    %2760 = vmatprep.subr.bf16.mxu0 0
    %2761 = vmatpush1.bf16.msra.mxu0 0
    %2762 = vmatprep.subr.bf16.mxu0 0
    %2763 = vmatpush1.bf16.msra.mxu0 0
    %2764 = vmatprep.subr.bf16.mxu0 0
    %2765 = vmatpush1.bf16.msra.mxu0 0
    %2766 = vmatprep.subr.bf16.mxu0 0
    %2767 = vmatpush1.bf16.msra.mxu0 0
    %2768 = vmatprep.subr.bf16.mxu0 0
    %2769 = vmatpush1.bf16.msra.mxu0 0
    %2770 = vmatprep.subr.bf16.mxu0 0
    %2771 = vmatpush1.bf16.msra.mxu0 0
    %2772 = vmatprep.subr.bf16.mxu0 0
    %2773 = vmatpush1.bf16.msra.mxu0 0
    %2774 = vmatprep.subr.bf16.mxu0 0
    %2775 = vmatpush1.bf16.msra.mxu0 0
    %2776 = vmatprep.subr.bf16.mxu0 0
    %2777 = vmatpush1.bf16.msra.mxu0 0
    %2778 = vmatprep.subr.bf16.mxu0 0
    %2779 = vmatpush1.bf16.msra.mxu0 0
    %2780 = vmatprep.subr.bf16.mxu0 0
    %2781 = vmatpush1.bf16.msra.mxu0 0
    %2782 = vmatprep.subr.bf16.mxu0 0
    %2783 = vmatpush1.bf16.msra.mxu0 0
    %2784 = vmatprep.subr.bf16.mxu0 0
    %2785 = vmatpush1.bf16.msra.mxu0 0
    %2786 = vmatprep.mubr.bf16.mxu0 0
    %2787 = vmatmul.mubr.bf16.gmra.mrb[0].mxu0 %v2749
    %v2788 = vpop.f32.mrb[0].mxu0
    %v2789 = vadd.f32 0.0, %v2788
    %v2790 = vpop.f32.mrb[0].mxu0
    %v2791 = vpop.f32.mrb[0].mxu0
    %v2792 = vpop.f32.mrb[0].mxu0
    %2793 = vdwg.mxu0
    %v2794 = vpack.c.bf16 %v2472, %v2472
    %v2795 = vpack.c.bf16 %v2558, %v2558
    %v2796 = vpack.c.bf16 %v2644, %v2644
    %2797 = vmatprep.subr.bf16.mxu0 0
    %2798 = vmatpush1.bf16.xpose.msra.mxu0 %v2795
    %2799 = vmatprep.subr.bf16.mxu0 0
    %2800 = vmatpush1.bf16.xpose.msra.mxu0 0
    %2801 = vmatprep.subr.bf16.mxu0 0
    %2802 = vmatpush1.bf16.xpose.msra.mxu0 0
    %2803 = vmatprep.subr.bf16.mxu0 0
    %2804 = vmatpush1.bf16.xpose.msra.mxu0 0
    %2805 = vmatprep.subr.bf16.mxu0 0
    %2806 = vmatpush1.bf16.xpose.msra.mxu0 0
    %2807 = vmatprep.subr.bf16.mxu0 0
    %2808 = vmatpush1.bf16.xpose.msra.mxu0 0
    %2809 = vmatprep.subr.bf16.mxu0 0
    %2810 = vmatpush1.bf16.xpose.msra.mxu0 0
    %2811 = vmatprep.subr.bf16.mxu0 0
    %2812 = vmatpush1.bf16.xpose.msra.mxu0 0
    %2813 = vmatprep.subr.bf16.mxu0 0
    %2814 = vmatpush1.bf16.xpose.msra.mxu0 0
    %2815 = vmatprep.subr.bf16.mxu0 0
    %2816 = vmatpush1.bf16.xpose.msra.mxu0 0
    %2817 = vmatprep.subr.bf16.mxu0 0
    %2818 = vmatpush1.bf16.xpose.msra.mxu0 0
    %2819 = vmatprep.subr.bf16.mxu0 0
    %2820 = vmatpush1.bf16.xpose.msra.mxu0 0
    %2821 = vmatprep.subr.bf16.mxu0 0
    %2822 = vmatpush1.bf16.xpose.msra.mxu0 0
    %2823 = vmatprep.subr.bf16.mxu0 0
    %2824 = vmatpush1.bf16.xpose.msra.mxu0 0
    %2825 = vmatprep.subr.bf16.mxu0 0
    %2826 = vmatpush1.bf16.xpose.msra.mxu0 0
    %2827 = vmatprep.subr.bf16.mxu0 0
    %2828 = vmatpush1.bf16.xpose.msra.mxu0 0
    %2829 = vmatprep.mubr.bf16.mxu0 0
    %2830 = vmatmul.mubr.bf16.gmra.mrb[0].mxu0 %v2794
    %v2831 = vpop.f32.mrb[0].mxu0
    %v2832 = vadd.f32 0.0, %v2831
    %v2833 = vpop.f32.mrb[0].mxu0
    %v2834 = vpop.f32.mrb[0].mxu0
    %v2835 = vpop.f32.mrb[0].mxu0
    %2836 = vdwg.mxu0
    %v2837 = vsel %vm678, %v2832, -inf
    %2838 = vmax.xlane.f32.xlu0 %v2837
    %v2839 = vpop.xlane.xlu0 %2838
    %v2840 = vsub.f32 %v2832, %v2839
    %v2841 = vmul.f32 %v2840, 1.442695
    %v2842 = vpow.pop %v2841
    %v2843 = vsel %vm678, %v2842, 0.0
    %2844 = vadd.xlane.f32.xlu0 %v2843
    %v2845 = vpop.xlane.xlu0 %2844
    %v2846 = vrcp.pop %v2845
    %v2847 = vmul.f32 %v2842, %v2846
    %v2848 = vpack.c.bf16 %v2847, %v2847
    %v2850 = vsel %vm678, %v2848, 0
    %v2853 = vsel %vm694, %v2796, 0
    %2855 = vmatprep.subr.bf16.mxu0 0
    %2856 = vmatpush1.bf16.msra.mxu0 %v2853
    %2857 = vmatprep.subr.bf16.mxu0 0
    %2858 = vmatpush1.bf16.msra.mxu0 0
    %2859 = vmatprep.subr.bf16.mxu0 0
    %2860 = vmatpush1.bf16.msra.mxu0 0
    %2861 = vmatprep.subr.bf16.mxu0 0
    %2862 = vmatpush1.bf16.msra.mxu0 0
    %2863 = vmatprep.subr.bf16.mxu0 0
    %2864 = vmatpush1.bf16.msra.mxu0 0
    %2865 = vmatprep.subr.bf16.mxu0 0
    %2866 = vmatpush1.bf16.msra.mxu0 0
    %2867 = vmatprep.subr.bf16.mxu0 0
    %2868 = vmatpush1.bf16.msra.mxu0 0
    %2869 = vmatprep.subr.bf16.mxu0 0
    %2870 = vmatpush1.bf16.msra.mxu0 0
    %2871 = vmatprep.subr.bf16.mxu0 0
    %2872 = vmatpush1.bf16.msra.mxu0 0
    %2873 = vmatprep.subr.bf16.mxu0 0
    %2874 = vmatpush1.bf16.msra.mxu0 0
    %2875 = vmatprep.subr.bf16.mxu0 0
    %2876 = vmatpush1.bf16.msra.mxu0 0
    %2877 = vmatprep.subr.bf16.mxu0 0
    %2878 = vmatpush1.bf16.msra.mxu0 0
    %2879 = vmatprep.subr.bf16.mxu0 0
    %2880 = vmatpush1.bf16.msra.mxu0 0
    %2881 = vmatprep.subr.bf16.mxu0 0
    %2882 = vmatpush1.bf16.msra.mxu0 0
    %2883 = vmatprep.subr.bf16.mxu0 0
    %2884 = vmatpush1.bf16.msra.mxu0 0
    %2885 = vmatprep.subr.bf16.mxu0 0
    %2886 = vmatpush1.bf16.msra.mxu0 0
    %2887 = vmatprep.mubr.bf16.mxu0 0
    %2888 = vmatmul.mubr.bf16.gmra.mrb[0].mxu0 %v2850
    %v2889 = vpop.f32.mrb[0].mxu0
    %v2890 = vadd.f32 0.0, %v2889
    %v2891 = vpop.f32.mrb[0].mxu0
    %v2892 = vpop.f32.mrb[0].mxu0
    %v2893 = vpop.f32.mrb[0].mxu0
    %2894 = vdwg.mxu0
    %v2895 = vpack.c.bf16 %v2513, %v2513
    %v2896 = vpack.c.bf16 %v2599, %v2599
    %v2897 = vpack.c.bf16 %v2685, %v2685
    %2898 = vmatprep.subr.bf16.mxu0 0
    %2899 = vmatpush1.bf16.xpose.msra.mxu0 %v2896
    %2900 = vmatprep.subr.bf16.mxu0 0
    %2901 = vmatpush1.bf16.xpose.msra.mxu0 0
    %2902 = vmatprep.subr.bf16.mxu0 0
    %2903 = vmatpush1.bf16.xpose.msra.mxu0 0
    %2904 = vmatprep.subr.bf16.mxu0 0
    %2905 = vmatpush1.bf16.xpose.msra.mxu0 0
    %2906 = vmatprep.subr.bf16.mxu0 0
    %2907 = vmatpush1.bf16.xpose.msra.mxu0 0
    %2908 = vmatprep.subr.bf16.mxu0 0
    %2909 = vmatpush1.bf16.xpose.msra.mxu0 0
    %2910 = vmatprep.subr.bf16.mxu0 0
    %2911 = vmatpush1.bf16.xpose.msra.mxu0 0
    %2912 = vmatprep.subr.bf16.mxu0 0
    %2913 = vmatpush1.bf16.xpose.msra.mxu0 0
    %2914 = vmatprep.subr.bf16.mxu0 0
    %2915 = vmatpush1.bf16.xpose.msra.mxu0 0
    %2916 = vmatprep.subr.bf16.mxu0 0
    %2917 = vmatpush1.bf16.xpose.msra.mxu0 0
    %2918 = vmatprep.subr.bf16.mxu0 0
    %2919 = vmatpush1.bf16.xpose.msra.mxu0 0
    %2920 = vmatprep.subr.bf16.mxu0 0
    %2921 = vmatpush1.bf16.xpose.msra.mxu0 0
    %2922 = vmatprep.subr.bf16.mxu0 0
    %2923 = vmatpush1.bf16.xpose.msra.mxu0 0
    %2924 = vmatprep.subr.bf16.mxu0 0
    %2925 = vmatpush1.bf16.xpose.msra.mxu0 0
    %2926 = vmatprep.subr.bf16.mxu0 0
    %2927 = vmatpush1.bf16.xpose.msra.mxu0 0
    %2928 = vmatprep.subr.bf16.mxu0 0
    %2929 = vmatpush1.bf16.xpose.msra.mxu0 0
    %2930 = vmatprep.mubr.bf16.mxu0 0
    %2931 = vmatmul.mubr.bf16.gmra.mrb[0].mxu0 %v2895
    %v2932 = vpop.f32.mrb[0].mxu0
    %v2933 = vadd.f32 0.0, %v2932
    %v2934 = vpop.f32.mrb[0].mxu0
    %v2935 = vpop.f32.mrb[0].mxu0
    %v2936 = vpop.f32.mrb[0].mxu0
    %2937 = vdwg.mxu0
    %v2938 = vsel %vm678, %v2933, -inf
    %2939 = vmax.xlane.f32.xlu0 %v2938
    %v2940 = vpop.xlane.xlu0 %2939
    %v2941 = vsub.f32 %v2933, %v2940
    %v2942 = vmul.f32 %v2941, 1.442695
    %v2943 = vpow.pop %v2942
    %v2944 = vsel %vm678, %v2943, 0.0
    %2945 = vadd.xlane.f32.xlu0 %v2944
    %v2946 = vpop.xlane.xlu0 %2945
    %v2947 = vrcp.pop %v2946
    %v2948 = vmul.f32 %v2943, %v2947
    %v2949 = vpack.c.bf16 %v2948, %v2948
    %v2951 = vsel %vm678, %v2949, 0
    %v2954 = vsel %vm694, %v2897, 0
    %2956 = vmatprep.subr.bf16.mxu0 0
    %2957 = vmatpush1.bf16.msra.mxu0 %v2954
    %2958 = vmatprep.subr.bf16.mxu0 0
    %2959 = vmatpush1.bf16.msra.mxu0 0
    %2960 = vmatprep.subr.bf16.mxu0 0
    %2961 = vmatpush1.bf16.msra.mxu0 0
    %2962 = vmatprep.subr.bf16.mxu0 0
    %2963 = vmatpush1.bf16.msra.mxu0 0
    %2964 = vmatprep.subr.bf16.mxu0 0
    %2965 = vmatpush1.bf16.msra.mxu0 0
    %2966 = vmatprep.subr.bf16.mxu0 0
    %2967 = vmatpush1.bf16.msra.mxu0 0
    %2968 = vmatprep.subr.bf16.mxu0 0
    %2969 = vmatpush1.bf16.msra.mxu0 0
    %2970 = vmatprep.subr.bf16.mxu0 0
    %2971 = vmatpush1.bf16.msra.mxu0 0
    %2972 = vmatprep.subr.bf16.mxu0 0
    %2973 = vmatpush1.bf16.msra.mxu0 0
    %2974 = vmatprep.subr.bf16.mxu0 0
    %2975 = vmatpush1.bf16.msra.mxu0 0
    %2976 = vmatprep.subr.bf16.mxu0 0
    %2977 = vmatpush1.bf16.msra.mxu0 0
    %2978 = vmatprep.subr.bf16.mxu0 0
    %2979 = vmatpush1.bf16.msra.mxu0 0
    %2980 = vmatprep.subr.bf16.mxu0 0
    %2981 = vmatpush1.bf16.msra.mxu0 0
    %2982 = vmatprep.subr.bf16.mxu0 0
    %2983 = vmatpush1.bf16.msra.mxu0 0
    %2984 = vmatprep.subr.bf16.mxu0 0
    %2985 = vmatpush1.bf16.msra.mxu0 0
    %2986 = vmatprep.subr.bf16.mxu0 0
    %2987 = vmatpush1.bf16.msra.mxu0 0
    %2988 = vmatprep.mubr.bf16.mxu0 0
    %2989 = vmatmul.mubr.bf16.gmra.mrb[0].mxu0 %v2951
    %v2990 = vpop.f32.mrb[0].mxu0
    %v2991 = vadd.f32 0.0, %v2990
    %v2992 = vpop.f32.mrb[0].mxu0
    %v2993 = vpop.f32.mrb[0].mxu0
    %v2994 = vpop.f32.mrb[0].mxu0
    %2995 = vdwg.mxu0
    %v2996 = vpack.c.bf16 %v2515, %v2515
    %v2997 = vpack.c.bf16 %v2601, %v2601
    %v2998 = vpack.c.bf16 %v2687, %v2687
    %2999 = vmatprep.subr.bf16.mxu0 0
    %3000 = vmatpush1.bf16.xpose.msra.mxu0 %v2997
    %3001 = vmatprep.subr.bf16.mxu0 0
    %3002 = vmatpush1.bf16.xpose.msra.mxu0 0
    %3003 = vmatprep.subr.bf16.mxu0 0
    %3004 = vmatpush1.bf16.xpose.msra.mxu0 0
    %3005 = vmatprep.subr.bf16.mxu0 0
    %3006 = vmatpush1.bf16.xpose.msra.mxu0 0
    %3007 = vmatprep.subr.bf16.mxu0 0
    %3008 = vmatpush1.bf16.xpose.msra.mxu0 0
    %3009 = vmatprep.subr.bf16.mxu0 0
    %3010 = vmatpush1.bf16.xpose.msra.mxu0 0
    %3011 = vmatprep.subr.bf16.mxu0 0
    %3012 = vmatpush1.bf16.xpose.msra.mxu0 0
    %3013 = vmatprep.subr.bf16.mxu0 0
    %3014 = vmatpush1.bf16.xpose.msra.mxu0 0
    %3015 = vmatprep.subr.bf16.mxu0 0
    %3016 = vmatpush1.bf16.xpose.msra.mxu0 0
    %3017 = vmatprep.subr.bf16.mxu0 0
    %3018 = vmatpush1.bf16.xpose.msra.mxu0 0
    %3019 = vmatprep.subr.bf16.mxu0 0
    %3020 = vmatpush1.bf16.xpose.msra.mxu0 0
    %3021 = vmatprep.subr.bf16.mxu0 0
    %3022 = vmatpush1.bf16.xpose.msra.mxu0 0
    %3023 = vmatprep.subr.bf16.mxu0 0
    %3024 = vmatpush1.bf16.xpose.msra.mxu0 0
    %3025 = vmatprep.subr.bf16.mxu0 0
    %3026 = vmatpush1.bf16.xpose.msra.mxu0 0
    %3027 = vmatprep.subr.bf16.mxu0 0
    %3028 = vmatpush1.bf16.xpose.msra.mxu0 0
    %3029 = vmatprep.subr.bf16.mxu0 0
    %3030 = vmatpush1.bf16.xpose.msra.mxu0 0
    %3031 = vmatprep.mubr.bf16.mxu0 0
    %3032 = vmatmul.mubr.bf16.gmra.mrb[0].mxu0 %v2996
    %v3033 = vpop.f32.mrb[0].mxu0
    %v3034 = vadd.f32 0.0, %v3033
    %v3035 = vpop.f32.mrb[0].mxu0
    %v3036 = vpop.f32.mrb[0].mxu0
    %v3037 = vpop.f32.mrb[0].mxu0
    %3038 = vdwg.mxu0
    %v3039 = vsel %vm678, %v3034, -inf
    %3040 = vmax.xlane.f32.xlu0 %v3039
    %v3041 = vpop.xlane.xlu0 %3040
    %v3042 = vsub.f32 %v3034, %v3041
    %v3043 = vmul.f32 %v3042, 1.442695
    %v3044 = vpow.pop %v3043
    %v3045 = vsel %vm678, %v3044, 0.0
    %3046 = vadd.xlane.f32.xlu0 %v3045
    %v3047 = vpop.xlane.xlu0 %3046
    %v3048 = vrcp.pop %v3047
    %v3049 = vmul.f32 %v3044, %v3048
    %v3050 = vpack.c.bf16 %v3049, %v3049
    %v3052 = vsel %vm678, %v3050, 0
    %v3055 = vsel %vm694, %v2998, 0
    %3057 = vmatprep.subr.bf16.mxu0 0
    %3058 = vmatpush1.bf16.msra.mxu0 %v3055
    %3059 = vmatprep.subr.bf16.mxu0 0
    %3060 = vmatpush1.bf16.msra.mxu0 0
    %3061 = vmatprep.subr.bf16.mxu0 0
    %3062 = vmatpush1.bf16.msra.mxu0 0
    %3063 = vmatprep.subr.bf16.mxu0 0
    %3064 = vmatpush1.bf16.msra.mxu0 0
    %3065 = vmatprep.subr.bf16.mxu0 0
    %3066 = vmatpush1.bf16.msra.mxu0 0
    %3067 = vmatprep.subr.bf16.mxu0 0
    %3068 = vmatpush1.bf16.msra.mxu0 0
    %3069 = vmatprep.subr.bf16.mxu0 0
    %3070 = vmatpush1.bf16.msra.mxu0 0
    %3071 = vmatprep.subr.bf16.mxu0 0
    %3072 = vmatpush1.bf16.msra.mxu0 0
    %3073 = vmatprep.subr.bf16.mxu0 0
    %3074 = vmatpush1.bf16.msra.mxu0 0
    %3075 = vmatprep.subr.bf16.mxu0 0
    %3076 = vmatpush1.bf16.msra.mxu0 0
    %3077 = vmatprep.subr.bf16.mxu0 0
    %3078 = vmatpush1.bf16.msra.mxu0 0
    %3079 = vmatprep.subr.bf16.mxu0 0
    %3080 = vmatpush1.bf16.msra.mxu0 0
    %3081 = vmatprep.subr.bf16.mxu0 0
    %3082 = vmatpush1.bf16.msra.mxu0 0
    %3083 = vmatprep.subr.bf16.mxu0 0
    %3084 = vmatpush1.bf16.msra.mxu0 0
    %3085 = vmatprep.subr.bf16.mxu0 0
    %3086 = vmatpush1.bf16.msra.mxu0 0
    %3087 = vmatprep.subr.bf16.mxu0 0
    %3088 = vmatpush1.bf16.msra.mxu0 0
    %3089 = vmatprep.mubr.bf16.mxu0 0
    %3090 = vmatmul.mubr.bf16.gmra.mrb[0].mxu0 %v3052
    %v3091 = vpop.f32.mrb[0].mxu0
    %v3092 = vadd.f32 0.0, %v3091
    %v3093 = vpop.f32.mrb[0].mxu0
    %v3094 = vpop.f32.mrb[0].mxu0
    %v3095 = vpop.f32.mrb[0].mxu0
    %3096 = vdwg.mxu0
    %v3097 = vpack.c.bf16 %v2789, %v2789
    %v3098 = vpack.c.bf16 %v2890, %v2890
    %v3099 = vpack.c.bf16 %v2991, %v2991
    %v3100 = vpack.c.bf16 %v3092, %v3092
    %v3165 = vunpack.c.l.b16 %v2123
    %v3166 = vunpack.c.l.b16 %v2124
    %v3167 = vunpack.c.l.b16 %v2125
    %v3168 = vunpack.c.l.b16 %v2126
    %v3169 = vunpack.c.l.b16 %v2127
    %v3170 = vunpack.c.l.b16 %v2128
    %v3171 = vunpack.c.l.b16 %v2129
    %v3172 = vunpack.c.l.b16 %v2130
    %v3173 = vunpack.c.l.b16 %v2131
    %v3174 = vunpack.c.l.b16 %v2132
    %v3175 = vunpack.c.l.b16 %v2133
    %v3176 = vunpack.c.l.b16 %v2134
    %v3177 = vunpack.c.l.b16 %v2135
    %v3178 = vunpack.c.l.b16 %v2136
    %v3179 = vunpack.c.l.b16 %v2137
    %v3180 = vunpack.c.l.b16 %v2138
    %v3181 = vunpack.c.l.b16 %v2139
    %v3182 = vunpack.c.l.b16 %v2140
    %v3183 = vunpack.c.l.b16 %v2141
    %v3184 = vunpack.c.l.b16 %v2142
    %v3185 = vunpack.c.l.b16 %v2143
    %v3186 = vunpack.c.l.b16 %v2144
    %v3187 = vunpack.c.l.b16 %v2145
    %v3188 = vunpack.c.l.b16 %v2146
    %v3189 = vunpack.c.l.b16 %v2147
    %v3190 = vunpack.c.l.b16 %v2148
    %v3191 = vunpack.c.l.b16 %v2149
    %v3192 = vunpack.c.l.b16 %v2150
    %v3193 = vunpack.c.l.b16 %v2151
    %v3194 = vunpack.c.l.b16 %v2152
    %v3195 = vunpack.c.l.b16 %v2153
    %v3196 = vunpack.c.l.b16 %v2154
    %v3197 = vunpack.c.l.b16 %v2155
    %v3198 = vunpack.c.l.b16 %v2156
    %v3199 = vunpack.c.l.b16 %v2157
    %v3200 = vunpack.c.l.b16 %v2158
    %v3201 = vunpack.c.l.b16 %v2159
    %v3202 = vunpack.c.l.b16 %v2160
    %v3203 = vunpack.c.l.b16 %v2161
    %v3204 = vunpack.c.l.b16 %v2162
    %v3205 = vunpack.c.l.b16 %v2163
    %v3206 = vunpack.c.l.b16 %v2164
    %v3207 = vunpack.c.l.b16 %v2165
    %v3208 = vunpack.c.l.b16 %v2166
    %v3209 = vunpack.c.l.b16 %v2167
    %v3210 = vunpack.c.l.b16 %v2168
    %v3211 = vunpack.c.l.b16 %v2169
    %v3212 = vunpack.c.l.b16 %v2170
    %v3213 = vunpack.c.l.b16 %v2171
    %v3214 = vunpack.c.l.b16 %v2172
    %v3215 = vunpack.c.l.b16 %v2173
    %v3216 = vunpack.c.l.b16 %v2174
    %v3217 = vunpack.c.l.b16 %v2175
    %v3218 = vunpack.c.l.b16 %v2176
    %v3219 = vunpack.c.l.b16 %v2177
    %v3220 = vunpack.c.l.b16 %v2178
    %v3221 = vunpack.c.l.b16 %v2179
    %v3222 = vunpack.c.l.b16 %v2180
    %v3223 = vunpack.c.l.b16 %v2181
    %v3224 = vunpack.c.l.b16 %v2182
    %v3225 = vunpack.c.l.b16 %v2183
    %v3226 = vunpack.c.l.b16 %v2184
    %v3227 = vunpack.c.l.b16 %v2185
    %v3228 = vunpack.c.l.b16 %v2186
    %v3229 = vpack.c.b16 %v3166, %v3165
    %v3230 = vpack.c.b16 %v3168, %v3167
    %v3231 = vpack.c.b16 %v3170, %v3169
    %v3232 = vpack.c.b16 %v3172, %v3171
    %v3233 = vpack.c.b16 %v3174, %v3173
    %v3234 = vpack.c.b16 %v3176, %v3175
    %v3235 = vpack.c.b16 %v3178, %v3177
    %v3236 = vpack.c.b16 %v3180, %v3179
    %v3237 = vpack.c.b16 %v3182, %v3181
    %v3238 = vpack.c.b16 %v3184, %v3183
    %v3239 = vpack.c.b16 %v3186, %v3185
    %v3240 = vpack.c.b16 %v3188, %v3187
    %v3241 = vpack.c.b16 %v3190, %v3189
    %v3242 = vpack.c.b16 %v3192, %v3191
    %v3243 = vpack.c.b16 %v3194, %v3193
    %v3244 = vpack.c.b16 %v3196, %v3195
    %v3245 = vpack.c.b16 %v3198, %v3197
    %v3246 = vpack.c.b16 %v3200, %v3199
    %v3247 = vpack.c.b16 %v3202, %v3201
    %v3248 = vpack.c.b16 %v3204, %v3203
    %v3249 = vpack.c.b16 %v3206, %v3205
    %v3250 = vpack.c.b16 %v3208, %v3207
    %v3251 = vpack.c.b16 %v3210, %v3209
    %v3252 = vpack.c.b16 %v3212, %v3211
    %v3253 = vpack.c.b16 %v3214, %v3213
    %v3254 = vpack.c.b16 %v3216, %v3215
    %v3255 = vpack.c.b16 %v3218, %v3217
    %v3256 = vpack.c.b16 %v3220, %v3219
    %v3257 = vpack.c.b16 %v3222, %v3221
    %v3258 = vpack.c.b16 %v3224, %v3223
    %v3259 = vpack.c.b16 %v3226, %v3225
    %v3260 = vpack.c.b16 %v3228, %v3227
    %3293 = vmatprep.subr.bf16.mxu0 0
    %3294 = vmatpush1.bf16.msra.mxu0 %v3229
    %3295 = vmatprep.subr.bf16.mxu0 0
    %3296 = vmatpush1.bf16.msra.mxu0 %v3230
    %3297 = vmatprep.subr.bf16.mxu0 0
    %3298 = vmatpush1.bf16.msra.mxu0 %v3231
    %3299 = vmatprep.subr.bf16.mxu0 0
    %3300 = vmatpush1.bf16.msra.mxu0 %v3232
    %3301 = vmatprep.subr.bf16.mxu0 0
    %3302 = vmatpush1.bf16.msra.mxu0 %v3233
    %3303 = vmatprep.subr.bf16.mxu0 0
    %3304 = vmatpush1.bf16.msra.mxu0 %v3234
    %3305 = vmatprep.subr.bf16.mxu0 0
    %3306 = vmatpush1.bf16.msra.mxu0 %v3235
    %3307 = vmatprep.subr.bf16.mxu0 0
    %3308 = vmatpush1.bf16.msra.mxu0 %v3236
    %3309 = vmatprep.subr.bf16.mxu0 0
    %3310 = vmatpush1.bf16.msra.mxu0 %v3237
    %3311 = vmatprep.subr.bf16.mxu0 0
    %3312 = vmatpush1.bf16.msra.mxu0 %v3238
    %3313 = vmatprep.subr.bf16.mxu0 0
    %3314 = vmatpush1.bf16.msra.mxu0 %v3239
    %3315 = vmatprep.subr.bf16.mxu0 0
    %3316 = vmatpush1.bf16.msra.mxu0 %v3240
    %3317 = vmatprep.subr.bf16.mxu0 0
    %3318 = vmatpush1.bf16.msra.mxu0 %v3241
    %3319 = vmatprep.subr.bf16.mxu0 0
    %3320 = vmatpush1.bf16.msra.mxu0 %v3242
    %3321 = vmatprep.subr.bf16.mxu0 0
    %3322 = vmatpush1.bf16.msra.mxu0 %v3243
    %3323 = vmatprep.subr.bf16.mxu0 0
    %3324 = vmatpush1.bf16.msra.mxu0 %v3244
    %3325 = vmatprep.mubr.bf16.mxu0 %v3098
    %3326 = vmatmul.mubr.bf16.gmra.mrb[0].mxu0 %v3097
    %v3327 = vpop.f32.mrb[0].mxu0
    %v3328 = vadd.f32 0.0, %v3327
    %v3329 = vpop.f32.mrb[0].mxu0
    %v3330 = vpop.f32.mrb[0].mxu0
    %v3331 = vpop.f32.mrb[0].mxu0
    %3332 = vdwg.mxu0
    %3333 = vmatprep.subr.bf16.mxu0 0
    %3334 = vmatpush1.bf16.msra.mxu0 %v3245
    %3335 = vmatprep.subr.bf16.mxu0 0
    %3336 = vmatpush1.bf16.msra.mxu0 %v3246
    %3337 = vmatprep.subr.bf16.mxu0 0
    %3338 = vmatpush1.bf16.msra.mxu0 %v3247
    %3339 = vmatprep.subr.bf16.mxu0 0
    %3340 = vmatpush1.bf16.msra.mxu0 %v3248
    %3341 = vmatprep.subr.bf16.mxu0 0
    %3342 = vmatpush1.bf16.msra.mxu0 %v3249
    %3343 = vmatprep.subr.bf16.mxu0 0
    %3344 = vmatpush1.bf16.msra.mxu0 %v3250
    %3345 = vmatprep.subr.bf16.mxu0 0
    %3346 = vmatpush1.bf16.msra.mxu0 %v3251
    %3347 = vmatprep.subr.bf16.mxu0 0
    %3348 = vmatpush1.bf16.msra.mxu0 %v3252
    %3349 = vmatprep.subr.bf16.mxu0 0
    %3350 = vmatpush1.bf16.msra.mxu0 %v3253
    %3351 = vmatprep.subr.bf16.mxu0 0
    %3352 = vmatpush1.bf16.msra.mxu0 %v3254
    %3353 = vmatprep.subr.bf16.mxu0 0
    %3354 = vmatpush1.bf16.msra.mxu0 %v3255
    %3355 = vmatprep.subr.bf16.mxu0 0
    %3356 = vmatpush1.bf16.msra.mxu0 %v3256
    %3357 = vmatprep.subr.bf16.mxu0 0
    %3358 = vmatpush1.bf16.msra.mxu0 %v3257
    %3359 = vmatprep.subr.bf16.mxu0 0
    %3360 = vmatpush1.bf16.msra.mxu0 %v3258
    %3361 = vmatprep.subr.bf16.mxu0 0
    %3362 = vmatpush1.bf16.msra.mxu0 %v3259
    %3363 = vmatprep.subr.bf16.mxu0 0
    %3364 = vmatpush1.bf16.msra.mxu0 %v3260
    %3365 = vmatprep.mubr.bf16.mxu0 %v3100
    %3366 = vmatmul.mubr.bf16.gmra.mrb[0].mxu0 %v3099
    %v3367 = vpop.f32.mrb[0].mxu0
    %v3368 = vadd.f32 %v3328, %v3367
    %v3369 = vpop.f32.mrb[0].mxu0
    %v3370 = vpop.f32.mrb[0].mxu0
    %v3371 = vpop.f32.mrb[0].mxu0
    %3372 = vdwg.mxu0
    %v3373 = vadd.f32 %v2076, %v3368
    %v3374 = vadd.f32 %v3373, %v2081
    %v3375 = vpack.c.bf16 %v2474, %v2474
    %v3376 = vpack.c.bf16 %v2560, %v2560
    %v3377 = vpack.c.bf16 %v2646, %v2646
    %3378 = vmatprep.subr.bf16.mxu0 0
    %3379 = vmatpush1.bf16.xpose.msra.mxu0 %v3376
    %3380 = vmatprep.subr.bf16.mxu0 0
    %3381 = vmatpush1.bf16.xpose.msra.mxu0 0
    %3382 = vmatprep.subr.bf16.mxu0 0
    %3383 = vmatpush1.bf16.xpose.msra.mxu0 0
    %3384 = vmatprep.subr.bf16.mxu0 0
    %3385 = vmatpush1.bf16.xpose.msra.mxu0 0
    %3386 = vmatprep.subr.bf16.mxu0 0
    %3387 = vmatpush1.bf16.xpose.msra.mxu0 0
    %3388 = vmatprep.subr.bf16.mxu0 0
    %3389 = vmatpush1.bf16.xpose.msra.mxu0 0
    %3390 = vmatprep.subr.bf16.mxu0 0
    %3391 = vmatpush1.bf16.xpose.msra.mxu0 0
    %3392 = vmatprep.subr.bf16.mxu0 0
    %3393 = vmatpush1.bf16.xpose.msra.mxu0 0
    %3394 = vmatprep.subr.bf16.mxu0 0
    %3395 = vmatpush1.bf16.xpose.msra.mxu0 0
    %3396 = vmatprep.subr.bf16.mxu0 0
    %3397 = vmatpush1.bf16.xpose.msra.mxu0 0
    %3398 = vmatprep.subr.bf16.mxu0 0
    %3399 = vmatpush1.bf16.xpose.msra.mxu0 0
    %3400 = vmatprep.subr.bf16.mxu0 0
    %3401 = vmatpush1.bf16.xpose.msra.mxu0 0
    %3402 = vmatprep.subr.bf16.mxu0 0
    %3403 = vmatpush1.bf16.xpose.msra.mxu0 0
    %3404 = vmatprep.subr.bf16.mxu0 0
    %3405 = vmatpush1.bf16.xpose.msra.mxu0 0
    %3406 = vmatprep.subr.bf16.mxu0 0
    %3407 = vmatpush1.bf16.xpose.msra.mxu0 0
    %3408 = vmatprep.subr.bf16.mxu0 0
    %3409 = vmatpush1.bf16.xpose.msra.mxu0 0
    %3410 = vmatprep.mubr.bf16.mxu0 0
    %3411 = vmatmul.mubr.bf16.gmra.mrb[0].mxu0 %v3375
    %v3412 = vpop.f32.mrb[0].mxu0
    %v3413 = vadd.f32 0.0, %v3412
    %v3414 = vpop.f32.mrb[0].mxu0
    %v3415 = vpop.f32.mrb[0].mxu0
    %v3416 = vpop.f32.mrb[0].mxu0
    %3417 = vdwg.mxu0
    %v3418 = vsel %vm678, %v3413, -inf
    %3419 = vmax.xlane.f32.xlu0 %v3418
    %v3420 = vpop.xlane.xlu0 %3419
    %v3421 = vsub.f32 %v3413, %v3420
    %v3422 = vmul.f32 %v3421, 1.442695
    %v3423 = vpow.pop %v3422
    %v3424 = vsel %vm678, %v3423, 0.0
    %3425 = vadd.xlane.f32.xlu0 %v3424
    %v3426 = vpop.xlane.xlu0 %3425
    %v3427 = vrcp.pop %v3426
    %v3428 = vmul.f32 %v3423, %v3427
    %v3429 = vpack.c.bf16 %v3428, %v3428
    %v3431 = vsel %vm678, %v3429, 0
    %v3434 = vsel %vm694, %v3377, 0
    %3436 = vmatprep.subr.bf16.mxu0 0
    %3437 = vmatpush1.bf16.msra.mxu0 %v3434
    %3438 = vmatprep.subr.bf16.mxu0 0
    %3439 = vmatpush1.bf16.msra.mxu0 0
    %3440 = vmatprep.subr.bf16.mxu0 0
    %3441 = vmatpush1.bf16.msra.mxu0 0
    %3442 = vmatprep.subr.bf16.mxu0 0
    %3443 = vmatpush1.bf16.msra.mxu0 0
    %3444 = vmatprep.subr.bf16.mxu0 0
    %3445 = vmatpush1.bf16.msra.mxu0 0
    %3446 = vmatprep.subr.bf16.mxu0 0
    %3447 = vmatpush1.bf16.msra.mxu0 0
    %3448 = vmatprep.subr.bf16.mxu0 0
    %3449 = vmatpush1.bf16.msra.mxu0 0
    %3450 = vmatprep.subr.bf16.mxu0 0
    %3451 = vmatpush1.bf16.msra.mxu0 0
    %3452 = vmatprep.subr.bf16.mxu0 0
    %3453 = vmatpush1.bf16.msra.mxu0 0
    %3454 = vmatprep.subr.bf16.mxu0 0
    %3455 = vmatpush1.bf16.msra.mxu0 0
    %3456 = vmatprep.subr.bf16.mxu0 0
    %3457 = vmatpush1.bf16.msra.mxu0 0
    %3458 = vmatprep.subr.bf16.mxu0 0
    %3459 = vmatpush1.bf16.msra.mxu0 0
    %3460 = vmatprep.subr.bf16.mxu0 0
    %3461 = vmatpush1.bf16.msra.mxu0 0
    %3462 = vmatprep.subr.bf16.mxu0 0
    %3463 = vmatpush1.bf16.msra.mxu0 0
    %3464 = vmatprep.subr.bf16.mxu0 0
    %3465 = vmatpush1.bf16.msra.mxu0 0
    %3466 = vmatprep.subr.bf16.mxu0 0
    %3467 = vmatpush1.bf16.msra.mxu0 0
    %3468 = vmatprep.mubr.bf16.mxu0 0
    %3469 = vmatmul.mubr.bf16.gmra.mrb[0].mxu0 %v3431
    %v3470 = vpop.f32.mrb[0].mxu0
    %v3471 = vadd.f32 0.0, %v3470
    %v3472 = vpop.f32.mrb[0].mxu0
    %v3473 = vpop.f32.mrb[0].mxu0
    %v3474 = vpop.f32.mrb[0].mxu0
    %3475 = vdwg.mxu0
    %v3476 = vpack.c.bf16 %v2476, %v2476
    %v3477 = vpack.c.bf16 %v2562, %v2562
    %v3478 = vpack.c.bf16 %v2648, %v2648
    %3479 = vmatprep.subr.bf16.mxu0 0
    %3480 = vmatpush1.bf16.xpose.msra.mxu0 %v3477
    %3481 = vmatprep.subr.bf16.mxu0 0
    %3482 = vmatpush1.bf16.xpose.msra.mxu0 0
    %3483 = vmatprep.subr.bf16.mxu0 0
    %3484 = vmatpush1.bf16.xpose.msra.mxu0 0
    %3485 = vmatprep.subr.bf16.mxu0 0
    %3486 = vmatpush1.bf16.xpose.msra.mxu0 0
    %3487 = vmatprep.subr.bf16.mxu0 0
    %3488 = vmatpush1.bf16.xpose.msra.mxu0 0
    %3489 = vmatprep.subr.bf16.mxu0 0
    %3490 = vmatpush1.bf16.xpose.msra.mxu0 0
    %3491 = vmatprep.subr.bf16.mxu0 0
    %3492 = vmatpush1.bf16.xpose.msra.mxu0 0
    %3493 = vmatprep.subr.bf16.mxu0 0
    %3494 = vmatpush1.bf16.xpose.msra.mxu0 0
    %3495 = vmatprep.subr.bf16.mxu0 0
    %3496 = vmatpush1.bf16.xpose.msra.mxu0 0
    %3497 = vmatprep.subr.bf16.mxu0 0
    %3498 = vmatpush1.bf16.xpose.msra.mxu0 0
    %3499 = vmatprep.subr.bf16.mxu0 0
    %3500 = vmatpush1.bf16.xpose.msra.mxu0 0
    %3501 = vmatprep.subr.bf16.mxu0 0
    %3502 = vmatpush1.bf16.xpose.msra.mxu0 0
    %3503 = vmatprep.subr.bf16.mxu0 0
    %3504 = vmatpush1.bf16.xpose.msra.mxu0 0
    %3505 = vmatprep.subr.bf16.mxu0 0
    %3506 = vmatpush1.bf16.xpose.msra.mxu0 0
    %3507 = vmatprep.subr.bf16.mxu0 0
    %3508 = vmatpush1.bf16.xpose.msra.mxu0 0
    %3509 = vmatprep.subr.bf16.mxu0 0
    %3510 = vmatpush1.bf16.xpose.msra.mxu0 0
    %3511 = vmatprep.mubr.bf16.mxu0 0
    %3512 = vmatmul.mubr.bf16.gmra.mrb[0].mxu0 %v3476
    %v3513 = vpop.f32.mrb[0].mxu0
    %v3514 = vadd.f32 0.0, %v3513
    %v3515 = vpop.f32.mrb[0].mxu0
    %v3516 = vpop.f32.mrb[0].mxu0
    %v3517 = vpop.f32.mrb[0].mxu0
    %3518 = vdwg.mxu0
    %v3519 = vsel %vm678, %v3514, -inf
    %3520 = vmax.xlane.f32.xlu0 %v3519
    %v3521 = vpop.xlane.xlu0 %3520
    %v3522 = vsub.f32 %v3514, %v3521
    %v3523 = vmul.f32 %v3522, 1.442695
    %v3524 = vpow.pop %v3523
    %v3525 = vsel %vm678, %v3524, 0.0
    %3526 = vadd.xlane.f32.xlu0 %v3525
    %v3527 = vpop.xlane.xlu0 %3526
    %v3528 = vrcp.pop %v3527
    %v3529 = vmul.f32 %v3524, %v3528
    %v3530 = vpack.c.bf16 %v3529, %v3529
    %v3532 = vsel %vm678, %v3530, 0
    %v3535 = vsel %vm694, %v3478, 0
    %3537 = vmatprep.subr.bf16.mxu0 0
    %3538 = vmatpush1.bf16.msra.mxu0 %v3535
    %3539 = vmatprep.subr.bf16.mxu0 0
    %3540 = vmatpush1.bf16.msra.mxu0 0
    %3541 = vmatprep.subr.bf16.mxu0 0
    %3542 = vmatpush1.bf16.msra.mxu0 0
    %3543 = vmatprep.subr.bf16.mxu0 0
    %3544 = vmatpush1.bf16.msra.mxu0 0
    %3545 = vmatprep.subr.bf16.mxu0 0
    %3546 = vmatpush1.bf16.msra.mxu0 0
    %3547 = vmatprep.subr.bf16.mxu0 0
    %3548 = vmatpush1.bf16.msra.mxu0 0
    %3549 = vmatprep.subr.bf16.mxu0 0
    %3550 = vmatpush1.bf16.msra.mxu0 0
    %3551 = vmatprep.subr.bf16.mxu0 0
    %3552 = vmatpush1.bf16.msra.mxu0 0
    %3553 = vmatprep.subr.bf16.mxu0 0
    %3554 = vmatpush1.bf16.msra.mxu0 0
    %3555 = vmatprep.subr.bf16.mxu0 0
    %3556 = vmatpush1.bf16.msra.mxu0 0
    %3557 = vmatprep.subr.bf16.mxu0 0
    %3558 = vmatpush1.bf16.msra.mxu0 0
    %3559 = vmatprep.subr.bf16.mxu0 0
    %3560 = vmatpush1.bf16.msra.mxu0 0
    %3561 = vmatprep.subr.bf16.mxu0 0
    %3562 = vmatpush1.bf16.msra.mxu0 0
    %3563 = vmatprep.subr.bf16.mxu0 0
    %3564 = vmatpush1.bf16.msra.mxu0 0
    %3565 = vmatprep.subr.bf16.mxu0 0
    %3566 = vmatpush1.bf16.msra.mxu0 0
    %3567 = vmatprep.subr.bf16.mxu0 0
    %3568 = vmatpush1.bf16.msra.mxu0 0
    %3569 = vmatprep.mubr.bf16.mxu0 0
    %3570 = vmatmul.mubr.bf16.gmra.mrb[0].mxu0 %v3532
    %v3571 = vpop.f32.mrb[0].mxu0
    %v3572 = vadd.f32 0.0, %v3571
    %v3573 = vpop.f32.mrb[0].mxu0
    %v3574 = vpop.f32.mrb[0].mxu0
    %v3575 = vpop.f32.mrb[0].mxu0
    %3576 = vdwg.mxu0
    %v3577 = vpack.c.bf16 %v2517, %v2517
    %v3578 = vpack.c.bf16 %v2603, %v2603
    %v3579 = vpack.c.bf16 %v2689, %v2689
    %3580 = vmatprep.subr.bf16.mxu0 0
    %3581 = vmatpush1.bf16.xpose.msra.mxu0 %v3578
    %3582 = vmatprep.subr.bf16.mxu0 0
    %3583 = vmatpush1.bf16.xpose.msra.mxu0 0
    %3584 = vmatprep.subr.bf16.mxu0 0
    %3585 = vmatpush1.bf16.xpose.msra.mxu0 0
    %3586 = vmatprep.subr.bf16.mxu0 0
    %3587 = vmatpush1.bf16.xpose.msra.mxu0 0
    %3588 = vmatprep.subr.bf16.mxu0 0
    %3589 = vmatpush1.bf16.xpose.msra.mxu0 0
    %3590 = vmatprep.subr.bf16.mxu0 0
    %3591 = vmatpush1.bf16.xpose.msra.mxu0 0
    %3592 = vmatprep.subr.bf16.mxu0 0
    %3593 = vmatpush1.bf16.xpose.msra.mxu0 0
    %3594 = vmatprep.subr.bf16.mxu0 0
    %3595 = vmatpush1.bf16.xpose.msra.mxu0 0
    %3596 = vmatprep.subr.bf16.mxu0 0
    %3597 = vmatpush1.bf16.xpose.msra.mxu0 0
    %3598 = vmatprep.subr.bf16.mxu0 0
    %3599 = vmatpush1.bf16.xpose.msra.mxu0 0
    %3600 = vmatprep.subr.bf16.mxu0 0
    %3601 = vmatpush1.bf16.xpose.msra.mxu0 0
    %3602 = vmatprep.subr.bf16.mxu0 0
    %3603 = vmatpush1.bf16.xpose.msra.mxu0 0
    %3604 = vmatprep.subr.bf16.mxu0 0
    %3605 = vmatpush1.bf16.xpose.msra.mxu0 0
    %3606 = vmatprep.subr.bf16.mxu0 0
    %3607 = vmatpush1.bf16.xpose.msra.mxu0 0
    %3608 = vmatprep.subr.bf16.mxu0 0
    %3609 = vmatpush1.bf16.xpose.msra.mxu0 0
    %3610 = vmatprep.subr.bf16.mxu0 0
    %3611 = vmatpush1.bf16.xpose.msra.mxu0 0
    %3612 = vmatprep.mubr.bf16.mxu0 0
    %3613 = vmatmul.mubr.bf16.gmra.mrb[0].mxu0 %v3577
    %v3614 = vpop.f32.mrb[0].mxu0
    %v3615 = vadd.f32 0.0, %v3614
    %v3616 = vpop.f32.mrb[0].mxu0
    %v3617 = vpop.f32.mrb[0].mxu0
    %v3618 = vpop.f32.mrb[0].mxu0
    %3619 = vdwg.mxu0
    %v3620 = vsel %vm678, %v3615, -inf
    %3621 = vmax.xlane.f32.xlu0 %v3620
    %v3622 = vpop.xlane.xlu0 %3621
    %v3623 = vsub.f32 %v3615, %v3622
    %v3624 = vmul.f32 %v3623, 1.442695
    %v3625 = vpow.pop %v3624
    %v3626 = vsel %vm678, %v3625, 0.0
    %3627 = vadd.xlane.f32.xlu0 %v3626
    %v3628 = vpop.xlane.xlu0 %3627
    %v3629 = vrcp.pop %v3628
    %v3630 = vmul.f32 %v3625, %v3629
    %v3631 = vpack.c.bf16 %v3630, %v3630
    %v3633 = vsel %vm678, %v3631, 0
    %v3636 = vsel %vm694, %v3579, 0
    %3638 = vmatprep.subr.bf16.mxu0 0
    %3639 = vmatpush1.bf16.msra.mxu0 %v3636
    %3640 = vmatprep.subr.bf16.mxu0 0
    %3641 = vmatpush1.bf16.msra.mxu0 0
    %3642 = vmatprep.subr.bf16.mxu0 0
    %3643 = vmatpush1.bf16.msra.mxu0 0
    %3644 = vmatprep.subr.bf16.mxu0 0
    %3645 = vmatpush1.bf16.msra.mxu0 0
    %3646 = vmatprep.subr.bf16.mxu0 0
    %3647 = vmatpush1.bf16.msra.mxu0 0
    %3648 = vmatprep.subr.bf16.mxu0 0
    %3649 = vmatpush1.bf16.msra.mxu0 0
    %3650 = vmatprep.subr.bf16.mxu0 0
    %3651 = vmatpush1.bf16.msra.mxu0 0
    %3652 = vmatprep.subr.bf16.mxu0 0
    %3653 = vmatpush1.bf16.msra.mxu0 0
    %3654 = vmatprep.subr.bf16.mxu0 0
    %3655 = vmatpush1.bf16.msra.mxu0 0
    %3656 = vmatprep.subr.bf16.mxu0 0
    %3657 = vmatpush1.bf16.msra.mxu0 0
    %3658 = vmatprep.subr.bf16.mxu0 0
    %3659 = vmatpush1.bf16.msra.mxu0 0
    %3660 = vmatprep.subr.bf16.mxu0 0
    %3661 = vmatpush1.bf16.msra.mxu0 0
    %3662 = vmatprep.subr.bf16.mxu0 0
    %3663 = vmatpush1.bf16.msra.mxu0 0
    %3664 = vmatprep.subr.bf16.mxu0 0
    %3665 = vmatpush1.bf16.msra.mxu0 0
    %3666 = vmatprep.subr.bf16.mxu0 0
    %3667 = vmatpush1.bf16.msra.mxu0 0
    %3668 = vmatprep.subr.bf16.mxu0 0
    %3669 = vmatpush1.bf16.msra.mxu0 0
    %3670 = vmatprep.mubr.bf16.mxu0 0
    %3671 = vmatmul.mubr.bf16.gmra.mrb[0].mxu0 %v3633
    %v3672 = vpop.f32.mrb[0].mxu0
    %v3673 = vadd.f32 0.0, %v3672
    %v3674 = vpop.f32.mrb[0].mxu0
    %v3675 = vpop.f32.mrb[0].mxu0
    %v3676 = vpop.f32.mrb[0].mxu0
    %3677 = vdwg.mxu0
    %v3678 = vpack.c.bf16 %v2519, %v2519
    %v3679 = vpack.c.bf16 %v2605, %v2605
    %v3680 = vpack.c.bf16 %v2691, %v2691
    %3681 = vmatprep.subr.bf16.mxu0 0
    %3682 = vmatpush1.bf16.xpose.msra.mxu0 %v3679
    %3683 = vmatprep.subr.bf16.mxu0 0
    %3684 = vmatpush1.bf16.xpose.msra.mxu0 0
    %3685 = vmatprep.subr.bf16.mxu0 0
    %3686 = vmatpush1.bf16.xpose.msra.mxu0 0
    %3687 = vmatprep.subr.bf16.mxu0 0
    %3688 = vmatpush1.bf16.xpose.msra.mxu0 0
    %3689 = vmatprep.subr.bf16.mxu0 0
    %3690 = vmatpush1.bf16.xpose.msra.mxu0 0
    %3691 = vmatprep.subr.bf16.mxu0 0
    %3692 = vmatpush1.bf16.xpose.msra.mxu0 0
    %3693 = vmatprep.subr.bf16.mxu0 0
    %3694 = vmatpush1.bf16.xpose.msra.mxu0 0
    %3695 = vmatprep.subr.bf16.mxu0 0
    %3696 = vmatpush1.bf16.xpose.msra.mxu0 0
    %3697 = vmatprep.subr.bf16.mxu0 0
    %3698 = vmatpush1.bf16.xpose.msra.mxu0 0
    %3699 = vmatprep.subr.bf16.mxu0 0
    %3700 = vmatpush1.bf16.xpose.msra.mxu0 0
    %3701 = vmatprep.subr.bf16.mxu0 0
    %3702 = vmatpush1.bf16.xpose.msra.mxu0 0
    %3703 = vmatprep.subr.bf16.mxu0 0
    %3704 = vmatpush1.bf16.xpose.msra.mxu0 0
    %3705 = vmatprep.subr.bf16.mxu0 0
    %3706 = vmatpush1.bf16.xpose.msra.mxu0 0
    %3707 = vmatprep.subr.bf16.mxu0 0
    %3708 = vmatpush1.bf16.xpose.msra.mxu0 0
    %3709 = vmatprep.subr.bf16.mxu0 0
    %3710 = vmatpush1.bf16.xpose.msra.mxu0 0
    %3711 = vmatprep.subr.bf16.mxu0 0
    %3712 = vmatpush1.bf16.xpose.msra.mxu0 0
    %3713 = vmatprep.mubr.bf16.mxu0 0
    %3714 = vmatmul.mubr.bf16.gmra.mrb[0].mxu0 %v3678
    %v3715 = vpop.f32.mrb[0].mxu0
    %v3716 = vadd.f32 0.0, %v3715
    %v3717 = vpop.f32.mrb[0].mxu0
    %v3718 = vpop.f32.mrb[0].mxu0
    %v3719 = vpop.f32.mrb[0].mxu0
    %3720 = vdwg.mxu0
    %v3721 = vsel %vm678, %v3716, -inf
    %3722 = vmax.xlane.f32.xlu0 %v3721
    %v3723 = vpop.xlane.xlu0 %3722
    %v3724 = vsub.f32 %v3716, %v3723
    %v3725 = vmul.f32 %v3724, 1.442695
    %v3726 = vpow.pop %v3725
    %v3727 = vsel %vm678, %v3726, 0.0
    %3728 = vadd.xlane.f32.xlu0 %v3727
    %v3729 = vpop.xlane.xlu0 %3728
    %v3730 = vrcp.pop %v3729
    %v3731 = vmul.f32 %v3726, %v3730
    %v3732 = vpack.c.bf16 %v3731, %v3731
    %v3734 = vsel %vm678, %v3732, 0
    %v3737 = vsel %vm694, %v3680, 0
    %3739 = vmatprep.subr.bf16.mxu0 0
    %3740 = vmatpush1.bf16.msra.mxu0 %v3737
    %3741 = vmatprep.subr.bf16.mxu0 0
    %3742 = vmatpush1.bf16.msra.mxu0 0
    %3743 = vmatprep.subr.bf16.mxu0 0
    %3744 = vmatpush1.bf16.msra.mxu0 0
    %3745 = vmatprep.subr.bf16.mxu0 0
    %3746 = vmatpush1.bf16.msra.mxu0 0
    %3747 = vmatprep.subr.bf16.mxu0 0
    %3748 = vmatpush1.bf16.msra.mxu0 0
    %3749 = vmatprep.subr.bf16.mxu0 0
    %3750 = vmatpush1.bf16.msra.mxu0 0
    %3751 = vmatprep.subr.bf16.mxu0 0
    %3752 = vmatpush1.bf16.msra.mxu0 0
    %3753 = vmatprep.subr.bf16.mxu0 0
    %3754 = vmatpush1.bf16.msra.mxu0 0
    %3755 = vmatprep.subr.bf16.mxu0 0
    %3756 = vmatpush1.bf16.msra.mxu0 0
    %3757 = vmatprep.subr.bf16.mxu0 0
    %3758 = vmatpush1.bf16.msra.mxu0 0
    %3759 = vmatprep.subr.bf16.mxu0 0
    %3760 = vmatpush1.bf16.msra.mxu0 0
    %3761 = vmatprep.subr.bf16.mxu0 0
    %3762 = vmatpush1.bf16.msra.mxu0 0
    %3763 = vmatprep.subr.bf16.mxu0 0
    %3764 = vmatpush1.bf16.msra.mxu0 0
    %3765 = vmatprep.subr.bf16.mxu0 0
    %3766 = vmatpush1.bf16.msra.mxu0 0
    %3767 = vmatprep.subr.bf16.mxu0 0
    %3768 = vmatpush1.bf16.msra.mxu0 0
    %3769 = vmatprep.subr.bf16.mxu0 0
    %3770 = vmatpush1.bf16.msra.mxu0 0
    %3771 = vmatprep.mubr.bf16.mxu0 0
    %3772 = vmatmul.mubr.bf16.gmra.mrb[0].mxu0 %v3734
    %v3773 = vpop.f32.mrb[0].mxu0
    %v3774 = vadd.f32 0.0, %v3773
    %v3775 = vpop.f32.mrb[0].mxu0
    %v3776 = vpop.f32.mrb[0].mxu0
    %v3777 = vpop.f32.mrb[0].mxu0
    %3778 = vdwg.mxu0
    %v3779 = vpack.c.bf16 %v3471, %v3471
    %v3780 = vpack.c.bf16 %v3572, %v3572
    %v3781 = vpack.c.bf16 %v3673, %v3673
    %v3782 = vpack.c.bf16 %v3774, %v3774
    %3783 = vmatprep.subr.bf16.mxu0 0
    %3784 = vmatpush1.bf16.msra.mxu0 %v3229
    %3785 = vmatprep.subr.bf16.mxu0 0
    %3786 = vmatpush1.bf16.msra.mxu0 %v3230
    %3787 = vmatprep.subr.bf16.mxu0 0
    %3788 = vmatpush1.bf16.msra.mxu0 %v3231
    %3789 = vmatprep.subr.bf16.mxu0 0
    %3790 = vmatpush1.bf16.msra.mxu0 %v3232
    %3791 = vmatprep.subr.bf16.mxu0 0
    %3792 = vmatpush1.bf16.msra.mxu0 %v3233
    %3793 = vmatprep.subr.bf16.mxu0 0
    %3794 = vmatpush1.bf16.msra.mxu0 %v3234
    %3795 = vmatprep.subr.bf16.mxu0 0
    %3796 = vmatpush1.bf16.msra.mxu0 %v3235
    %3797 = vmatprep.subr.bf16.mxu0 0
    %3798 = vmatpush1.bf16.msra.mxu0 %v3236
    %3799 = vmatprep.subr.bf16.mxu0 0
    %3800 = vmatpush1.bf16.msra.mxu0 %v3237
    %3801 = vmatprep.subr.bf16.mxu0 0
    %3802 = vmatpush1.bf16.msra.mxu0 %v3238
    %3803 = vmatprep.subr.bf16.mxu0 0
    %3804 = vmatpush1.bf16.msra.mxu0 %v3239
    %3805 = vmatprep.subr.bf16.mxu0 0
    %3806 = vmatpush1.bf16.msra.mxu0 %v3240
    %3807 = vmatprep.subr.bf16.mxu0 0
    %3808 = vmatpush1.bf16.msra.mxu0 %v3241
    %3809 = vmatprep.subr.bf16.mxu0 0
    %3810 = vmatpush1.bf16.msra.mxu0 %v3242
    %3811 = vmatprep.subr.bf16.mxu0 0
    %3812 = vmatpush1.bf16.msra.mxu0 %v3243
    %3813 = vmatprep.subr.bf16.mxu0 0
    %3814 = vmatpush1.bf16.msra.mxu0 %v3244
    %3815 = vmatprep.mubr.bf16.mxu0 %v3780
    %3816 = vmatmul.mubr.bf16.gmra.mrb[0].mxu0 %v3779
    %v3817 = vpop.f32.mrb[0].mxu0
    %v3818 = vadd.f32 0.0, %v3817
    %v3819 = vpop.f32.mrb[0].mxu0
    %v3820 = vpop.f32.mrb[0].mxu0
    %v3821 = vpop.f32.mrb[0].mxu0
    %3822 = vdwg.mxu0
    %3823 = vmatprep.subr.bf16.mxu0 0
    %3824 = vmatpush1.bf16.msra.mxu0 %v3245
    %3825 = vmatprep.subr.bf16.mxu0 0
    %3826 = vmatpush1.bf16.msra.mxu0 %v3246
    %3827 = vmatprep.subr.bf16.mxu0 0
    %3828 = vmatpush1.bf16.msra.mxu0 %v3247
    %3829 = vmatprep.subr.bf16.mxu0 0
    %3830 = vmatpush1.bf16.msra.mxu0 %v3248
    %3831 = vmatprep.subr.bf16.mxu0 0
    %3832 = vmatpush1.bf16.msra.mxu0 %v3249
    %3833 = vmatprep.subr.bf16.mxu0 0
    %3834 = vmatpush1.bf16.msra.mxu0 %v3250
    %3835 = vmatprep.subr.bf16.mxu0 0
    %3836 = vmatpush1.bf16.msra.mxu0 %v3251
    %3837 = vmatprep.subr.bf16.mxu0 0
    %3838 = vmatpush1.bf16.msra.mxu0 %v3252
    %3839 = vmatprep.subr.bf16.mxu0 0
    %3840 = vmatpush1.bf16.msra.mxu0 %v3253
    %3841 = vmatprep.subr.bf16.mxu0 0
    %3842 = vmatpush1.bf16.msra.mxu0 %v3254
    %3843 = vmatprep.subr.bf16.mxu0 0
    %3844 = vmatpush1.bf16.msra.mxu0 %v3255
    %3845 = vmatprep.subr.bf16.mxu0 0
    %3846 = vmatpush1.bf16.msra.mxu0 %v3256
    %3847 = vmatprep.subr.bf16.mxu0 0
    %3848 = vmatpush1.bf16.msra.mxu0 %v3257
    %3849 = vmatprep.subr.bf16.mxu0 0
    %3850 = vmatpush1.bf16.msra.mxu0 %v3258
    %3851 = vmatprep.subr.bf16.mxu0 0
    %3852 = vmatpush1.bf16.msra.mxu0 %v3259
    %3853 = vmatprep.subr.bf16.mxu0 0
    %3854 = vmatpush1.bf16.msra.mxu0 %v3260
    %3855 = vmatprep.mubr.bf16.mxu0 %v3782
    %3856 = vmatmul.mubr.bf16.gmra.mrb[0].mxu0 %v3781
    %v3857 = vpop.f32.mrb[0].mxu0
    %v3858 = vadd.f32 %v3818, %v3857
    %v3859 = vpop.f32.mrb[0].mxu0
    %v3860 = vpop.f32.mrb[0].mxu0
    %v3861 = vpop.f32.mrb[0].mxu0
    %3862 = vdwg.mxu0
    %v3863 = vadd.f32 %v2077, %v3858
    %v3864 = vadd.f32 %v3863, %v2081
    %v3865 = vsel %vm159, %v3374, 0.0
    %3866 = vadd.xlane.f32.xlu0 %v3865
    %v3867 = vpop.xlane.xlu0 %3866
    %v3868 = vsel %vm159, %v3864, 0.0
    %3869 = vadd.xlane.f32.xlu0 %v3868
    %v3870 = vpop.xlane.xlu0 %3869
    %v3871 = vmul.f32 %v3867, %v166
    %v3872 = vmul.f32 %v3870, %v166
    %v3873 = vsub.f32 %v3374, %v3871
    %v3874 = vsub.f32 %v3864, %v3872
    %v3875 = vmul.f32 %v3873, %v3873
    %v3876 = vmul.f32 %v3874, %v3874
    %v3877 = vsel %vm159, %v3875, 0.0
    %3878 = vadd.xlane.f32.xlu0 %v3877
    %v3879 = vpop.xlane.xlu0 %3878
    %v3880 = vsel %vm159, %v3876, 0.0
    %3881 = vadd.xlane.f32.xlu0 %v3880
    %v3882 = vpop.xlane.xlu0 %3881
    %v3883 = vmul.f32 %v3879, %v166
    %v3884 = vmul.f32 %v3882, %v166
    %v3885 = vadd.f32 %v3883, 1e-05
    %v3886 = vadd.f32 %v3884, 1e-05
    %v3887 = vrsqrt.pop %v3885
    %v3888 = vrsqrt.pop %v3886
    %v3889 = vmul.f32 %v3873, %v3887
    %v3890 = vmul.f32 %v3874, %v3888
    %v3891 = vmul.f32 %v3889, %v2082
    %v3892 = vmul.f32 %v3890, %v2082
    %v3893 = vadd.f32 %v3891, %v2083
    %v3894 = vadd.f32 %v3892, %v2083
    %v3895 = vpack.c.bf16 %v3894, %v3893
    %v3897 = vlaneseq
    %v3898 = vshrl.u32 %v3897, 7
    %v3899 = vsub.s32 0, %v3898
    %v3900 = vrot.slane %v2085, %v3899
    %v3901 = vlaneseq
    %v3902 = vshrl.u32 %v3901, 7
    %v3903 = vsub.s32 1, %v3902
    %v3904 = vrot.slane %v2085, %v3903
    %v3911 = vunpack.c.l.b16 %v2118
    %v3912 = vunpack.c.h.b16 %v2118
    %v3913 = vunpack.c.l.b16 %v2119
    %v3914 = vunpack.c.h.b16 %v2119
    %v3915 = vunpack.c.l.b16 %v2120
    %v3916 = vunpack.c.h.b16 %v2120
    %v3917 = vunpack.c.l.b16 %v2121
    %v3918 = vunpack.c.h.b16 %v2121
    %v3919 = vpack.c.b16 %v3913, %v3911
    %v3920 = vpack.c.b16 %v3914, %v3912
    %v3921 = vpack.c.b16 %v3917, %v3915
    %v3922 = vpack.c.b16 %v3918, %v3916
    %v3928 = vsel %vm159, %v3895, 0
    %3930 = vmatprep.subr.bf16.mxu0 %v3920
    %3931 = vmatpush1.bf16.msra.mxu0 %v3919
    %3932 = vmatprep.subr.bf16.mxu0 %v3922
    %3933 = vmatpush1.bf16.msra.mxu0 %v3921
    %3934 = vmatprep.subr.bf16.mxu0 0
    %3935 = vmatpush1.bf16.msra.mxu0 0
    %3936 = vmatprep.subr.bf16.mxu0 0
    %3937 = vmatpush1.bf16.msra.mxu0 0
    %3938 = vmatprep.subr.bf16.mxu0 0
    %3939 = vmatpush1.bf16.msra.mxu0 0
    %3940 = vmatprep.subr.bf16.mxu0 0
    %3941 = vmatpush1.bf16.msra.mxu0 0
    %3942 = vmatprep.subr.bf16.mxu0 0
    %3943 = vmatpush1.bf16.msra.mxu0 0
    %3944 = vmatprep.subr.bf16.mxu0 0
    %3945 = vmatpush1.bf16.msra.mxu0 0
    %3946 = vmatprep.subr.bf16.mxu0 0
    %3947 = vmatpush1.bf16.msra.mxu0 0
    %3948 = vmatprep.subr.bf16.mxu0 0
    %3949 = vmatpush1.bf16.msra.mxu0 0
    %3950 = vmatprep.subr.bf16.mxu0 0
    %3951 = vmatpush1.bf16.msra.mxu0 0
    %3952 = vmatprep.subr.bf16.mxu0 0
    %3953 = vmatpush1.bf16.msra.mxu0 0
    %3954 = vmatprep.subr.bf16.mxu0 0
    %3955 = vmatpush1.bf16.msra.mxu0 0
    %3956 = vmatprep.subr.bf16.mxu0 0
    %3957 = vmatpush1.bf16.msra.mxu0 0
    %3958 = vmatprep.subr.bf16.mxu0 0
    %3959 = vmatpush1.bf16.msra.mxu0 0
    %3960 = vmatprep.subr.bf16.mxu0 0
    %3961 = vmatpush1.bf16.msra.mxu0 0
    %3962 = vmatprep.mubr.bf16.mxu0 0
    %3963 = vmatmul.mubr.bf16.gmra.mrb[0].mxu0 %v3928
    %v3964 = vpop.f32.mrb[0].mxu0
    %v3965 = vadd.f32 %v3900, %v3964
    %v3966 = vpop.f32.mrb[0].mxu0
    %v3967 = vadd.f32 %v3904, %v3966
    %v3968 = vpop.f32.mrb[0].mxu0
    %v3969 = vadd.f32 %v3900, %v3968
    %v3970 = vpop.f32.mrb[0].mxu0
    %v3971 = vadd.f32 %v3904, %v3970
    %3972 = vdwg.mxu0
    %v3973 = vmul.f32 %v3965, 0.5
    %v3974 = vmul.f32 %v3967, 0.5
    %v3975 = vmul.f32 %v3969, 0.5
    %v3976 = vmul.f32 %v3971, 0.5
    %v3977 = vmul.f32 %v3965, 0.70710677
    %v3978 = vmul.f32 %v3967, 0.70710677
    %v3979 = vmul.f32 %v3969, 0.70710677
    %v3980 = vmul.f32 %v3971, 0.70710677
    %v3981 = verf.f32.pop %v3977
    %v3982 = verf.f32.pop %v3978
    %v3983 = verf.f32.pop %v3979
    %v3984 = verf.f32.pop %v3980
    %v3985 = vadd.f32 %v3981, 1.0
    %v3986 = vadd.f32 %v3982, 1.0
    %v3987 = vadd.f32 %v3983, 1.0
    %v3988 = vadd.f32 %v3984, 1.0
    %v3989 = vmul.f32 %v3973, %v3985
    %v3990 = vmul.f32 %v3974, %v3986
    %v3991 = vmul.f32 %v3975, %v3987
    %v3992 = vmul.f32 %v3976, %v3988
    %v3993 = vpack.c.bf16 %v3991, %v3989
    %v3994 = vpack.c.bf16 %v3992, %v3990
    %v4027 = vunpack.c.l.b16 %v2187
    %v4028 = vunpack.c.l.b16 %v2188
    %v4029 = vunpack.c.l.b16 %v2189
    %v4030 = vunpack.c.l.b16 %v2190
    %v4031 = vunpack.c.l.b16 %v2191
    %v4032 = vunpack.c.l.b16 %v2192
    %v4033 = vunpack.c.l.b16 %v2193
    %v4034 = vunpack.c.l.b16 %v2194
    %v4035 = vunpack.c.l.b16 %v2195
    %v4036 = vunpack.c.l.b16 %v2196
    %v4037 = vunpack.c.l.b16 %v2197
    %v4038 = vunpack.c.l.b16 %v2198
    %v4039 = vunpack.c.l.b16 %v2199
    %v4040 = vunpack.c.l.b16 %v2200
    %v4041 = vunpack.c.l.b16 %v2201
    %v4042 = vunpack.c.l.b16 %v2202
    %v4043 = vunpack.c.l.b16 %v2203
    %v4044 = vunpack.c.l.b16 %v2204
    %v4045 = vunpack.c.l.b16 %v2205
    %v4046 = vunpack.c.l.b16 %v2206
    %v4047 = vunpack.c.l.b16 %v2207
    %v4048 = vunpack.c.l.b16 %v2208
    %v4049 = vunpack.c.l.b16 %v2209
    %v4050 = vunpack.c.l.b16 %v2210
    %v4051 = vunpack.c.l.b16 %v2211
    %v4052 = vunpack.c.l.b16 %v2212
    %v4053 = vunpack.c.l.b16 %v2213
    %v4054 = vunpack.c.l.b16 %v2214
    %v4055 = vunpack.c.l.b16 %v2215
    %v4056 = vunpack.c.l.b16 %v2216
    %v4057 = vunpack.c.l.b16 %v2217
    %v4058 = vunpack.c.l.b16 %v2218
    %v4059 = vpack.c.b16 %v4028, %v4027
    %v4060 = vpack.c.b16 %v4030, %v4029
    %v4061 = vpack.c.b16 %v4032, %v4031
    %v4062 = vpack.c.b16 %v4034, %v4033
    %v4063 = vpack.c.b16 %v4036, %v4035
    %v4064 = vpack.c.b16 %v4038, %v4037
    %v4065 = vpack.c.b16 %v4040, %v4039
    %v4066 = vpack.c.b16 %v4042, %v4041
    %v4067 = vpack.c.b16 %v4044, %v4043
    %v4068 = vpack.c.b16 %v4046, %v4045
    %v4069 = vpack.c.b16 %v4048, %v4047
    %v4070 = vpack.c.b16 %v4050, %v4049
    %v4071 = vpack.c.b16 %v4052, %v4051
    %v4072 = vpack.c.b16 %v4054, %v4053
    %v4073 = vpack.c.b16 %v4056, %v4055
    %v4074 = vpack.c.b16 %v4058, %v4057
    %4091 = vmatprep.subr.bf16.mxu0 0
    %4092 = vmatpush1.bf16.msra.mxu0 %v4059
    %4093 = vmatprep.subr.bf16.mxu0 0
    %4094 = vmatpush1.bf16.msra.mxu0 %v4060
    %4095 = vmatprep.subr.bf16.mxu0 0
    %4096 = vmatpush1.bf16.msra.mxu0 %v4061
    %4097 = vmatprep.subr.bf16.mxu0 0
    %4098 = vmatpush1.bf16.msra.mxu0 %v4062
    %4099 = vmatprep.subr.bf16.mxu0 0
    %4100 = vmatpush1.bf16.msra.mxu0 %v4063
    %4101 = vmatprep.subr.bf16.mxu0 0
    %4102 = vmatpush1.bf16.msra.mxu0 %v4064
    %4103 = vmatprep.subr.bf16.mxu0 0
    %4104 = vmatpush1.bf16.msra.mxu0 %v4065
    %4105 = vmatprep.subr.bf16.mxu0 0
    %4106 = vmatpush1.bf16.msra.mxu0 %v4066
    %4107 = vmatprep.subr.bf16.mxu0 0
    %4108 = vmatpush1.bf16.msra.mxu0 %v4067
    %4109 = vmatprep.subr.bf16.mxu0 0
    %4110 = vmatpush1.bf16.msra.mxu0 %v4068
    %4111 = vmatprep.subr.bf16.mxu0 0
    %4112 = vmatpush1.bf16.msra.mxu0 %v4069
    %4113 = vmatprep.subr.bf16.mxu0 0
    %4114 = vmatpush1.bf16.msra.mxu0 %v4070
    %4115 = vmatprep.subr.bf16.mxu0 0
    %4116 = vmatpush1.bf16.msra.mxu0 %v4071
    %4117 = vmatprep.subr.bf16.mxu0 0
    %4118 = vmatpush1.bf16.msra.mxu0 %v4072
    %4119 = vmatprep.subr.bf16.mxu0 0
    %4120 = vmatpush1.bf16.msra.mxu0 %v4073
    %4121 = vmatprep.subr.bf16.mxu0 0
    %4122 = vmatpush1.bf16.msra.mxu0 %v4074
    %4123 = vmatprep.mubr.bf16.mxu0 %v3994
    %4124 = vmatmul.mubr.bf16.gmra.mrb[0].mxu0 %v3993
    %v4125 = vpop.f32.mrb[0].mxu0
    %v4126 = vadd.f32 %v2086, %v4125
    %v4127 = vpop.f32.mrb[0].mxu0
    %v4128 = vpop.f32.mrb[0].mxu0
    %v4129 = vadd.f32 %v2086, %v4128
    %v4130 = vpop.f32.mrb[0].mxu0
    %4131 = vdwg.mxu0
    %v4132 = vadd.f32 %v3374, %v4126
    %v4133 = vadd.f32 %v3864, %v4129
    %4134 = vst.msk [vmem:[#allocation2] sm:$0xff] %vm159, %v4132
    %4135 = vst.msk [vmem:[#allocation2 + $0x8] sm:$0xff] %vm159, %v4133
    // Predicated region
    $region18: #{tpu_custom_call.1} parent=1 // pred_check
      _
    $region19: #{tpu_custom_call.1} parent=1 // pred_check_branch
      %4137 = sbr.rel (0) target = $region21
    $region20: #{tpu_custom_call.1} parent=1 // pred_region
      %s4139 = ssub.s32 256, 256
      %4140 = vsyncadd [#allocation3], %s4139
      %s4141 = sshll.u32 [#allocation2], 4
      %s4142 = int_to_ptr.vmem [resolvable:$true] %s4141
      %4147 = dma.vmem_to_hbm [thread:$0]  %s4142, 256, %s4, [#allocation3], 128, 128, 8
    $region21: #{tpu_custom_call.1} parent=1 // pred_fallthru
      _
    // Predicated region
    $region22: #{tpu_custom_call.1} parent=1 // pred_check
      _
    $region23: #{tpu_custom_call.1} parent=1 // pred_check_branch
      %4149 = sbr.rel (0) target = $region25
    $region24: #{tpu_custom_call.1} parent=1 // pred_region
      %4150 = dma.done [#allocation3], 256
    $region25: #{tpu_custom_call.1} parent=1 // pred_fallthru
      _
    %4151 = vsyncpa [#allocation3], 1

</llo_original>
